<compile_context>
chip_gen: v7x
topology: tpu7x:2x2x1
jax: 0.10.0
libtpu: 0.0.40
codegen_flags: <defaults>
</compile_context>

<pallas_src>
import functools
import math

import jax
import jax.numpy as jnp
from jax.experimental import pallas as pl
from jax.experimental.pallas import tpu as pltpu


_NEG_BIG = -1e30          # finite "-inf": avoids inf-inf -> NaN in online softmax


@functools.lru_cache(maxsize=1)
def _vmem_limit_bytes():
    """~3/4 of physical VMEM, capped at 100 MiB; safe fallback of 48 MiB."""
    try:
        cap = int(pltpu.get_tpu_info().vmem_capacity_bytes)
        return min((cap * 3) // 4, 100 * 1024 * 1024)
    except Exception:
        return 48 * 1024 * 1024


def _round_up(x, m):
    return ((x + m - 1) // m) * m


def _choose_tile(dim, target, align):
    """Return (tile, padded_dim) with padded_dim % tile == 0.

    * dim <= target: full-dim block (always legal), no padding.
    * otherwise: largest aligned divisor of dim <= target; if none exists,
      pad dim up to a multiple of the aligned target (avoids the full-array
      block / VMEM-blowup cliff on awkward shapes).
    """
    if dim <= target:
        return dim, dim
    t = (target // align) * align
    tt = t
    while tt >= align:
        if dim % tt == 0:
            return tt, dim
        tt -= align
    return t, _round_up(dim, t)


# ----------------------------------------------------------------------------
# Kernel 1: tiled dense layer   out = x @ w_t + b     (c_attn and c_proj)
# ----------------------------------------------------------------------------
def _linear_kernel(x_ref, w_ref, b_ref, o_ref, acc_ref):
    @pl.when(pl.program_id(2) == 0)
    def _init():
        acc_ref[...] = jnp.zeros_like(acc_ref)

    acc_ref[...] += jnp.dot(x_ref[...], w_ref[...],
                            preferred_element_type=jnp.float32)

    @pl.when(pl.program_id(2) == pl.num_programs(2) - 1)
    def _finalize():
        # bias added once, in the epilogue only.
        o_ref[...] = (acc_ref[...] + b_ref[...].astype(jnp.float32)
                      ).astype(o_ref.dtype)


def linear_pallas(x2d, w_t, b, *, out_dtype=None,
                  tile_m=1024, tile_n=1024, tile_k=2048):
    """out = x2d @ w_t + b.   x2d: (M, K), w_t: (K, N), b: (N,) -> (M, N)."""
    M, K = x2d.shape
    K2, N = w_t.shape
    assert K2 == K
    out_dtype = x2d.dtype if out_dtype is None else out_dtype

    m_align = 16 if x2d.dtype == jnp.bfloat16 else 8
    tm, Mp = _choose_tile(M, tile_m, m_align)
    tn, Np = _choose_tile(N, tile_n, 128)
    tk, Kp = _choose_tile(K, tile_k, 128)

    if Mp != M or Kp != K:
        x2d = jnp.pad(x2d, ((0, Mp - M), (0, Kp - K)))
    if Kp != K or Np != N:
        w_t = jnp.pad(w_t, ((0, Kp - K), (0, Np - N)))
    b2 = b.reshape(1, N).astype(jnp.float32)
    if Np != N:
        b2 = jnp.pad(b2, ((0, 0), (0, Np - N)))

    grid = (Mp // tm, Np // tn, Kp // tk)

    out = pl.pallas_call(
        _linear_kernel,
        out_shape=jax.ShapeDtypeStruct((Mp, Np), out_dtype),
        grid_spec=pltpu.PrefetchScalarGridSpec(
            num_scalar_prefetch=0,
            grid=grid,
            in_specs=[
                pl.BlockSpec((tm, tk), lambda i, j, k: (i, k)),
                pl.BlockSpec((tk, tn), lambda i, j, k: (k, j)),
                pl.BlockSpec((1, tn), lambda i, j, k: (0, j)),
            ],
            out_specs=pl.BlockSpec((tm, tn), lambda i, j, k: (i, j)),
            scratch_shapes=[pltpu.VMEM((tm, tn), jnp.float32)],
        ),
        compiler_params=pltpu.CompilerParams(
            dimension_semantics=("parallel", "parallel", "arbitrary"),
            vmem_limit_bytes=_vmem_limit_bytes()),
    )(x2d, w_t, b2)

    if Mp != M or Np != N:
        out = out[:M, :N]
    return out


# ----------------------------------------------------------------------------
# Kernel 2: flash-style causal multi-head attention
#   inputs:  q, k, v each (B, H, T, D), q already scaled by 1/sqrt(D)
#   output:  y (B, T, H*D)   (heads concatenated, lane-dense store)
# ----------------------------------------------------------------------------
def _flash_attn_kernel(qi_ids, ki_ids, q_ref, k_ref, v_ref, o_ref,
                       m_sc, l_sc, acc_sc, *, n_head, seq_tile, recip_approx):
    p = pl.program_id(1)
    qi = qi_ids[p]
    ki = ki_ids[p]

    @pl.when(ki == 0)
    def _init():
        m_sc[...] = jnp.full_like(m_sc, _NEG_BIG)
        l_sc[...] = jnp.zeros_like(l_sc)
        acc_sc[...] = jnp.zeros_like(acc_sc)

    def _process(masked):
        if masked:
            # local iota mask: valid on the diagonal tile because the q and k
            # tiles are the same size (asserted in the wrapper).
            row = jax.lax.broadcasted_iota(jnp.int32, (seq_tile, seq_tile), 0)
            col = jax.lax.broadcasted_iota(jnp.int32, (seq_tile, seq_tile), 1)
            causal = row >= col
        for h in range(n_head):                 # static unroll; leading-axis
            q_h = q_ref[h]                      # index = free address offset
            k_h = k_ref[h]
            v_h = v_ref[h]
            # q @ k^T on the MXU ("NT" matmul, no explicit transpose).
            s = jax.lax.dot_general(
                q_h, k_h, (((1,), (1,)), ((), ())),
                preferred_element_type=jnp.float32)       # (t, t) f32
            if masked:
                s = jnp.where(causal, s, _NEG_BIG)
            # online softmax (running max / sum / accumulator in f32 scratch)
            m_prev = m_sc[h]                               # (t, 1)
            m_new = jnp.maximum(m_prev, jnp.max(s, axis=-1, keepdims=True))
            alpha = jnp.exp(m_prev - m_new)
            pmat = jnp.exp(s - m_new)                      # (t, t) f32
            l_sc[h] = alpha * l_sc[h] + jnp.sum(pmat, axis=-1, keepdims=True)
            acc_sc[h] = alpha * acc_sc[h] + jnp.dot(
                pmat.astype(v_h.dtype), v_h, preferred_element_type=jnp.float32)
            m_sc[h] = m_new

    @pl.when(ki < qi)              # strictly-causal tile: no mask needed
    def _body_full():
        _process(masked=False)

    @pl.when(ki == qi)             # diagonal tile (last kv step for this qi)
    def _body_diag_and_finalize():
        _process(masked=True)
        outs = []
        for h in range(n_head):
            if recip_approx:
                inv_l = pl.reciprocal(l_sc[h], approx=True)   # EUP slot
            else:
                inv_l = 1.0 / l_sc[h]                          # exact (f32 path)
            outs.append((acc_sc[h] * inv_l).astype(o_ref.dtype))
        # single lane-dense (t, H*D) store.
        o_ref[...] = jnp.concatenate(outs, axis=-1)


def flash_causal_attention_pallas(q, k, v, *, seq_tile_target=512,
                                  recip_approx=None):
    """q, k, v: (B, H, T, D), q pre-scaled -> y: (B, T, H*D), causal MHA."""
    B, H, T, D = q.shape
    assert k.shape == q.shape and v.shape == q.shape
    if recip_approx is None:
        recip_approx = q.dtype != jnp.float32

    align = 16 if q.dtype == jnp.bfloat16 else 8
    t, Tp = _choose_tile(T, seq_tile_target, align)
    # NB: the causal-mask logic assumes q-tile == k-tile (single `t`); padded
    # key columns (index >= T) are always masked for real query rows because
    # row >= col would force row >= T.
    if Tp != T:
        pad = ((0, 0), (0, 0), (0, Tp - T), (0, 0))
        q = jnp.pad(q, pad)
        k = jnp.pad(k, pad)
        v = jnp.pad(v, pad)

    nb = Tp // t
    # Lower-triangular (qi, ki) enumeration: only real causal tiles are
    # visited; the above-diagonal half of the (qi, ki) grid never runs.
    qi_list, ki_list = [], []
    for qi in range(nb):
        for ki in range(qi + 1):
            qi_list.append(qi)
            ki_list.append(ki)
    qi_ids = jnp.asarray(qi_list, dtype=jnp.int32)
    ki_ids = jnp.asarray(ki_list, dtype=jnp.int32)
    n_pairs = len(qi_list)

    C = H * D
    blk = (None, H, t, D)

    def q_map(b, p, qi_r, ki_r):
        return (b, 0, qi_r[p], 0)

    def kv_map(b, p, qi_r, ki_r):
        return (b, 0, ki_r[p], 0)

    def o_map(b, p, qi_r, ki_r):
        return (b, qi_r[p], 0)

    kernel = functools.partial(_flash_attn_kernel, n_head=H, seq_tile=t,
                               recip_approx=recip_approx)

    out = pl.pallas_call(
        kernel,
        out_shape=jax.ShapeDtypeStruct((B, Tp, C), q.dtype),
        grid_spec=pltpu.PrefetchScalarGridSpec(
            num_scalar_prefetch=2,
            grid=(B, n_pairs),
            in_specs=[pl.BlockSpec(blk, q_map),
                      pl.BlockSpec(blk, kv_map),
                      pl.BlockSpec(blk, kv_map)],
            out_specs=pl.BlockSpec((None, t, C), o_map),
            scratch_shapes=[pltpu.VMEM((H, t, 1), jnp.float32),   # running max
                            pltpu.VMEM((H, t, 1), jnp.float32),   # running sum
                            pltpu.VMEM((H, t, D), jnp.float32)],  # accumulator
        ),
        compiler_params=pltpu.CompilerParams(
            dimension_semantics=("parallel", "arbitrary"),
            vmem_limit_bytes=_vmem_limit_bytes()),
    )(qi_ids, ki_ids, q, k, v)

    if Tp != T:
        out = out[:, :T, :]
    return out


# ----------------------------------------------------------------------------
# Parameter preparation (done ONCE, outside the forward pass)
# ----------------------------------------------------------------------------
def prepare_params(params, n_head, compute_dtype=jnp.bfloat16):
    """Pre-transpose / pre-cast weights and fold 1/sqrt(D) into the q slice."""
    C = params["w_proj"].shape[0]
    D = C // n_head
    scale = 1.0 / math.sqrt(D)
    # c_attn output columns are [q | k | v]; scale only the q columns/bias.
    scale_vec = jnp.concatenate([jnp.full((C,), scale, jnp.float32),
                                 jnp.ones((2 * C,), jnp.float32)])
    w_attn_t = (params["w_attn"].astype(jnp.float32).T
                * scale_vec[None, :]).astype(compute_dtype)          # (C, 3C)
    b_attn = params["b_attn"].astype(jnp.float32) * scale_vec        # (3C,) f32
    w_proj_t = params["w_proj"].astype(jnp.float32).T.astype(compute_dtype)
    b_proj = params["b_proj"].astype(jnp.float32)
    return {"w_attn_t": w_attn_t, "b_attn": b_attn,
            "w_proj_t": w_proj_t, "b_proj": b_proj}


# ----------------------------------------------------------------------------
# Full module forward
# ----------------------------------------------------------------------------
def causal_self_attention(x, prepared, n_head, *, seq_tile=512):
    """x: (B, T, C) -> (B, T, C). Mirrors CausalSelfAttention.forward (eval)."""
    B, T, C = x.shape
    H = n_head
    D = C // H
    cdt = prepared["w_attn_t"].dtype

    x2d = x.reshape(B * T, C).astype(cdt)

    # c_attn: (B*T, C) @ (C, 3C) + b     (q columns pre-scaled by 1/sqrt(D))
    qkv = linear_pallas(x2d, prepared["w_attn_t"], prepared["b_attn"],
                        out_dtype=cdt)
    # one XLA transpose to head-major layout -> clean (H, t, D) kernel tiles.
    qkv = qkv.reshape(B, T, 3, H, D).transpose(2, 0, 3, 1, 4)   # (3, B, H, T, D)
    q, k, v = qkv[0], qkv[1], qkv[2]

    # causal multi-head attention -> (B, T, C)   (heads re-concatenated in-kernel)
    y = flash_causal_attention_pallas(q, k, v, seq_tile_target=seq_tile)

    # c_proj
    out = linear_pallas(y.reshape(B * T, C), prepared["w_proj_t"],
                        prepared["b_proj"], out_dtype=x.dtype)
    return out.reshape(B, T, C)


# ----------------------------------------------------------------------------
# Pure-JAX reference (sanity check, uses the raw PyTorch-layout params)
# ----------------------------------------------------------------------------
def reference(x, params, n_head):
    B, T, C = x.shape
    D = C // n_head
    qkv = x @ params["w_attn"].T + params["b_attn"]
    q, k, v = jnp.split(qkv, 3, axis=2)
    q = q.reshape(B, T, n_head, D).transpose(0, 2, 1, 3)
    k = k.reshape(B, T, n_head, D).transpose(0, 2, 1, 3)
    v = v.reshape(B, T, n_head, D).transpose(0, 2, 1, 3)
    att = (q @ jnp.swapaxes(k, -2, -1)) * (1.0 / math.sqrt(D))
    mask = jnp.tril(jnp.ones((T, T), dtype=bool))
    att = jnp.where(mask[None, None], att, -jnp.inf)
    att = jax.nn.softmax(att, axis=-1)
    y = (att @ v).transpose(0, 2, 1, 3).reshape(B, T, C)
    return y @ params["w_proj"].T + params["b_proj"]


if __name__ == "__main__":
    # config: n_embd=32, n_head=4, block_size >= T, dropout=0.0
    B, T, C, n_head = 2, 8, 32, 4

    key = jax.random.PRNGKey(0)
    kx, kw1, kb1, kw2, kb2 = jax.random.split(key, 5)
    x = jax.random.normal(kx, (B, T, C), dtype=jnp.float32)

    # PyTorch nn.Linear layout: weight (out_features, in_features), bias (out,)
    params = {
        "w_attn": jax.random.normal(kw1, (3 * C, C), jnp.float32) / math.sqrt(C),
        "b_attn": jax.random.normal(kb1, (3 * C,), jnp.float32) * 0.02,
        "w_proj": jax.random.normal(kw2, (C, C), jnp.float32) / math.sqrt(C),
        "b_proj": jax.random.normal(kb2, (C,), jnp.float32) * 0.02,
    }

    # weight transpose / cast / scale-folding done once, outside the forward.
    prepped_f32 = prepare_params(params, n_head, compute_dtype=jnp.float32)
    prepped_bf16 = prepare_params(params, n_head, compute_dtype=jnp.bfloat16)

    fwd_f32 = jax.jit(functools.partial(causal_self_attention, n_head=n_head))
    fwd_bf16 = jax.jit(functools.partial(causal_self_attention, n_head=n_head))

    y_f32 = jax.block_until_ready(fwd_f32(x, prepped_f32))
    y_bf16 = jax.block_until_ready(fwd_bf16(x, prepped_bf16))
    y_ref = reference(x, params, n_head)

    assert y_f32.shape == (B, T, C) and y_f32.dtype == x.dtype
    assert y_bf16.shape == (B, T, C) and y_bf16.dtype == x.dtype
    assert jnp.allclose(y_f32, y_ref, atol=1e-2, rtol=1e-2), "f32 path mismatch"
    assert jnp.allclose(y_bf16, y_ref, atol=5e-2, rtol=5e-2), "bf16 path mismatch"

    print("KERNEL_OK")
</pallas_src>

<mosaic_0001>
module attributes {stable_mosaic.version = 11 : i64} {
  func.func @_linear_kernel(%arg0: i32, %arg1: i32, %arg2: i32, %arg3: memref<16x32xf32, #tpu.memory_space<vmem>>, %arg4: memref<32x96xf32, #tpu.memory_space<vmem>>, %arg5: memref<1x96xf32, #tpu.memory_space<vmem>>, %arg6: memref<16x96xf32, #tpu.memory_space<vmem>>, %arg7: memref<16x96xf32, #tpu.memory_space<vmem>>) attributes {dimension_semantics = [#tpu.dimension_semantics<parallel>, #tpu.dimension_semantics<parallel>, #tpu.dimension_semantics<arbitrary>], iteration_bounds = array<i64: 1, 1, 1>, scalar_prefetch = 0 : i64, scratch_operands = 1 : i64, tpu.core_type = #tpu.core_type<tc>, window_params = [{transform_indices = @transform_0, window_bounds = array<i64: 16, 32>}, {transform_indices = @transform_1, window_bounds = array<i64: 32, 96>}, {transform_indices = @transform_2, window_bounds = array<i64: 1, 96>}, {transform_indices = @transform_3, window_bounds = array<i64: 16, 96>}]} {
    %c0_i32 = arith.constant 0 : i32
    %0 = arith.cmpi eq, %arg2, %c0_i32 : i32
    %1 = arith.extui %0 : i1 to i32
    %c0_i32_0 = arith.constant 0 : i32
    %2 = arith.cmpi ne, %1, %c0_i32_0 : i32
    scf.if %2 {
      %cst_10 = arith.constant 0.000000e+00 : f32
      %12 = vector.broadcast %cst_10 : f32 to vector<16x96xf32>
      %c0_11 = arith.constant 0 : index
      %c0_12 = arith.constant 0 : index
      %13 = vector.load %arg7[%c0_11, %c0_12] : memref<16x96xf32, #tpu.memory_space<vmem>>, vector<16x96xf32>
      tpu.vector_store %arg7[%c0_11, %c0_12], %12 {strides = array<i32>} : memref<16x96xf32, #tpu.memory_space<vmem>>, vector<16x96xf32>,
    } else {
    }
    %c0 = arith.constant 0 : index
    %c0_1 = arith.constant 0 : index
    %3 = vector.load %arg7[%c0, %c0_1] : memref<16x96xf32, #tpu.memory_space<vmem>>, vector<16x96xf32>
    %c0_2 = arith.constant 0 : index
    %c0_3 = arith.constant 0 : index
    %4 = vector.load %arg3[%c0_2, %c0_3] : memref<16x32xf32, #tpu.memory_space<vmem>>, vector<16x32xf32>
    %c0_4 = arith.constant 0 : index
    %c0_5 = arith.constant 0 : index
    %5 = vector.load %arg4[%c0_4, %c0_5] : memref<32x96xf32, #tpu.memory_space<vmem>>, vector<32x96xf32>
    %cst = arith.constant dense<0.000000e+00> : vector<16x96xf32>
    %6 = tpu.matmul %4, %5, %cst {dimension_numbers = #tpu.dot_dimension_numbers<[1], [0], [0], [1], [0, 0, 1, 1], [], []>} : vector<16x32xf32>, vector<32x96xf32>, vector<16x96xf32> -> vector<16x96xf32>
    %7 = arith.addf %3, %6 : vector<16x96xf32>
    %c0_6 = arith.constant 0 : index
    %c0_7 = arith.constant 0 : index
    %8 = vector.load %arg7[%c0_6, %c0_7] : memref<16x96xf32, #tpu.memory_space<vmem>>, vector<16x96xf32>
    tpu.vector_store %arg7[%c0_6, %c0_7], %7 {strides = array<i32>} : memref<16x96xf32, #tpu.memory_space<vmem>>, vector<16x96xf32>,
    %c0_i32_8 = arith.constant 0 : i32
    %9 = arith.cmpi eq, %arg2, %c0_i32_8 : i32
    %10 = arith.extui %9 : i1 to i32
    %c0_i32_9 = arith.constant 0 : i32
    %11 = arith.cmpi ne, %10, %c0_i32_9 : i32
    scf.if %11 {
      %c0_10 = arith.constant 0 : index
      %c0_11 = arith.constant 0 : index
      %12 = vector.load %arg7[%c0_10, %c0_11] : memref<16x96xf32, #tpu.memory_space<vmem>>, vector<16x96xf32>
      %c0_12 = arith.constant 0 : index
      %c0_13 = arith.constant 0 : index
      %13 = vector.load %arg5[%c0_12, %c0_13] : memref<1x96xf32, #tpu.memory_space<vmem>>, vector<1x96xf32>
      %14 = vector.broadcast %13 : vector<1x96xf32> to vector<16x96xf32>
      %15 = arith.addf %12, %14 : vector<16x96xf32>
      %c0_14 = arith.constant 0 : index
      %c0_15 = arith.constant 0 : index
      %16 = vector.load %arg6[%c0_14, %c0_15] : memref<16x96xf32, #tpu.memory_space<vmem>>, vector<16x96xf32>
      tpu.vector_store %arg6[%c0_14, %c0_15], %15 {strides = array<i32>} : memref<16x96xf32, #tpu.memory_space<vmem>>, vector<16x96xf32>,
    } else {
    }
    return
  }
  func.func @transform_0(%arg0: i32, %arg1: i32, %arg2: i32) -> (i32, i32) {
    %c0_i32 = arith.constant 0 : i32
    return %arg0, %arg2 : i32, i32
  }
  func.func @transform_1(%arg0: i32, %arg1: i32, %arg2: i32) -> (i32, i32) {
    %c0_i32 = arith.constant 0 : i32
    return %arg2, %arg1 : i32, i32
  }
  func.func @transform_2(%arg0: i32, %arg1: i32, %arg2: i32) -> (i32, i32) {
    %c0_i32 = arith.constant 0 : i32
    %c0_i32_0 = arith.constant 0 : i32
    return %c0_i32, %arg1 : i32, i32
  }
  func.func @transform_3(%arg0: i32, %arg1: i32, %arg2: i32) -> (i32, i32) {
    %c0_i32 = arith.constant 0 : i32
    return %arg0, %arg1 : i32, i32
  }
}

module attributes {stable_mosaic.version = 11 : i64} {
  func.func @_linear_kernel(%arg0: i32, %arg1: i32, %arg2: i32, %arg3: memref<16x32xf32, #tpu.memory_space<vmem>>, %arg4: memref<32x32xf32, #tpu.memory_space<vmem>>, %arg5: memref<1x32xf32, #tpu.memory_space<vmem>>, %arg6: memref<16x32xf32, #tpu.memory_space<vmem>>, %arg7: memref<16x32xf32, #tpu.memory_space<vmem>>) attributes {dimension_semantics = [#tpu.dimension_semantics<parallel>, #tpu.dimension_semantics<parallel>, #tpu.dimension_semantics<arbitrary>], iteration_bounds = array<i64: 1, 1, 1>, scalar_prefetch = 0 : i64, scratch_operands = 1 : i64, tpu.core_type = #tpu.core_type<tc>, window_params = [{transform_indices = @transform_0, window_bounds = array<i64: 16, 32>}, {transform_indices = @transform_1, window_bounds = array<i64: 32, 32>}, {transform_indices = @transform_2, window_bounds = array<i64: 1, 32>}, {transform_indices = @transform_3, window_bounds = array<i64: 16, 32>}]} {
    %c0_i32 = arith.constant 0 : i32
    %0 = arith.cmpi eq, %arg2, %c0_i32 : i32
    %1 = arith.extui %0 : i1 to i32
    %c0_i32_0 = arith.constant 0 : i32
    %2 = arith.cmpi ne, %1, %c0_i32_0 : i32
    scf.if %2 {
      %cst_10 = arith.constant 0.000000e+00 : f32
      %12 = vector.broadcast %cst_10 : f32 to vector<16x32xf32>
      %c0_11 = arith.constant 0 : index
      %c0_12 = arith.constant 0 : index
      %13 = vector.load %arg7[%c0_11, %c0_12] : memref<16x32xf32, #tpu.memory_space<vmem>>, vector<16x32xf32>
      tpu.vector_store %arg7[%c0_11, %c0_12], %12 {strides = array<i32>} : memref<16x32xf32, #tpu.memory_space<vmem>>, vector<16x32xf32>,
    } else {
    }
    %c0 = arith.constant 0 : index
    %c0_1 = arith.constant 0 : index
    %3 = vector.load %arg7[%c0, %c0_1] : memref<16x32xf32, #tpu.memory_space<vmem>>, vector<16x32xf32>
    %c0_2 = arith.constant 0 : index
    %c0_3 = arith.constant 0 : index
    %4 = vector.load %arg3[%c0_2, %c0_3] : memref<16x32xf32, #tpu.memory_space<vmem>>, vector<16x32xf32>
    %c0_4 = arith.constant 0 : index
    %c0_5 = arith.constant 0 : index
    %5 = vector.load %arg4[%c0_4, %c0_5] : memref<32x32xf32, #tpu.memory_space<vmem>>, vector<32x32xf32>
    %cst = arith.constant dense<0.000000e+00> : vector<16x32xf32>
    %6 = tpu.matmul %4, %5, %cst {dimension_numbers = #tpu.dot_dimension_numbers<[1], [0], [0], [1], [0, 0, 1, 1], [], []>} : vector<16x32xf32>, vector<32x32xf32>, vector<16x32xf32> -> vector<16x32xf32>
    %7 = arith.addf %3, %6 : vector<16x32xf32>
    %c0_6 = arith.constant 0 : index
    %c0_7 = arith.constant 0 : index
    %8 = vector.load %arg7[%c0_6, %c0_7] : memref<16x32xf32, #tpu.memory_space<vmem>>, vector<16x32xf32>
    tpu.vector_store %arg7[%c0_6, %c0_7], %7 {strides = array<i32>} : memref<16x32xf32, #tpu.memory_space<vmem>>, vector<16x32xf32>,
    %c0_i32_8 = arith.constant 0 : i32
    %9 = arith.cmpi eq, %arg2, %c0_i32_8 : i32
    %10 = arith.extui %9 : i1 to i32
    %c0_i32_9 = arith.constant 0 : i32
    %11 = arith.cmpi ne, %10, %c0_i32_9 : i32
    scf.if %11 {
      %c0_10 = arith.constant 0 : index
      %c0_11 = arith.constant 0 : index
      %12 = vector.load %arg7[%c0_10, %c0_11] : memref<16x32xf32, #tpu.memory_space<vmem>>, vector<16x32xf32>
      %c0_12 = arith.constant 0 : index
      %c0_13 = arith.constant 0 : index
      %13 = vector.load %arg5[%c0_12, %c0_13] : memref<1x32xf32, #tpu.memory_space<vmem>>, vector<1x32xf32>
      %14 = vector.broadcast %13 : vector<1x32xf32> to vector<16x32xf32>
      %15 = arith.addf %12, %14 : vector<16x32xf32>
      %c0_14 = arith.constant 0 : index
      %c0_15 = arith.constant 0 : index
      %16 = vector.load %arg6[%c0_14, %c0_15] : memref<16x32xf32, #tpu.memory_space<vmem>>, vector<16x32xf32>
      tpu.vector_store %arg6[%c0_14, %c0_15], %15 {strides = array<i32>} : memref<16x32xf32, #tpu.memory_space<vmem>>, vector<16x32xf32>,
    } else {
    }
    return
  }
  func.func @transform_0(%arg0: i32, %arg1: i32, %arg2: i32) -> (i32, i32) {
    %c0_i32 = arith.constant 0 : i32
    return %arg0, %arg2 : i32, i32
  }
  func.func @transform_1(%arg0: i32, %arg1: i32, %arg2: i32) -> (i32, i32) {
    %c0_i32 = arith.constant 0 : i32
    return %arg2, %arg1 : i32, i32
  }
  func.func @transform_2(%arg0: i32, %arg1: i32, %arg2: i32) -> (i32, i32) {
    %c0_i32 = arith.constant 0 : i32
    %c0_i32_0 = arith.constant 0 : i32
    return %c0_i32, %arg1 : i32, i32
  }
  func.func @transform_3(%arg0: i32, %arg1: i32, %arg2: i32) -> (i32, i32) {
    %c0_i32 = arith.constant 0 : i32
    return %arg0, %arg1 : i32, i32
  }
}

module attributes {stable_mosaic.version = 11 : i64} {
  func.func @_flash_attn_kernel(%arg0: i32, %arg1: i32, %arg2: memref<1xi32, #tpu.memory_space<smem>>, %arg3: memref<1xi32, #tpu.memory_space<smem>>, %arg4: memref<1x4x8x8xf32, #tpu.memory_space<vmem>>, %arg5: memref<1x4x8x8xf32, #tpu.memory_space<vmem>>, %arg6: memref<1x4x8x8xf32, #tpu.memory_space<vmem>>, %arg7: memref<1x8x32xf32, #tpu.memory_space<vmem>>, %arg8: memref<4x8x1xf32, #tpu.memory_space<vmem>>, %arg9: memref<4x8x1xf32, #tpu.memory_space<vmem>>, %arg10: memref<4x8x8xf32, #tpu.memory_space<vmem>>) attributes {dimension_semantics = [#tpu.dimension_semantics<parallel>, #tpu.dimension_semantics<arbitrary>], iteration_bounds = array<i64: 2, 1>, scalar_prefetch = 2 : i64, scratch_operands = 3 : i64, tpu.core_type = #tpu.core_type<tc>, window_params = [{transform_indices = @transform_0, window_bounds = array<i64: 1, 4, 8, 8>}, {transform_indices = @transform_1, window_bounds = array<i64: 1, 4, 8, 8>}, {transform_indices = @transform_2, window_bounds = array<i64: 1, 4, 8, 8>}, {transform_indices = @transform_3, window_bounds = array<i64: 1, 8, 32>}]} {
    %0 = arith.index_cast %arg1 : i32 to index
    %1 = memref.load %arg2[%0] : memref<1xi32, #tpu.memory_space<smem>>
    %2 = arith.index_cast %arg1 : i32 to index
    %3 = memref.load %arg3[%2] : memref<1xi32, #tpu.memory_space<smem>>
    %c0_i32 = arith.constant 0 : i32
    %4 = arith.cmpi eq, %3, %c0_i32 : i32
    %5 = arith.extui %4 : i1 to i32
    %c0_i32_0 = arith.constant 0 : i32
    %6 = arith.cmpi ne, %5, %c0_i32_0 : i32
    scf.if %6 {
      %cst = arith.constant -1.000000e+30 : f32
      %13 = vector.broadcast %cst : f32 to vector<4x8x1xf32>
      %c0 = arith.constant 0 : index
      %c0_3 = arith.constant 0 : index
      %c0_4 = arith.constant 0 : index
      %14 = vector.load %arg8[%c0, %c0_3, %c0_4] : memref<4x8x1xf32, #tpu.memory_space<vmem>>, vector<4x8x1xf32>
      tpu.vector_store %arg8[%c0, %c0_3, %c0_4], %13 {strides = array<i32>} : memref<4x8x1xf32, #tpu.memory_space<vmem>>, vector<4x8x1xf32>,
      %cst_5 = arith.constant 0.000000e+00 : f32
      %15 = vector.broadcast %cst_5 : f32 to vector<4x8x1xf32>
      %c0_6 = arith.constant 0 : index
      %c0_7 = arith.constant 0 : index
      %c0_8 = arith.constant 0 : index
      %16 = vector.load %arg9[%c0_6, %c0_7, %c0_8] : memref<4x8x1xf32, #tpu.memory_space<vmem>>, vector<4x8x1xf32>
      tpu.vector_store %arg9[%c0_6, %c0_7, %c0_8], %15 {strides = array<i32>} : memref<4x8x1xf32, #tpu.memory_space<vmem>>, vector<4x8x1xf32>,
      %cst_9 = arith.constant 0.000000e+00 : f32
      %17 = vector.broadcast %cst_9 : f32 to vector<4x8x8xf32>
      %c0_10 = arith.constant 0 : index
      %c0_11 = arith.constant 0 : index
      %c0_12 = arith.constant 0 : index
      %18 = vector.load %arg10[%c0_10, %c0_11, %c0_12] : memref<4x8x8xf32, #tpu.memory_space<vmem>>, vector<4x8x8xf32>
      tpu.vector_store %arg10[%c0_10, %c0_11, %c0_12], %17 {strides = array<i32>} : memref<4x8x8xf32, #tpu.memory_space<vmem>>, vector<4x8x8xf32>,
    } else {
    }
    %7 = arith.cmpi slt, %3, %1 : i32
    %8 = arith.extui %7 : i1 to i32
    %c0_i32_1 = arith.constant 0 : i32
    %9 = arith.cmpi ne, %8, %c0_i32_1 : i32
    scf.if %9 {
      %c0 = arith.constant 0 : index
      %c0_3 = arith.constant 0 : index
      %c0_4 = arith.constant 0 : index
      %c0_5 = arith.constant 0 : index
      %13 = vector.load %arg4[%c0, %c0_3, %c0_4, %c0_5] : memref<1x4x8x8xf32, #tpu.memory_space<vmem>>, vector<1x1x8x8xf32>
      %14 = vector.shape_cast %13 : vector<1x1x8x8xf32> to vector<8x8xf32>
      %c0_6 = arith.constant 0 : index
      %c0_7 = arith.constant 0 : index
      %c0_8 = arith.constant 0 : index
      %c0_9 = arith.constant 0 : index
      %15 = vector.load %arg5[%c0_6, %c0_7, %c0_8, %c0_9] : memref<1x4x8x8xf32, #tpu.memory_space<vmem>>, vector<1x1x8x8xf32>
      %16 = vector.shape_cast %15 : vector<1x1x8x8xf32> to vector<8x8xf32>
      %c0_10 = arith.constant 0 : index
      %c0_11 = arith.constant 0 : index
      %c0_12 = arith.constant 0 : index
      %c0_13 = arith.constant 0 : index
      %17 = vector.load %arg6[%c0_10, %c0_11, %c0_12, %c0_13] : memref<1x4x8x8xf32, #tpu.memory_space<vmem>>, vector<1x1x8x8xf32>
      %18 = vector.shape_cast %17 : vector<1x1x8x8xf32> to vector<8x8xf32>
      %cst = arith.constant dense<0.000000e+00> : vector<8x8xf32>
      %19 = tpu.matmul %14, %16, %cst {dimension_numbers = #tpu.dot_dimension_numbers<[1], [1], [0], [0], [0, 0, 1, 0], [], []>} : vector<8x8xf32>, vector<8x8xf32>, vector<8x8xf32> -> vector<8x8xf32>
      %c0_14 = arith.constant 0 : index
      %c0_15 = arith.constant 0 : index
      %c0_16 = arith.constant 0 : index
      %20 = vector.load %arg8[%c0_14, %c0_15, %c0_16] : memref<4x8x1xf32, #tpu.memory_space<vmem>>, vector<1x8x1xf32>
      %21 = vector.shape_cast %20 : vector<1x8x1xf32> to vector<8x1xf32>
      %cst_17 = arith.constant dense<0xFF800000> : vector<8xf32>
      %22 = vector.multi_reduction <maximumf>, %19, %cst_17 [1] : vector<8x8xf32> to vector<8xf32>
      %23 = vector.shape_cast %22 : vector<8xf32> to vector<8x1xf32>
      %24 = arith.maximumf %21, %23 : vector<8x1xf32>
      %25 = arith.subf %21, %24 : vector<8x1xf32>
      %26 = math.exp %25 : vector<8x1xf32>
      %27 = vector.broadcast %24 : vector<8x1xf32> to vector<8x8xf32>
      %28 = arith.subf %19, %27 : vector<8x8xf32>
      %29 = math.exp %28 : vector<8x8xf32>
      %c0_18 = arith.constant 0 : index
      %c0_19 = arith.constant 0 : index
      %c0_20 = arith.constant 0 : index
      %30 = vector.load %arg9[%c0_18, %c0_19, %c0_20] : memref<4x8x1xf32, #tpu.memory_space<vmem>>, vector<1x8x1xf32>
      %31 = vector.shape_cast %30 : vector<1x8x1xf32> to vector<8x1xf32>
      %32 = arith.mulf %26, %31 : vector<8x1xf32>
      %cst_21 = arith.constant dense<0.000000e+00> : vector<8xf32>
      %33 = vector.multi_reduction <add>, %29, %cst_21 [1] : vector<8x8xf32> to vector<8xf32>
      %34 = vector.shape_cast %33 : vector<8xf32> to vector<8x1xf32>
      %35 = arith.addf %32, %34 : vector<8x1xf32>
      %c0_22 = arith.constant 0 : index
      %c0_23 = arith.constant 0 : index
      %c0_24 = arith.constant 0 : index
      %36 = vector.load %arg9[%c0_22, %c0_23, %c0_24] : memref<4x8x1xf32, #tpu.memory_space<vmem>>, vector<1x8x1xf32>
      %37 = vector.shape_cast %36 : vector<1x8x1xf32> to vector<8x1xf32>
      %38 = vector.shape_cast %35 : vector<8x1xf32> to vector<1x8x1xf32>
      tpu.vector_store %arg9[%c0_22, %c0_23, %c0_24], %38 {strides = array<i32>} : memref<4x8x1xf32, #tpu.memory_space<vmem>>, vector<1x8x1xf32>,
      %c0_25 = arith.constant 0 : index
      %c0_26 = arith.constant 0 : index
      %c0_27 = arith.constant 0 : index
      %39 = vector.load %arg10[%c0_25, %c0_26, %c0_27] : memref<4x8x8xf32, #tpu.memory_space<vmem>>, vector<1x8x8xf32>
      %40 = vector.shape_cast %39 : vector<1x8x8xf32> to vector<8x8xf32>
      %41 = vector.broadcast %26 : vector<8x1xf32> to vector<8x8xf32>
      %42 = arith.mulf %41, %40 : vector<8x8xf32>
      %cst_28 = arith.constant dense<0.000000e+00> : vector<8x8xf32>
      %43 = tpu.matmul %29, %18, %cst_28 {dimension_numbers = #tpu.dot_dimension_numbers<[1], [0], [0], [1], [0, 0, 1, 1], [], []>} : vector<8x8xf32>, vector<8x8xf32>, vector<8x8xf32> -> vector<8x8xf32>
      %44 = arith.addf %42, %43 : vector<8x8xf32>
      %c0_29 = arith.constant 0 : index
      %c0_30 = arith.constant 0 : index
      %c0_31 = arith.constant 0 : index
      %45 = vector.load %arg10[%c0_29, %c0_30, %c0_31] : memref<4x8x8xf32, #tpu.memory_space<vmem>>, vector<1x8x8xf32>
      %46 = vector.shape_cast %45 : vector<1x8x8xf32> to vector<8x8xf32>
      %47 = vector.shape_cast %44 : vector<8x8xf32> to vector<1x8x8xf32>
      tpu.vector_store %arg10[%c0_29, %c0_30, %c0_31], %47 {strides = array<i32>} : memref<4x8x8xf32, #tpu.memory_space<vmem>>, vector<1x8x8xf32>,
      %c0_32 = arith.constant 0 : index
      %c0_33 = arith.constant 0 : index
      %c0_34 = arith.constant 0 : index
      %48 = vector.load %arg8[%c0_32, %c0_33, %c0_34] : memref<4x8x1xf32, #tpu.memory_space<vmem>>, vector<1x8x1xf32>
      %49 = vector.shape_cast %48 : vector<1x8x1xf32> to vector<8x1xf32>
      %50 = vector.shape_cast %24 : vector<8x1xf32> to vector<1x8x1xf32>
      tpu.vector_store %arg8[%c0_32, %c0_33, %c0_34], %50 {strides = array<i32>} : memref<4x8x1xf32, #tpu.memory_space<vmem>>, vector<1x8x1xf32>,
      %c0_35 = arith.constant 0 : index
      %c1 = arith.constant 1 : index
      %c0_36 = arith.constant 0 : index
      %c0_37 = arith.constant 0 : index
      %51 = vector.load %arg4[%c0_35, %c1, %c0_36, %c0_37] : memref<1x4x8x8xf32, #tpu.memory_space<vmem>>, vector<1x1x8x8xf32>
      %52 = vector.shape_cast %51 : vector<1x1x8x8xf32> to vector<8x8xf32>
      %c0_38 = arith.constant 0 : index
      %c1_39 = arith.constant 1 : index
      %c0_40 = arith.constant 0 : index
      %c0_41 = arith.constant 0 : index
      %53 = vector.load %arg5[%c0_38, %c1_39, %c0_40, %c0_41] : memref<1x4x8x8xf32, #tpu.memory_space<vmem>>, vector<1x1x8x8xf32>
      %54 = vector.shape_cast %53 : vector<1x1x8x8xf32> to vector<8x8xf32>
      %c0_42 = arith.constant 0 : index
      %c1_43 = arith.constant 1 : index
      %c0_44 = arith.constant 0 : index
      %c0_45 = arith.constant 0 : index
      %55 = vector.load %arg6[%c0_42, %c1_43, %c0_44, %c0_45] : memref<1x4x8x8xf32, #tpu.memory_space<vmem>>, vector<1x1x8x8xf32>
      %56 = vector.shape_cast %55 : vector<1x1x8x8xf32> to vector<8x8xf32>
      %cst_46 = arith.constant dense<0.000000e+00> : vector<8x8xf32>
      %57 = tpu.matmul %52, %54, %cst_46 {dimension_numbers = #tpu.dot_dimension_numbers<[1], [1], [0], [0], [0, 0, 1, 0], [], []>} : vector<8x8xf32>, vector<8x8xf32>, vector<8x8xf32> -> vector<8x8xf32>
      %c1_47 = arith.constant 1 : index
      %c0_48 = arith.constant 0 : index
      %c0_49 = arith.constant 0 : index
      %58 = vector.load %arg8[%c1_47, %c0_48, %c0_49] : memref<4x8x1xf32, #tpu.memory_space<vmem>>, vector<1x8x1xf32>
      %59 = vector.shape_cast %58 : vector<1x8x1xf32> to vector<8x1xf32>
      %cst_50 = arith.constant dense<0xFF800000> : vector<8xf32>
      %60 = vector.multi_reduction <maximumf>, %57, %cst_50 [1] : vector<8x8xf32> to vector<8xf32>
      %61 = vector.shape_cast %60 : vector<8xf32> to vector<8x1xf32>
      %62 = arith.maximumf %59, %61 : vector<8x1xf32>
      %63 = arith.subf %59, %62 : vector<8x1xf32>
      %64 = math.exp %63 : vector<8x1xf32>
      %65 = vector.broadcast %62 : vector<8x1xf32> to vector<8x8xf32>
      %66 = arith.subf %57, %65 : vector<8x8xf32>
      %67 = math.exp %66 : vector<8x8xf32>
      %c1_51 = arith.constant 1 : index
      %c0_52 = arith.constant 0 : index
      %c0_53 = arith.constant 0 : index
      %68 = vector.load %arg9[%c1_51, %c0_52, %c0_53] : memref<4x8x1xf32, #tpu.memory_space<vmem>>, vector<1x8x1xf32>
      %69 = vector.shape_cast %68 : vector<1x8x1xf32> to vector<8x1xf32>
      %70 = arith.mulf %64, %69 : vector<8x1xf32>
      %cst_54 = arith.constant dense<0.000000e+00> : vector<8xf32>
      %71 = vector.multi_reduction <add>, %67, %cst_54 [1] : vector<8x8xf32> to vector<8xf32>
      %72 = vector.shape_cast %71 : vector<8xf32> to vector<8x1xf32>
      %73 = arith.addf %70, %72 : vector<8x1xf32>
      %c1_55 = arith.constant 1 : index
      %c0_56 = arith.constant 0 : index
      %c0_57 = arith.constant 0 : index
      %74 = vector.load %arg9[%c1_55, %c0_56, %c0_57] : memref<4x8x1xf32, #tpu.memory_space<vmem>>, vector<1x8x1xf32>
      %75 = vector.shape_cast %74 : vector<1x8x1xf32> to vector<8x1xf32>
      %76 = vector.shape_cast %73 : vector<8x1xf32> to vector<1x8x1xf32>
      tpu.vector_store %arg9[%c1_55, %c0_56, %c0_57], %76 {strides = array<i32>} : memref<4x8x1xf32, #tpu.memory_space<vmem>>, vector<1x8x1xf32>,
      %c1_58 = arith.constant 1 : index
      %c0_59 = arith.constant 0 : index
      %c0_60 = arith.constant 0 : index
      %77 = vector.load %arg10[%c1_58, %c0_59, %c0_60] : memref<4x8x8xf32, #tpu.memory_space<vmem>>, vector<1x8x8xf32>
      %78 = vector.shape_cast %77 : vector<1x8x8xf32> to vector<8x8xf32>
      %79 = vector.broadcast %64 : vector<8x1xf32> to vector<8x8xf32>
      %80 = arith.mulf %79, %78 : vector<8x8xf32>
      %cst_61 = arith.constant dense<0.000000e+00> : vector<8x8xf32>
      %81 = tpu.matmul %67, %56, %cst_61 {dimension_numbers = #tpu.dot_dimension_numbers<[1], [0], [0], [1], [0, 0, 1, 1], [], []>} : vector<8x8xf32>, vector<8x8xf32>, vector<8x8xf32> -> vector<8x8xf32>
      %82 = arith.addf %80, %81 : vector<8x8xf32>
      %c1_62 = arith.constant 1 : index
      %c0_63 = arith.constant 0 : index
      %c0_64 = arith.constant 0 : index
      %83 = vector.load %arg10[%c1_62, %c0_63, %c0_64] : memref<4x8x8xf32, #tpu.memory_space<vmem>>, vector<1x8x8xf32>
      %84 = vector.shape_cast %83 : vector<1x8x8xf32> to vector<8x8xf32>
      %85 = vector.shape_cast %82 : vector<8x8xf32> to vector<1x8x8xf32>
      tpu.vector_store %arg10[%c1_62, %c0_63, %c0_64], %85 {strides = array<i32>} : memref<4x8x8xf32, #tpu.memory_space<vmem>>, vector<1x8x8xf32>,
      %c1_65 = arith.constant 1 : index
      %c0_66 = arith.constant 0 : index
      %c0_67 = arith.constant 0 : index
      %86 = vector.load %arg8[%c1_65, %c0_66, %c0_67] : memref<4x8x1xf32, #tpu.memory_space<vmem>>, vector<1x8x1xf32>
      %87 = vector.shape_cast %86 : vector<1x8x1xf32> to vector<8x1xf32>
      %88 = vector.shape_cast %62 : vector<8x1xf32> to vector<1x8x1xf32>
      tpu.vector_store %arg8[%c1_65, %c0_66, %c0_67], %88 {strides = array<i32>} : memref<4x8x1xf32, #tpu.memory_space<vmem>>, vector<1x8x1xf32>,
      %c0_68 = arith.constant 0 : index
      %c2 = arith.constant 2 : index
      %c0_69 = arith.constant 0 : index
      %c0_70 = arith.constant 0 : index
      %89 = vector.load %arg4[%c0_68, %c2, %c0_69, %c0_70] : memref<1x4x8x8xf32, #tpu.memory_space<vmem>>, vector<1x1x8x8xf32>
      %90 = vector.shape_cast %89 : vector<1x1x8x8xf32> to vector<8x8xf32>
      %c0_71 = arith.constant 0 : index
      %c2_72 = arith.constant 2 : index
      %c0_73 = arith.constant 0 : index
      %c0_74 = arith.constant 0 : index
      %91 = vector.load %arg5[%c0_71, %c2_72, %c0_73, %c0_74] : memref<1x4x8x8xf32, #tpu.memory_space<vmem>>, vector<1x1x8x8xf32>
      %92 = vector.shape_cast %91 : vector<1x1x8x8xf32> to vector<8x8xf32>
      %c0_75 = arith.constant 0 : index
      %c2_76 = arith.constant 2 : index
      %c0_77 = arith.constant 0 : index
      %c0_78 = arith.constant 0 : index
      %93 = vector.load %arg6[%c0_75, %c2_76, %c0_77, %c0_78] : memref<1x4x8x8xf32, #tpu.memory_space<vmem>>, vector<1x1x8x8xf32>
      %94 = vector.shape_cast %93 : vector<1x1x8x8xf32> to vector<8x8xf32>
      %cst_79 = arith.constant dense<0.000000e+00> : vector<8x8xf32>
      %95 = tpu.matmul %90, %92, %cst_79 {dimension_numbers = #tpu.dot_dimension_numbers<[1], [1], [0], [0], [0, 0, 1, 0], [], []>} : vector<8x8xf32>, vector<8x8xf32>, vector<8x8xf32> -> vector<8x8xf32>
      %c2_80 = arith.constant 2 : index
      %c0_81 = arith.constant 0 : index
      %c0_82 = arith.constant 0 : index
      %96 = vector.load %arg8[%c2_80, %c0_81, %c0_82] : memref<4x8x1xf32, #tpu.memory_space<vmem>>, vector<1x8x1xf32>
      %97 = vector.shape_cast %96 : vector<1x8x1xf32> to vector<8x1xf32>
      %cst_83 = arith.constant dense<0xFF800000> : vector<8xf32>
      %98 = vector.multi_reduction <maximumf>, %95, %cst_83 [1] : vector<8x8xf32> to vector<8xf32>
      %99 = vector.shape_cast %98 : vector<8xf32> to vector<8x1xf32>
      %100 = arith.maximumf %97, %99 : vector<8x1xf32>
      %101 = arith.subf %97, %100 : vector<8x1xf32>
      %102 = math.exp %101 : vector<8x1xf32>
      %103 = vector.broadcast %100 : vector<8x1xf32> to vector<8x8xf32>
      %104 = arith.subf %95, %103 : vector<8x8xf32>
      %105 = math.exp %104 : vector<8x8xf32>
      %c2_84 = arith.constant 2 : index
      %c0_85 = arith.constant 0 : index
      %c0_86 = arith.constant 0 : index
      %106 = vector.load %arg9[%c2_84, %c0_85, %c0_86] : memref<4x8x1xf32, #tpu.memory_space<vmem>>, vector<1x8x1xf32>
      %107 = vector.shape_cast %106 : vector<1x8x1xf32> to vector<8x1xf32>
      %108 = arith.mulf %102, %107 : vector<8x1xf32>
      %cst_87 = arith.constant dense<0.000000e+00> : vector<8xf32>
      %109 = vector.multi_reduction <add>, %105, %cst_87 [1] : vector<8x8xf32> to vector<8xf32>
      %110 = vector.shape_cast %109 : vector<8xf32> to vector<8x1xf32>
      %111 = arith.addf %108, %110 : vector<8x1xf32>
      %c2_88 = arith.constant 2 : index
      %c0_89 = arith.constant 0 : index
      %c0_90 = arith.constant 0 : index
      %112 = vector.load %arg9[%c2_88, %c0_89, %c0_90] : memref<4x8x1xf32, #tpu.memory_space<vmem>>, vector<1x8x1xf32>
      %113 = vector.shape_cast %112 : vector<1x8x1xf32> to vector<8x1xf32>
      %114 = vector.shape_cast %111 : vector<8x1xf32> to vector<1x8x1xf32>
      tpu.vector_store %arg9[%c2_88, %c0_89, %c0_90], %114 {strides = array<i32>} : memref<4x8x1xf32, #tpu.memory_space<vmem>>, vector<1x8x1xf32>,
      %c2_91 = arith.constant 2 : index
      %c0_92 = arith.constant 0 : index
      %c0_93 = arith.constant 0 : index
      %115 = vector.load %arg10[%c2_91, %c0_92, %c0_93] : memref<4x8x8xf32, #tpu.memory_space<vmem>>, vector<1x8x8xf32>
      %116 = vector.shape_cast %115 : vector<1x8x8xf32> to vector<8x8xf32>
      %117 = vector.broadcast %102 : vector<8x1xf32> to vector<8x8xf32>
      %118 = arith.mulf %117, %116 : vector<8x8xf32>
      %cst_94 = arith.constant dense<0.000000e+00> : vector<8x8xf32>
      %119 = tpu.matmul %105, %94, %cst_94 {dimension_numbers = #tpu.dot_dimension_numbers<[1], [0], [0], [1], [0, 0, 1, 1], [], []>} : vector<8x8xf32>, vector<8x8xf32>, vector<8x8xf32> -> vector<8x8xf32>
      %120 = arith.addf %118, %119 : vector<8x8xf32>
      %c2_95 = arith.constant 2 : index
      %c0_96 = arith.constant 0 : index
      %c0_97 = arith.constant 0 : index
      %121 = vector.load %arg10[%c2_95, %c0_96, %c0_97] : memref<4x8x8xf32, #tpu.memory_space<vmem>>, vector<1x8x8xf32>
      %122 = vector.shape_cast %121 : vector<1x8x8xf32> to vector<8x8xf32>
      %123 = vector.shape_cast %120 : vector<8x8xf32> to vector<1x8x8xf32>
      tpu.vector_store %arg10[%c2_95, %c0_96, %c0_97], %123 {strides = array<i32>} : memref<4x8x8xf32, #tpu.memory_space<vmem>>, vector<1x8x8xf32>,
      %c2_98 = arith.constant 2 : index
      %c0_99 = arith.constant 0 : index
      %c0_100 = arith.constant 0 : index
      %124 = vector.load %arg8[%c2_98, %c0_99, %c0_100] : memref<4x8x1xf32, #tpu.memory_space<vmem>>, vector<1x8x1xf32>
      %125 = vector.shape_cast %124 : vector<1x8x1xf32> to vector<8x1xf32>
      %126 = vector.shape_cast %100 : vector<8x1xf32> to vector<1x8x1xf32>
      tpu.vector_store %arg8[%c2_98, %c0_99, %c0_100], %126 {strides = array<i32>} : memref<4x8x1xf32, #tpu.memory_space<vmem>>, vector<1x8x1xf32>,
      %c0_101 = arith.constant 0 : index
      %c3 = arith.constant 3 : index
      %c0_102 = arith.constant 0 : index
      %c0_103 = arith.constant 0 : index
      %127 = vector.load %arg4[%c0_101, %c3, %c0_102, %c0_103] : memref<1x4x8x8xf32, #tpu.memory_space<vmem>>, vector<1x1x8x8xf32>
      %128 = vector.shape_cast %127 : vector<1x1x8x8xf32> to vector<8x8xf32>
      %c0_104 = arith.constant 0 : index
      %c3_105 = arith.constant 3 : index
      %c0_106 = arith.constant 0 : index
      %c0_107 = arith.constant 0 : index
      %129 = vector.load %arg5[%c0_104, %c3_105, %c0_106, %c0_107] : memref<1x4x8x8xf32, #tpu.memory_space<vmem>>, vector<1x1x8x8xf32>
      %130 = vector.shape_cast %129 : vector<1x1x8x8xf32> to vector<8x8xf32>
      %c0_108 = arith.constant 0 : index
      %c3_109 = arith.constant 3 : index
      %c0_110 = arith.constant 0 : index
      %c0_111 = arith.constant 0 : index
      %131 = vector.load %arg6[%c0_108, %c3_109, %c0_110, %c0_111] : memref<1x4x8x8xf32, #tpu.memory_space<vmem>>, vector<1x1x8x8xf32>
      %132 = vector.shape_cast %131 : vector<1x1x8x8xf32> to vector<8x8xf32>
      %cst_112 = arith.constant dense<0.000000e+00> : vector<8x8xf32>
      %133 = tpu.matmul %128, %130, %cst_112 {dimension_numbers = #tpu.dot_dimension_numbers<[1], [1], [0], [0], [0, 0, 1, 0], [], []>} : vector<8x8xf32>, vector<8x8xf32>, vector<8x8xf32> -> vector<8x8xf32>
      %c3_113 = arith.constant 3 : index
      %c0_114 = arith.constant 0 : index
      %c0_115 = arith.constant 0 : index
      %134 = vector.load %arg8[%c3_113, %c0_114, %c0_115] : memref<4x8x1xf32, #tpu.memory_space<vmem>>, vector<1x8x1xf32>
      %135 = vector.shape_cast %134 : vector<1x8x1xf32> to vector<8x1xf32>
      %cst_116 = arith.constant dense<0xFF800000> : vector<8xf32>
      %136 = vector.multi_reduction <maximumf>, %133, %cst_116 [1] : vector<8x8xf32> to vector<8xf32>
      %137 = vector.shape_cast %136 : vector<8xf32> to vector<8x1xf32>
      %138 = arith.maximumf %135, %137 : vector<8x1xf32>
      %139 = arith.subf %135, %138 : vector<8x1xf32>
      %140 = math.exp %139 : vector<8x1xf32>
      %141 = vector.broadcast %138 : vector<8x1xf32> to vector<8x8xf32>
      %142 = arith.subf %133, %141 : vector<8x8xf32>
      %143 = math.exp %142 : vector<8x8xf32>
      %c3_117 = arith.constant 3 : index
      %c0_118 = arith.constant 0 : index
      %c0_119 = arith.constant 0 : index
      %144 = vector.load %arg9[%c3_117, %c0_118, %c0_119] : memref<4x8x1xf32, #tpu.memory_space<vmem>>, vector<1x8x1xf32>
      %145 = vector.shape_cast %144 : vector<1x8x1xf32> to vector<8x1xf32>
      %146 = arith.mulf %140, %145 : vector<8x1xf32>
      %cst_120 = arith.constant dense<0.000000e+00> : vector<8xf32>
      %147 = vector.multi_reduction <add>, %143, %cst_120 [1] : vector<8x8xf32> to vector<8xf32>
      %148 = vector.shape_cast %147 : vector<8xf32> to vector<8x1xf32>
      %149 = arith.addf %146, %148 : vector<8x1xf32>
      %c3_121 = arith.constant 3 : index
      %c0_122 = arith.constant 0 : index
      %c0_123 = arith.constant 0 : index
      %150 = vector.load %arg9[%c3_121, %c0_122, %c0_123] : memref<4x8x1xf32, #tpu.memory_space<vmem>>, vector<1x8x1xf32>
      %151 = vector.shape_cast %150 : vector<1x8x1xf32> to vector<8x1xf32>
      %152 = vector.shape_cast %149 : vector<8x1xf32> to vector<1x8x1xf32>
      tpu.vector_store %arg9[%c3_121, %c0_122, %c0_123], %152 {strides = array<i32>} : memref<4x8x1xf32, #tpu.memory_space<vmem>>, vector<1x8x1xf32>,
      %c3_124 = arith.constant 3 : index
      %c0_125 = arith.constant 0 : index
      %c0_126 = arith.constant 0 : index
      %153 = vector.load %arg10[%c3_124, %c0_125, %c0_126] : memref<4x8x8xf32, #tpu.memory_space<vmem>>, vector<1x8x8xf32>
      %154 = vector.shape_cast %153 : vector<1x8x8xf32> to vector<8x8xf32>
      %155 = vector.broadcast %140 : vector<8x1xf32> to vector<8x8xf32>
      %156 = arith.mulf %155, %154 : vector<8x8xf32>
      %cst_127 = arith.constant dense<0.000000e+00> : vector<8x8xf32>
      %157 = tpu.matmul %143, %132, %cst_127 {dimension_numbers = #tpu.dot_dimension_numbers<[1], [0], [0], [1], [0, 0, 1, 1], [], []>} : vector<8x8xf32>, vector<8x8xf32>, vector<8x8xf32> -> vector<8x8xf32>
      %158 = arith.addf %156, %157 : vector<8x8xf32>
      %c3_128 = arith.constant 3 : index
      %c0_129 = arith.constant 0 : index
      %c0_130 = arith.constant 0 : index
      %159 = vector.load %arg10[%c3_128, %c0_129, %c0_130] : memref<4x8x8xf32, #tpu.memory_space<vmem>>, vector<1x8x8xf32>
      %160 = vector.shape_cast %159 : vector<1x8x8xf32> to vector<8x8xf32>
      %161 = vector.shape_cast %158 : vector<8x8xf32> to vector<1x8x8xf32>
      tpu.vector_store %arg10[%c3_128, %c0_129, %c0_130], %161 {strides = array<i32>} : memref<4x8x8xf32, #tpu.memory_space<vmem>>, vector<1x8x8xf32>,
      %c3_131 = arith.constant 3 : index
      %c0_132 = arith.constant 0 : index
      %c0_133 = arith.constant 0 : index
      %162 = vector.load %arg8[%c3_131, %c0_132, %c0_133] : memref<4x8x1xf32, #tpu.memory_space<vmem>>, vector<1x8x1xf32>
      %163 = vector.shape_cast %162 : vector<1x8x1xf32> to vector<8x1xf32>
      %164 = vector.shape_cast %138 : vector<8x1xf32> to vector<1x8x1xf32>
      tpu.vector_store %arg8[%c3_131, %c0_132, %c0_133], %164 {strides = array<i32>} : memref<4x8x1xf32, #tpu.memory_space<vmem>>, vector<1x8x1xf32>,
    } else {
    }
    %10 = arith.cmpi eq, %3, %1 : i32
    %11 = arith.extui %10 : i1 to i32
    %c0_i32_2 = arith.constant 0 : i32
    %12 = arith.cmpi ne, %11, %c0_i32_2 : i32
    scf.if %12 {
      %13 = tpu.iota {dimensions = array<i32: 0>} : vector<8x8xi32>
      %14 = tpu.iota {dimensions = array<i32: 1>} : vector<8x8xi32>
      %15 = arith.cmpi sge, %13, %14 : vector<8x8xi32>
      %c0 = arith.constant 0 : index
      %c0_3 = arith.constant 0 : index
      %c0_4 = arith.constant 0 : index
      %c0_5 = arith.constant 0 : index
      %16 = vector.load %arg4[%c0, %c0_3, %c0_4, %c0_5] : memref<1x4x8x8xf32, #tpu.memory_space<vmem>>, vector<1x1x8x8xf32>
      %17 = vector.shape_cast %16 : vector<1x1x8x8xf32> to vector<8x8xf32>
      %c0_6 = arith.constant 0 : index
      %c0_7 = arith.constant 0 : index
      %c0_8 = arith.constant 0 : index
      %c0_9 = arith.constant 0 : index
      %18 = vector.load %arg5[%c0_6, %c0_7, %c0_8, %c0_9] : memref<1x4x8x8xf32, #tpu.memory_space<vmem>>, vector<1x1x8x8xf32>
      %19 = vector.shape_cast %18 : vector<1x1x8x8xf32> to vector<8x8xf32>
      %c0_10 = arith.constant 0 : index
      %c0_11 = arith.constant 0 : index
      %c0_12 = arith.constant 0 : index
      %c0_13 = arith.constant 0 : index
      %20 = vector.load %arg6[%c0_10, %c0_11, %c0_12, %c0_13] : memref<1x4x8x8xf32, #tpu.memory_space<vmem>>, vector<1x1x8x8xf32>
      %21 = vector.shape_cast %20 : vector<1x1x8x8xf32> to vector<8x8xf32>
      %cst = arith.constant dense<0.000000e+00> : vector<8x8xf32>
      %22 = tpu.matmul %17, %19, %cst {dimension_numbers = #tpu.dot_dimension_numbers<[1], [1], [0], [0], [0, 0, 1, 0], [], []>} : vector<8x8xf32>, vector<8x8xf32>, vector<8x8xf32> -> vector<8x8xf32>
      %cst_14 = arith.constant -1.000000e+30 : f32
      %23 = vector.broadcast %cst_14 : f32 to vector<8x8xf32>
      %24 = arith.select %15, %22, %23 : vector<8x8xi1>, vector<8x8xf32>
      %c0_15 = arith.constant 0 : index
      %c0_16 = arith.constant 0 : index
      %c0_17 = arith.constant 0 : index
      %25 = vector.load %arg8[%c0_15, %c0_16, %c0_17] : memref<4x8x1xf32, #tpu.memory_space<vmem>>, vector<1x8x1xf32>
      %26 = vector.shape_cast %25 : vector<1x8x1xf32> to vector<8x1xf32>
      %cst_18 = arith.constant dense<0xFF800000> : vector<8xf32>
      %27 = vector.multi_reduction <maximumf>, %24, %cst_18 [1] : vector<8x8xf32> to vector<8xf32>
      %28 = vector.shape_cast %27 : vector<8xf32> to vector<8x1xf32>
      %29 = arith.maximumf %26, %28 : vector<8x1xf32>
      %30 = arith.subf %26, %29 : vector<8x1xf32>
      %31 = math.exp %30 : vector<8x1xf32>
      %32 = vector.broadcast %29 : vector<8x1xf32> to vector<8x8xf32>
      %33 = arith.subf %24, %32 : vector<8x8xf32>
      %34 = math.exp %33 : vector<8x8xf32>
      %c0_19 = arith.constant 0 : index
      %c0_20 = arith.constant 0 : index
      %c0_21 = arith.constant 0 : index
      %35 = vector.load %arg9[%c0_19, %c0_20, %c0_21] : memref<4x8x1xf32, #tpu.memory_space<vmem>>, vector<1x8x1xf32>
      %36 = vector.shape_cast %35 : vector<1x8x1xf32> to vector<8x1xf32>
      %37 = arith.mulf %31, %36 : vector<8x1xf32>
      %cst_22 = arith.constant dense<0.000000e+00> : vector<8xf32>
      %38 = vector.multi_reduction <add>, %34, %cst_22 [1] : vector<8x8xf32> to vector<8xf32>
      %39 = vector.shape_cast %38 : vector<8xf32> to vector<8x1xf32>
      %40 = arith.addf %37, %39 : vector<8x1xf32>
      %c0_23 = arith.constant 0 : index
      %c0_24 = arith.constant 0 : index
      %c0_25 = arith.constant 0 : index
      %41 = vector.load %arg9[%c0_23, %c0_24, %c0_25] : memref<4x8x1xf32, #tpu.memory_space<vmem>>, vector<1x8x1xf32>
      %42 = vector.shape_cast %41 : vector<1x8x1xf32> to vector<8x1xf32>
      %43 = vector.shape_cast %40 : vector<8x1xf32> to vector<1x8x1xf32>
      tpu.vector_store %arg9[%c0_23, %c0_24, %c0_25], %43 {strides = array<i32>} : memref<4x8x1xf32, #tpu.memory_space<vmem>>, vector<1x8x1xf32>,
      %c0_26 = arith.constant 0 : index
      %c0_27 = arith.constant 0 : index
      %c0_28 = arith.constant 0 : index
      %44 = vector.load %arg10[%c0_26, %c0_27, %c0_28] : memref<4x8x8xf32, #tpu.memory_space<vmem>>, vector<1x8x8xf32>
      %45 = vector.shape_cast %44 : vector<1x8x8xf32> to vector<8x8xf32>
      %46 = vector.broadcast %31 : vector<8x1xf32> to vector<8x8xf32>
      %47 = arith.mulf %46, %45 : vector<8x8xf32>
      %cst_29 = arith.constant dense<0.000000e+00> : vector<8x8xf32>
      %48 = tpu.matmul %34, %21, %cst_29 {dimension_numbers = #tpu.dot_dimension_numbers<[1], [0], [0], [1], [0, 0, 1, 1], [], []>} : vector<8x8xf32>, vector<8x8xf32>, vector<8x8xf32> -> vector<8x8xf32>
      %49 = arith.addf %47, %48 : vector<8x8xf32>
      %c0_30 = arith.constant 0 : index
      %c0_31 = arith.constant 0 : index
      %c0_32 = arith.constant 0 : index
      %50 = vector.load %arg10[%c0_30, %c0_31, %c0_32] : memref<4x8x8xf32, #tpu.memory_space<vmem>>, vector<1x8x8xf32>
      %51 = vector.shape_cast %50 : vector<1x8x8xf32> to vector<8x8xf32>
      %52 = vector.shape_cast %49 : vector<8x8xf32> to vector<1x8x8xf32>
      tpu.vector_store %arg10[%c0_30, %c0_31, %c0_32], %52 {strides = array<i32>} : memref<4x8x8xf32, #tpu.memory_space<vmem>>, vector<1x8x8xf32>,
      %c0_33 = arith.constant 0 : index
      %c0_34 = arith.constant 0 : index
      %c0_35 = arith.constant 0 : index
      %53 = vector.load %arg8[%c0_33, %c0_34, %c0_35] : memref<4x8x1xf32, #tpu.memory_space<vmem>>, vector<1x8x1xf32>
      %54 = vector.shape_cast %53 : vector<1x8x1xf32> to vector<8x1xf32>
      %55 = vector.shape_cast %29 : vector<8x1xf32> to vector<1x8x1xf32>
      tpu.vector_store %arg8[%c0_33, %c0_34, %c0_35], %55 {strides = array<i32>} : memref<4x8x1xf32, #tpu.memory_space<vmem>>, vector<1x8x1xf32>,
      %c0_36 = arith.constant 0 : index
      %c1 = arith.constant 1 : index
      %c0_37 = arith.constant 0 : index
      %c0_38 = arith.constant 0 : index
      %56 = vector.load %arg4[%c0_36, %c1, %c0_37, %c0_38] : memref<1x4x8x8xf32, #tpu.memory_space<vmem>>, vector<1x1x8x8xf32>
      %57 = vector.shape_cast %56 : vector<1x1x8x8xf32> to vector<8x8xf32>
      %c0_39 = arith.constant 0 : index
      %c1_40 = arith.constant 1 : index
      %c0_41 = arith.constant 0 : index
      %c0_42 = arith.constant 0 : index
      %58 = vector.load %arg5[%c0_39, %c1_40, %c0_41, %c0_42] : memref<1x4x8x8xf32, #tpu.memory_space<vmem>>, vector<1x1x8x8xf32>
      %59 = vector.shape_cast %58 : vector<1x1x8x8xf32> to vector<8x8xf32>
      %c0_43 = arith.constant 0 : index
      %c1_44 = arith.constant 1 : index
      %c0_45 = arith.constant 0 : index
      %c0_46 = arith.constant 0 : index
      %60 = vector.load %arg6[%c0_43, %c1_44, %c0_45, %c0_46] : memref<1x4x8x8xf32, #tpu.memory_space<vmem>>, vector<1x1x8x8xf32>
      %61 = vector.shape_cast %60 : vector<1x1x8x8xf32> to vector<8x8xf32>
      %cst_47 = arith.constant dense<0.000000e+00> : vector<8x8xf32>
      %62 = tpu.matmul %57, %59, %cst_47 {dimension_numbers = #tpu.dot_dimension_numbers<[1], [1], [0], [0], [0, 0, 1, 0], [], []>} : vector<8x8xf32>, vector<8x8xf32>, vector<8x8xf32> -> vector<8x8xf32>
      %cst_48 = arith.constant -1.000000e+30 : f32
      %63 = vector.broadcast %cst_48 : f32 to vector<8x8xf32>
      %64 = arith.select %15, %62, %63 : vector<8x8xi1>, vector<8x8xf32>
      %c1_49 = arith.constant 1 : index
      %c0_50 = arith.constant 0 : index
      %c0_51 = arith.constant 0 : index
      %65 = vector.load %arg8[%c1_49, %c0_50, %c0_51] : memref<4x8x1xf32, #tpu.memory_space<vmem>>, vector<1x8x1xf32>
      %66 = vector.shape_cast %65 : vector<1x8x1xf32> to vector<8x1xf32>
      %cst_52 = arith.constant dense<0xFF800000> : vector<8xf32>
      %67 = vector.multi_reduction <maximumf>, %64, %cst_52 [1] : vector<8x8xf32> to vector<8xf32>
      %68 = vector.shape_cast %67 : vector<8xf32> to vector<8x1xf32>
      %69 = arith.maximumf %66, %68 : vector<8x1xf32>
      %70 = arith.subf %66, %69 : vector<8x1xf32>
      %71 = math.exp %70 : vector<8x1xf32>
      %72 = vector.broadcast %69 : vector<8x1xf32> to vector<8x8xf32>
      %73 = arith.subf %64, %72 : vector<8x8xf32>
      %74 = math.exp %73 : vector<8x8xf32>
      %c1_53 = arith.constant 1 : index
      %c0_54 = arith.constant 0 : index
      %c0_55 = arith.constant 0 : index
      %75 = vector.load %arg9[%c1_53, %c0_54, %c0_55] : memref<4x8x1xf32, #tpu.memory_space<vmem>>, vector<1x8x1xf32>
      %76 = vector.shape_cast %75 : vector<1x8x1xf32> to vector<8x1xf32>
      %77 = arith.mulf %71, %76 : vector<8x1xf32>
      %cst_56 = arith.constant dense<0.000000e+00> : vector<8xf32>
      %78 = vector.multi_reduction <add>, %74, %cst_56 [1] : vector<8x8xf32> to vector<8xf32>
      %79 = vector.shape_cast %78 : vector<8xf32> to vector<8x1xf32>
      %80 = arith.addf %77, %79 : vector<8x1xf32>
      %c1_57 = arith.constant 1 : index
      %c0_58 = arith.constant 0 : index
      %c0_59 = arith.constant 0 : index
      %81 = vector.load %arg9[%c1_57, %c0_58, %c0_59] : memref<4x8x1xf32, #tpu.memory_space<vmem>>, vector<1x8x1xf32>
      %82 = vector.shape_cast %81 : vector<1x8x1xf32> to vector<8x1xf32>
      %83 = vector.shape_cast %80 : vector<8x1xf32> to vector<1x8x1xf32>
      tpu.vector_store %arg9[%c1_57, %c0_58, %c0_59], %83 {strides = array<i32>} : memref<4x8x1xf32, #tpu.memory_space<vmem>>, vector<1x8x1xf32>,
      %c1_60 = arith.constant 1 : index
      %c0_61 = arith.constant 0 : index
      %c0_62 = arith.constant 0 : index
      %84 = vector.load %arg10[%c1_60, %c0_61, %c0_62] : memref<4x8x8xf32, #tpu.memory_space<vmem>>, vector<1x8x8xf32>
      %85 = vector.shape_cast %84 : vector<1x8x8xf32> to vector<8x8xf32>
      %86 = vector.broadcast %71 : vector<8x1xf32> to vector<8x8xf32>
      %87 = arith.mulf %86, %85 : vector<8x8xf32>
      %cst_63 = arith.constant dense<0.000000e+00> : vector<8x8xf32>
      %88 = tpu.matmul %74, %61, %cst_63 {dimension_numbers = #tpu.dot_dimension_numbers<[1], [0], [0], [1], [0, 0, 1, 1], [], []>} : vector<8x8xf32>, vector<8x8xf32>, vector<8x8xf32> -> vector<8x8xf32>
      %89 = arith.addf %87, %88 : vector<8x8xf32>
      %c1_64 = arith.constant 1 : index
      %c0_65 = arith.constant 0 : index
      %c0_66 = arith.constant 0 : index
      %90 = vector.load %arg10[%c1_64, %c0_65, %c0_66] : memref<4x8x8xf32, #tpu.memory_space<vmem>>, vector<1x8x8xf32>
      %91 = vector.shape_cast %90 : vector<1x8x8xf32> to vector<8x8xf32>
      %92 = vector.shape_cast %89 : vector<8x8xf32> to vector<1x8x8xf32>
      tpu.vector_store %arg10[%c1_64, %c0_65, %c0_66], %92 {strides = array<i32>} : memref<4x8x8xf32, #tpu.memory_space<vmem>>, vector<1x8x8xf32>,
      %c1_67 = arith.constant 1 : index
      %c0_68 = arith.constant 0 : index
      %c0_69 = arith.constant 0 : index
      %93 = vector.load %arg8[%c1_67, %c0_68, %c0_69] : memref<4x8x1xf32, #tpu.memory_space<vmem>>, vector<1x8x1xf32>
      %94 = vector.shape_cast %93 : vector<1x8x1xf32> to vector<8x1xf32>
      %95 = vector.shape_cast %69 : vector<8x1xf32> to vector<1x8x1xf32>
      tpu.vector_store %arg8[%c1_67, %c0_68, %c0_69], %95 {strides = array<i32>} : memref<4x8x1xf32, #tpu.memory_space<vmem>>, vector<1x8x1xf32>,
      %c0_70 = arith.constant 0 : index
      %c2 = arith.constant 2 : index
      %c0_71 = arith.constant 0 : index
      %c0_72 = arith.constant 0 : index
      %96 = vector.load %arg4[%c0_70, %c2, %c0_71, %c0_72] : memref<1x4x8x8xf32, #tpu.memory_space<vmem>>, vector<1x1x8x8xf32>
      %97 = vector.shape_cast %96 : vector<1x1x8x8xf32> to vector<8x8xf32>
      %c0_73 = arith.constant 0 : index
      %c2_74 = arith.constant 2 : index
      %c0_75 = arith.constant 0 : index
      %c0_76 = arith.constant 0 : index
      %98 = vector.load %arg5[%c0_73, %c2_74, %c0_75, %c0_76] : memref<1x4x8x8xf32, #tpu.memory_space<vmem>>, vector<1x1x8x8xf32>
      %99 = vector.shape_cast %98 : vector<1x1x8x8xf32> to vector<8x8xf32>
      %c0_77 = arith.constant 0 : index
      %c2_78 = arith.constant 2 : index
      %c0_79 = arith.constant 0 : index
      %c0_80 = arith.constant 0 : index
      %100 = vector.load %arg6[%c0_77, %c2_78, %c0_79, %c0_80] : memref<1x4x8x8xf32, #tpu.memory_space<vmem>>, vector<1x1x8x8xf32>
      %101 = vector.shape_cast %100 : vector<1x1x8x8xf32> to vector<8x8xf32>
      %cst_81 = arith.constant dense<0.000000e+00> : vector<8x8xf32>
      %102 = tpu.matmul %97, %99, %cst_81 {dimension_numbers = #tpu.dot_dimension_numbers<[1], [1], [0], [0], [0, 0, 1, 0], [], []>} : vector<8x8xf32>, vector<8x8xf32>, vector<8x8xf32> -> vector<8x8xf32>
      %cst_82 = arith.constant -1.000000e+30 : f32
      %103 = vector.broadcast %cst_82 : f32 to vector<8x8xf32>
      %104 = arith.select %15, %102, %103 : vector<8x8xi1>, vector<8x8xf32>
      %c2_83 = arith.constant 2 : index
      %c0_84 = arith.constant 0 : index
      %c0_85 = arith.constant 0 : index
      %105 = vector.load %arg8[%c2_83, %c0_84, %c0_85] : memref<4x8x1xf32, #tpu.memory_space<vmem>>, vector<1x8x1xf32>
      %106 = vector.shape_cast %105 : vector<1x8x1xf32> to vector<8x1xf32>
      %cst_86 = arith.constant dense<0xFF800000> : vector<8xf32>
      %107 = vector.multi_reduction <maximumf>, %104, %cst_86 [1] : vector<8x8xf32> to vector<8xf32>
      %108 = vector.shape_cast %107 : vector<8xf32> to vector<8x1xf32>
      %109 = arith.maximumf %106, %108 : vector<8x1xf32>
      %110 = arith.subf %106, %109 : vector<8x1xf32>
      %111 = math.exp %110 : vector<8x1xf32>
      %112 = vector.broadcast %109 : vector<8x1xf32> to vector<8x8xf32>
      %113 = arith.subf %104, %112 : vector<8x8xf32>
      %114 = math.exp %113 : vector<8x8xf32>
      %c2_87 = arith.constant 2 : index
      %c0_88 = arith.constant 0 : index
      %c0_89 = arith.constant 0 : index
      %115 = vector.load %arg9[%c2_87, %c0_88, %c0_89] : memref<4x8x1xf32, #tpu.memory_space<vmem>>, vector<1x8x1xf32>
      %116 = vector.shape_cast %115 : vector<1x8x1xf32> to vector<8x1xf32>
      %117 = arith.mulf %111, %116 : vector<8x1xf32>
      %cst_90 = arith.constant dense<0.000000e+00> : vector<8xf32>
      %118 = vector.multi_reduction <add>, %114, %cst_90 [1] : vector<8x8xf32> to vector<8xf32>
      %119 = vector.shape_cast %118 : vector<8xf32> to vector<8x1xf32>
      %120 = arith.addf %117, %119 : vector<8x1xf32>
      %c2_91 = arith.constant 2 : index
      %c0_92 = arith.constant 0 : index
      %c0_93 = arith.constant 0 : index
      %121 = vector.load %arg9[%c2_91, %c0_92, %c0_93] : memref<4x8x1xf32, #tpu.memory_space<vmem>>, vector<1x8x1xf32>
      %122 = vector.shape_cast %121 : vector<1x8x1xf32> to vector<8x1xf32>
      %123 = vector.shape_cast %120 : vector<8x1xf32> to vector<1x8x1xf32>
      tpu.vector_store %arg9[%c2_91, %c0_92, %c0_93], %123 {strides = array<i32>} : memref<4x8x1xf32, #tpu.memory_space<vmem>>, vector<1x8x1xf32>,
      %c2_94 = arith.constant 2 : index
      %c0_95 = arith.constant 0 : index
      %c0_96 = arith.constant 0 : index
      %124 = vector.load %arg10[%c2_94, %c0_95, %c0_96] : memref<4x8x8xf32, #tpu.memory_space<vmem>>, vector<1x8x8xf32>
      %125 = vector.shape_cast %124 : vector<1x8x8xf32> to vector<8x8xf32>
      %126 = vector.broadcast %111 : vector<8x1xf32> to vector<8x8xf32>
      %127 = arith.mulf %126, %125 : vector<8x8xf32>
      %cst_97 = arith.constant dense<0.000000e+00> : vector<8x8xf32>
      %128 = tpu.matmul %114, %101, %cst_97 {dimension_numbers = #tpu.dot_dimension_numbers<[1], [0], [0], [1], [0, 0, 1, 1], [], []>} : vector<8x8xf32>, vector<8x8xf32>, vector<8x8xf32> -> vector<8x8xf32>
      %129 = arith.addf %127, %128 : vector<8x8xf32>
      %c2_98 = arith.constant 2 : index
      %c0_99 = arith.constant 0 : index
      %c0_100 = arith.constant 0 : index
      %130 = vector.load %arg10[%c2_98, %c0_99, %c0_100] : memref<4x8x8xf32, #tpu.memory_space<vmem>>, vector<1x8x8xf32>
      %131 = vector.shape_cast %130 : vector<1x8x8xf32> to vector<8x8xf32>
      %132 = vector.shape_cast %129 : vector<8x8xf32> to vector<1x8x8xf32>
      tpu.vector_store %arg10[%c2_98, %c0_99, %c0_100], %132 {strides = array<i32>} : memref<4x8x8xf32, #tpu.memory_space<vmem>>, vector<1x8x8xf32>,
      %c2_101 = arith.constant 2 : index
      %c0_102 = arith.constant 0 : index
      %c0_103 = arith.constant 0 : index
      %133 = vector.load %arg8[%c2_101, %c0_102, %c0_103] : memref<4x8x1xf32, #tpu.memory_space<vmem>>, vector<1x8x1xf32>
      %134 = vector.shape_cast %133 : vector<1x8x1xf32> to vector<8x1xf32>
      %135 = vector.shape_cast %109 : vector<8x1xf32> to vector<1x8x1xf32>
      tpu.vector_store %arg8[%c2_101, %c0_102, %c0_103], %135 {strides = array<i32>} : memref<4x8x1xf32, #tpu.memory_space<vmem>>, vector<1x8x1xf32>,
      %c0_104 = arith.constant 0 : index
      %c3 = arith.constant 3 : index
      %c0_105 = arith.constant 0 : index
      %c0_106 = arith.constant 0 : index
      %136 = vector.load %arg4[%c0_104, %c3, %c0_105, %c0_106] : memref<1x4x8x8xf32, #tpu.memory_space<vmem>>, vector<1x1x8x8xf32>
      %137 = vector.shape_cast %136 : vector<1x1x8x8xf32> to vector<8x8xf32>
      %c0_107 = arith.constant 0 : index
      %c3_108 = arith.constant 3 : index
      %c0_109 = arith.constant 0 : index
      %c0_110 = arith.constant 0 : index
      %138 = vector.load %arg5[%c0_107, %c3_108, %c0_109, %c0_110] : memref<1x4x8x8xf32, #tpu.memory_space<vmem>>, vector<1x1x8x8xf32>
      %139 = vector.shape_cast %138 : vector<1x1x8x8xf32> to vector<8x8xf32>
      %c0_111 = arith.constant 0 : index
      %c3_112 = arith.constant 3 : index
      %c0_113 = arith.constant 0 : index
      %c0_114 = arith.constant 0 : index
      %140 = vector.load %arg6[%c0_111, %c3_112, %c0_113, %c0_114] : memref<1x4x8x8xf32, #tpu.memory_space<vmem>>, vector<1x1x8x8xf32>
      %141 = vector.shape_cast %140 : vector<1x1x8x8xf32> to vector<8x8xf32>
      %cst_115 = arith.constant dense<0.000000e+00> : vector<8x8xf32>
      %142 = tpu.matmul %137, %139, %cst_115 {dimension_numbers = #tpu.dot_dimension_numbers<[1], [1], [0], [0], [0, 0, 1, 0], [], []>} : vector<8x8xf32>, vector<8x8xf32>, vector<8x8xf32> -> vector<8x8xf32>
      %cst_116 = arith.constant -1.000000e+30 : f32
      %143 = vector.broadcast %cst_116 : f32 to vector<8x8xf32>
      %144 = arith.select %15, %142, %143 : vector<8x8xi1>, vector<8x8xf32>
      %c3_117 = arith.constant 3 : index
      %c0_118 = arith.constant 0 : index
      %c0_119 = arith.constant 0 : index
      %145 = vector.load %arg8[%c3_117, %c0_118, %c0_119] : memref<4x8x1xf32, #tpu.memory_space<vmem>>, vector<1x8x1xf32>
      %146 = vector.shape_cast %145 : vector<1x8x1xf32> to vector<8x1xf32>
      %cst_120 = arith.constant dense<0xFF800000> : vector<8xf32>
      %147 = vector.multi_reduction <maximumf>, %144, %cst_120 [1] : vector<8x8xf32> to vector<8xf32>
      %148 = vector.shape_cast %147 : vector<8xf32> to vector<8x1xf32>
      %149 = arith.maximumf %146, %148 : vector<8x1xf32>
      %150 = arith.subf %146, %149 : vector<8x1xf32>
      %151 = math.exp %150 : vector<8x1xf32>
      %152 = vector.broadcast %149 : vector<8x1xf32> to vector<8x8xf32>
      %153 = arith.subf %144, %152 : vector<8x8xf32>
      %154 = math.exp %153 : vector<8x8xf32>
      %c3_121 = arith.constant 3 : index
      %c0_122 = arith.constant 0 : index
      %c0_123 = arith.constant 0 : index
      %155 = vector.load %arg9[%c3_121, %c0_122, %c0_123] : memref<4x8x1xf32, #tpu.memory_space<vmem>>, vector<1x8x1xf32>
      %156 = vector.shape_cast %155 : vector<1x8x1xf32> to vector<8x1xf32>
      %157 = arith.mulf %151, %156 : vector<8x1xf32>
      %cst_124 = arith.constant dense<0.000000e+00> : vector<8xf32>
      %158 = vector.multi_reduction <add>, %154, %cst_124 [1] : vector<8x8xf32> to vector<8xf32>
      %159 = vector.shape_cast %158 : vector<8xf32> to vector<8x1xf32>
      %160 = arith.addf %157, %159 : vector<8x1xf32>
      %c3_125 = arith.constant 3 : index
      %c0_126 = arith.constant 0 : index
      %c0_127 = arith.constant 0 : index
      %161 = vector.load %arg9[%c3_125, %c0_126, %c0_127] : memref<4x8x1xf32, #tpu.memory_space<vmem>>, vector<1x8x1xf32>
      %162 = vector.shape_cast %161 : vector<1x8x1xf32> to vector<8x1xf32>
      %163 = vector.shape_cast %160 : vector<8x1xf32> to vector<1x8x1xf32>
      tpu.vector_store %arg9[%c3_125, %c0_126, %c0_127], %163 {strides = array<i32>} : memref<4x8x1xf32, #tpu.memory_space<vmem>>, vector<1x8x1xf32>,
      %c3_128 = arith.constant 3 : index
      %c0_129 = arith.constant 0 : index
      %c0_130 = arith.constant 0 : index
      %164 = vector.load %arg10[%c3_128, %c0_129, %c0_130] : memref<4x8x8xf32, #tpu.memory_space<vmem>>, vector<1x8x8xf32>
      %165 = vector.shape_cast %164 : vector<1x8x8xf32> to vector<8x8xf32>
      %166 = vector.broadcast %151 : vector<8x1xf32> to vector<8x8xf32>
      %167 = arith.mulf %166, %165 : vector<8x8xf32>
      %cst_131 = arith.constant dense<0.000000e+00> : vector<8x8xf32>
      %168 = tpu.matmul %154, %141, %cst_131 {dimension_numbers = #tpu.dot_dimension_numbers<[1], [0], [0], [1], [0, 0, 1, 1], [], []>} : vector<8x8xf32>, vector<8x8xf32>, vector<8x8xf32> -> vector<8x8xf32>
      %169 = arith.addf %167, %168 : vector<8x8xf32>
      %c3_132 = arith.constant 3 : index
      %c0_133 = arith.constant 0 : index
      %c0_134 = arith.constant 0 : index
      %170 = vector.load %arg10[%c3_132, %c0_133, %c0_134] : memref<4x8x8xf32, #tpu.memory_space<vmem>>, vector<1x8x8xf32>
      %171 = vector.shape_cast %170 : vector<1x8x8xf32> to vector<8x8xf32>
      %172 = vector.shape_cast %169 : vector<8x8xf32> to vector<1x8x8xf32>
      tpu.vector_store %arg10[%c3_132, %c0_133, %c0_134], %172 {strides = array<i32>} : memref<4x8x8xf32, #tpu.memory_space<vmem>>, vector<1x8x8xf32>,
      %c3_135 = arith.constant 3 : index
      %c0_136 = arith.constant 0 : index
      %c0_137 = arith.constant 0 : index
      %173 = vector.load %arg8[%c3_135, %c0_136, %c0_137] : memref<4x8x1xf32, #tpu.memory_space<vmem>>, vector<1x8x1xf32>
      %174 = vector.shape_cast %173 : vector<1x8x1xf32> to vector<8x1xf32>
      %175 = vector.shape_cast %149 : vector<8x1xf32> to vector<1x8x1xf32>
      tpu.vector_store %arg8[%c3_135, %c0_136, %c0_137], %175 {strides = array<i32>} : memref<4x8x1xf32, #tpu.memory_space<vmem>>, vector<1x8x1xf32>,
      %c0_138 = arith.constant 0 : index
      %c0_139 = arith.constant 0 : index
      %c0_140 = arith.constant 0 : index
      %176 = vector.load %arg9[%c0_138, %c0_139, %c0_140] : memref<4x8x1xf32, #tpu.memory_space<vmem>>, vector<1x8x1xf32>
      %177 = vector.shape_cast %176 : vector<1x8x1xf32> to vector<8x1xf32>
      %cst_141 = arith.constant 1.000000e+00 : f32
      %178 = vector.broadcast %cst_141 : f32 to vector<8x1xf32>
      %179 = arith.divf %178, %177 : vector<8x1xf32>
      %c0_142 = arith.constant 0 : index
      %c0_143 = arith.constant 0 : index
      %c0_144 = arith.constant 0 : index
      %180 = vector.load %arg10[%c0_142, %c0_143, %c0_144] : memref<4x8x8xf32, #tpu.memory_space<vmem>>, vector<1x8x8xf32>
      %181 = vector.shape_cast %180 : vector<1x8x8xf32> to vector<8x8xf32>
      %182 = vector.broadcast %179 : vector<8x1xf32> to vector<8x8xf32>
      %183 = arith.mulf %181, %182 : vector<8x8xf32>
      %c1_145 = arith.constant 1 : index
      %c0_146 = arith.constant 0 : index
      %c0_147 = arith.constant 0 : index
      %184 = vector.load %arg9[%c1_145, %c0_146, %c0_147] : memref<4x8x1xf32, #tpu.memory_space<vmem>>, vector<1x8x1xf32>
      %185 = vector.shape_cast %184 : vector<1x8x1xf32> to vector<8x1xf32>
      %cst_148 = arith.constant 1.000000e+00 : f32
      %186 = vector.broadcast %cst_148 : f32 to vector<8x1xf32>
      %187 = arith.divf %186, %185 : vector<8x1xf32>
      %c1_149 = arith.constant 1 : index
      %c0_150 = arith.constant 0 : index
      %c0_151 = arith.constant 0 : index
      %188 = vector.load %arg10[%c1_149, %c0_150, %c0_151] : memref<4x8x8xf32, #tpu.memory_space<vmem>>, vector<1x8x8xf32>
      %189 = vector.shape_cast %188 : vector<1x8x8xf32> to vector<8x8xf32>
      %190 = vector.broadcast %187 : vector<8x1xf32> to vector<8x8xf32>
      %191 = arith.mulf %189, %190 : vector<8x8xf32>
      %c2_152 = arith.constant 2 : index
      %c0_153 = arith.constant 0 : index
      %c0_154 = arith.constant 0 : index
      %192 = vector.load %arg9[%c2_152, %c0_153, %c0_154] : memref<4x8x1xf32, #tpu.memory_space<vmem>>, vector<1x8x1xf32>
      %193 = vector.shape_cast %192 : vector<1x8x1xf32> to vector<8x1xf32>
      %cst_155 = arith.constant 1.000000e+00 : f32
      %194 = vector.broadcast %cst_155 : f32 to vector<8x1xf32>
      %195 = arith.divf %194, %193 : vector<8x1xf32>
      %c2_156 = arith.constant 2 : index
      %c0_157 = arith.constant 0 : index
      %c0_158 = arith.constant 0 : index
      %196 = vector.load %arg10[%c2_156, %c0_157, %c0_158] : memref<4x8x8xf32, #tpu.memory_space<vmem>>, vector<1x8x8xf32>
      %197 = vector.shape_cast %196 : vector<1x8x8xf32> to vector<8x8xf32>
      %198 = vector.broadcast %195 : vector<8x1xf32> to vector<8x8xf32>
      %199 = arith.mulf %197, %198 : vector<8x8xf32>
      %c3_159 = arith.constant 3 : index
      %c0_160 = arith.constant 0 : index
      %c0_161 = arith.constant 0 : index
      %200 = vector.load %arg9[%c3_159, %c0_160, %c0_161] : memref<4x8x1xf32, #tpu.memory_space<vmem>>, vector<1x8x1xf32>
      %201 = vector.shape_cast %200 : vector<1x8x1xf32> to vector<8x1xf32>
      %cst_162 = arith.constant 1.000000e+00 : f32
      %202 = vector.broadcast %cst_162 : f32 to vector<8x1xf32>
      %203 = arith.divf %202, %201 : vector<8x1xf32>
      %c3_163 = arith.constant 3 : index
      %c0_164 = arith.constant 0 : index
      %c0_165 = arith.constant 0 : index
      %204 = vector.load %arg10[%c3_163, %c0_164, %c0_165] : memref<4x8x8xf32, #tpu.memory_space<vmem>>, vector<1x8x8xf32>
      %205 = vector.shape_cast %204 : vector<1x8x8xf32> to vector<8x8xf32>
      %206 = vector.broadcast %203 : vector<8x1xf32> to vector<8x8xf32>
      %207 = arith.mulf %205, %206 : vector<8x8xf32>
      %208 = tpu.concatenate %183, %191, %199, %207 in 1 : vector<8x8xf32>, vector<8x8xf32>, vector<8x8xf32>, vector<8x8xf32> -> vector<8x32xf32>
      %c0_166 = arith.constant 0 : index
      %c0_167 = arith.constant 0 : index
      %c0_168 = arith.constant 0 : index
      %209 = vector.load %arg7[%c0_166, %c0_167, %c0_168] : memref<1x8x32xf32, #tpu.memory_space<vmem>>, vector<1x8x32xf32>
      %210 = vector.shape_cast %209 : vector<1x8x32xf32> to vector<8x32xf32>
      %211 = vector.shape_cast %208 : vector<8x32xf32> to vector<1x8x32xf32>
      tpu.vector_store %arg7[%c0_166, %c0_167, %c0_168], %211 {strides = array<i32>} : memref<1x8x32xf32, #tpu.memory_space<vmem>>, vector<1x8x32xf32>,
    } else {
    }
    return
  }
  func.func @transform_0(%arg0: i32, %arg1: i32, %arg2: memref<1xi32, #tpu.memory_space<smem>>, %arg3: memref<1xi32, #tpu.memory_space<smem>>) -> (i32, i32, i32, i32) {
    %0 = arith.index_cast %arg1 : i32 to index
    %1 = memref.load %arg2[%0] : memref<1xi32, #tpu.memory_space<smem>>
    %c0_i32 = arith.constant 0 : i32
    %c0_i32_0 = arith.constant 0 : i32
    %c0_i32_1 = arith.constant 0 : i32
    return %arg0, %c0_i32, %1, %c0_i32_0 : i32, i32, i32, i32
  }
  func.func @transform_1(%arg0: i32, %arg1: i32, %arg2: memref<1xi32, #tpu.memory_space<smem>>, %arg3: memref<1xi32, #tpu.memory_space<smem>>) -> (i32, i32, i32, i32) {
    %0 = arith.index_cast %arg1 : i32 to index
    %1 = memref.load %arg3[%0] : memref<1xi32, #tpu.memory_space<smem>>
    %c0_i32 = arith.constant 0 : i32
    %c0_i32_0 = arith.constant 0 : i32
    %c0_i32_1 = arith.constant 0 : i32
    return %arg0, %c0_i32, %1, %c0_i32_0 : i32, i32, i32, i32
  }
  func.func @transform_2(%arg0: i32, %arg1: i32, %arg2: memref<1xi32, #tpu.memory_space<smem>>, %arg3: memref<1xi32, #tpu.memory_space<smem>>) -> (i32, i32, i32, i32) {
    %0 = arith.index_cast %arg1 : i32 to index
    %1 = memref.load %arg3[%0] : memref<1xi32, #tpu.memory_space<smem>>
    %c0_i32 = arith.constant 0 : i32
    %c0_i32_0 = arith.constant 0 : i32
    %c0_i32_1 = arith.constant 0 : i32
    return %arg0, %c0_i32, %1, %c0_i32_0 : i32, i32, i32, i32
  }
  func.func @transform_3(%arg0: i32, %arg1: i32, %arg2: memref<1xi32, #tpu.memory_space<smem>>, %arg3: memref<1xi32, #tpu.memory_space<smem>>) -> (i32, i32, i32) {
    %0 = arith.index_cast %arg1 : i32 to index
    %1 = memref.load %arg2[%0] : memref<1xi32, #tpu.memory_space<smem>>
    %c0_i32 = arith.constant 0 : i32
    %c0_i32_0 = arith.constant 0 : i32
    return %arg0, %1, %c0_i32 : i32, i32, i32
  }
}

</mosaic_0001>

<llo_original>
// kernel: causal_self_attention.5
$region0: #{causal_self_attention.5}
  #allocation0 [shape = 'u32[]', space=smem, size = 0x4, offset = 0x4, fixed_abs, tag = 'smem constant byte address 0x4 - core index']
  #allocation1 [shape = 'u32[144,128]{1,0:T(1,128)}', space=vmem, size = 0x12000, scoped, tag = 'internal scratch']
  #allocation2 [shape = 'f32[16,32]{1,0:T(8,128)}', space=vmem, size = 0x2000, scoped, tag = 'scratch operand']
  %s0 = inlined_call_operand.vmem [shape: f32[16,32], index: 0, kind: input, shape index: {}]
  %s1 = inlined_call_operand.vmem [shape: f32[32,32], index: 1, kind: input, shape index: {}]
  %s2 = inlined_call_operand.vmem [shape: f32[1,32], index: 2, kind: input, shape index: {}]
  %s3 = inlined_call_operand.hbm [shape: f32[16,32], index: 3, kind: output, shape index: {}]
  %s4 = sld [smem:[#allocation0]]
  $region30: #{causal_self_attention.5} parent=0
    _
  %s6 = ssub.s32 1, %s4
  %s7 = scalar_select 0, %s6, %s4
  $region1: #{causal_self_attention.5} parent=0
    #allocation3 [shape = 'u8[8192]{0}', space=vmem, size = 0x2000, scoped, tag = 'output window, operand 0, single buffered']
    #allocation4 [shape = 's32[1]{0}', space=sflag, size = 0x4, scoped, tag = 'scoped memory for causal_self_attention.5']
    %8 = vsyncpa [#allocation4], 0
    // Predicated region
    $region2: #{causal_self_attention.5} parent=1 // pred_check
      _
    $region3: #{causal_self_attention.5} parent=1 // pred_check_branch
      %10 = sbr.rel (0) target = $region5
    $region4: #{causal_self_attention.5} parent=1 // pred_region
      _
    $region5: #{causal_self_attention.5} parent=1 // pred_fallthru
      _
    // Predicated region
    $region6: #{causal_self_attention.5} parent=1 // pred_check
      _
    $region7: #{causal_self_attention.5} parent=1 // pred_check_branch
      %12 = sbr.rel (0) target = $region9
    $region8: #{causal_self_attention.5} parent=1 // pred_region
      _
    $region9: #{causal_self_attention.5} parent=1 // pred_fallthru
      _
    // Predicated region
    $region10: #{causal_self_attention.5} parent=1 // pred_check
      _
    $region11: #{causal_self_attention.5} parent=1 // pred_check_branch
      %14 = sbr.rel (0) target = $region13
    $region12: #{causal_self_attention.5} parent=1 // pred_region
      _
    $region13: #{causal_self_attention.5} parent=1 // pred_fallthru
      _
    %p15 = scmp.eq.s32.totalorder 0, 0
    // Predicated region
    $region14: #{causal_self_attention.5} parent=1 // pred_check
      %p16 = pneg %p15
    $region15: #{causal_self_attention.5} parent=1 // pred_check_branch
      %18 = sbr.rel (%p16) target = $region17
    $region16: #{causal_self_attention.5} parent=1 // pred_region
      %vm19 = vcmask 261120
      %20 = vst.msk [vmem:[#allocation2] sm:$0xff] %vm19, 0.0
      %21 = vst.msk [vmem:[#allocation2 + $0x8] sm:$0xff] %vm19, 0.0
    $region17: #{causal_self_attention.5} parent=1 // pred_fallthru
      _
    %v22 = vld [vmem:[#allocation2] sm:$0xff]
    %v23 = vld [vmem:[#allocation2 + $0x8] sm:$0xff]
    %v24 = vld [vmem:[%s0] sm:$0xff]
    %v25 = vld [vmem:[%s0 + $0x8] sm:$0xff]
    %v26 = vld [vmem:[%s1] sm:$0xff]
    %v27 = vld [vmem:[%s1 + $0x8] sm:$0xff]
    %v28 = vld [vmem:[%s1 + $0x10] sm:$0xff]
    %v29 = vld [vmem:[%s1 + $0x18] sm:$0xff]
    %vm30 = vcmask 261120
    %v32 = vsel %vm30, %v24, 0
    %v35 = vsel %vm30, %v25, 0
    %37 = vmatprep.subr.mxu0 0.0
    %38 = vmatpush1.msra.mxu0 %v26
    %39 = vmatprep.subr.mxu0 0.0
    %40 = vmatpush1.msra.mxu0 %v27
    %41 = vmatprep.subr.mxu0 0.0
    %42 = vmatpush1.msra.mxu0 %v28
    %43 = vmatprep.subr.mxu0 0.0
    %44 = vmatpush1.msra.mxu0 %v29
    %45 = vmatprep.subr.mxu0 0.0
    %46 = vmatpush1.msra.mxu0 0.0
    %47 = vmatprep.subr.mxu0 0.0
    %48 = vmatpush1.msra.mxu0 0.0
    %49 = vmatprep.subr.mxu0 0.0
    %50 = vmatpush1.msra.mxu0 0.0
    %51 = vmatprep.subr.mxu0 0.0
    %52 = vmatpush1.msra.mxu0 0.0
    %53 = vmatprep.subr.mxu0 0.0
    %54 = vmatpush1.msra.mxu0 0.0
    %55 = vmatprep.subr.mxu0 0.0
    %56 = vmatpush1.msra.mxu0 0.0
    %57 = vmatprep.subr.mxu0 0.0
    %58 = vmatpush1.msra.mxu0 0.0
    %59 = vmatprep.subr.mxu0 0.0
    %60 = vmatpush1.msra.mxu0 0.0
    %61 = vmatprep.subr.mxu0 0.0
    %62 = vmatpush1.msra.mxu0 0.0
    %63 = vmatprep.subr.mxu0 0.0
    %64 = vmatpush1.msra.mxu0 0.0
    %65 = vmatprep.subr.mxu0 0.0
    %66 = vmatpush1.msra.mxu0 0.0
    %67 = vmatprep.subr.mxu0 0.0
    %68 = vmatpush1.msra.mxu0 0.0
    %69 = vmatprep.subr.mxu0 0.0
    %70 = vmatpush1.msra.mxu0 0.0
    %71 = vmatprep.subr.mxu0 0.0
    %72 = vmatpush1.msra.mxu0 0.0
    %73 = vmatprep.subr.mxu0 0.0
    %74 = vmatpush1.msra.mxu0 0.0
    %75 = vmatprep.subr.mxu0 0.0
    %76 = vmatpush1.msra.mxu0 0.0
    %77 = vmatprep.subr.mxu0 0.0
    %78 = vmatpush1.msra.mxu0 0.0
    %79 = vmatprep.subr.mxu0 0.0
    %80 = vmatpush1.msra.mxu0 0.0
    %81 = vmatprep.subr.mxu0 0.0
    %82 = vmatpush1.msra.mxu0 0.0
    %83 = vmatprep.subr.mxu0 0.0
    %84 = vmatpush1.msra.mxu0 0.0
    %85 = vmatprep.subr.mxu0 0.0
    %86 = vmatpush1.msra.mxu0 0.0
    %87 = vmatprep.subr.mxu0 0.0
    %88 = vmatpush1.msra.mxu0 0.0
    %89 = vmatprep.subr.mxu0 0.0
    %90 = vmatpush1.msra.mxu0 0.0
    %91 = vmatprep.subr.mxu0 0.0
    %92 = vmatpush1.msra.mxu0 0.0
    %93 = vmatprep.subr.mxu0 0.0
    %94 = vmatpush1.msra.mxu0 0.0
    %95 = vmatprep.subr.mxu0 0.0
    %96 = vmatpush1.msra.mxu0 0.0
    %97 = vmatprep.subr.mxu0 0.0
    %98 = vmatpush1.msra.mxu0 0.0
    %99 = vmatprep.subr.mxu0 0.0
    %100 = vmatpush1.msra.mxu0 0.0
    %101 = vmatprep.mubr.f32.mxu0 0.0
    %102 = vmatmul.mubr.f32.gmra.mrb[0].mxu0 %v32
    %v103 = vpop.f32.mrb[0].mxu0
    %v104 = vadd.f32 0.0, %v103
    %v105 = vpop.f32.mrb[0].mxu0
    %106 = vmatprep.mubr.f32.mxu0 0.0
    %107 = vmatmul.mubr.f32.gmra.mrb[0].mxu0 %v35
    %v108 = vpop.f32.mrb[0].mxu0
    %v109 = vadd.f32 0.0, %v108
    %v110 = vpop.f32.mrb[0].mxu0
    %111 = vdwg.mxu0
    %v112 = vadd.f32 %v22, %v104
    %v113 = vadd.f32 %v23, %v109
    %114 = vst.msk [vmem:[#allocation2] sm:$0xff] %vm30, %v112
    %115 = vst.msk [vmem:[#allocation2 + $0x8] sm:$0xff] %vm30, %v113
    // Predicated region
    $region18: #{causal_self_attention.5} parent=1 // pred_check
      %p116 = pneg %p15
    $region19: #{causal_self_attention.5} parent=1 // pred_check_branch
      %118 = sbr.rel (%p116) target = $region21
    $region20: #{causal_self_attention.5} parent=1 // pred_region
      %v119 = vld [vmem:[#allocation2] sm:$0xff]
      %v120 = vld [vmem:[#allocation2 + $0x8] sm:$0xff]
      %v121 = vld [vmem:[%s2] sm:$0x1]
      %v123 = vlaneseq
      %v124 = vshrl.u32 %v123, 7
      %v125 = vsub.s32 0, %v124
      %v126 = vrot.slane %v121, %v125
      %v128 = vadd.f32 %v119, %v126
      %v129 = vadd.f32 %v120, %v126
      %130 = vst.msk [vmem:[#allocation3] sm:$0xff] %vm30, %v128
      %131 = vst.msk [vmem:[#allocation3 + $0x8] sm:$0xff] %vm30, %v129
    $region21: #{causal_self_attention.5} parent=1 // pred_fallthru
      _
    // Predicated region
    $region22: #{causal_self_attention.5} parent=1 // pred_check
      _
    $region23: #{causal_self_attention.5} parent=1 // pred_check_branch
      %133 = sbr.rel (0) target = $region25
    $region24: #{causal_self_attention.5} parent=1 // pred_region
      %s135 = ssub.s32 256, 256
      %136 = vsyncadd [#allocation4], %s135
      %s137 = sshll.u32 [#allocation3], 4
      %s138 = int_to_ptr.vmem [resolvable:$true] %s137
      %143 = dma.vmem_to_hbm [thread:$0]  %s138, 256, %s3, [#allocation4], 128, 128, 8
    $region25: #{causal_self_attention.5} parent=1 // pred_fallthru
      _
    // Predicated region
    $region26: #{causal_self_attention.5} parent=1 // pred_check
      _
    $region27: #{causal_self_attention.5} parent=1 // pred_check_branch
      %145 = sbr.rel (0) target = $region29
    $region28: #{causal_self_attention.5} parent=1 // pred_region
      %146 = dma.done [#allocation4], 256
    $region29: #{causal_self_attention.5} parent=1 // pred_fallthru
      _
    %147 = vsyncpa [#allocation4], 1

// kernel: causal_self_attention.3
$region0: #{causal_self_attention.3}
  #allocation0 [shape = 'u32[]', space=smem, size = 0x4, offset = 0x4, fixed_abs, tag = 'smem constant byte address 0x4 - core index']
  #allocation1 [shape = 'u32[144,128]{1,0:T(1,128)}', space=vmem, size = 0x12000, scoped, tag = 'internal scratch']
  #allocation2 [shape = 'f32[16,96]{1,0:T(8,128)}', space=vmem, size = 0x2000, scoped, tag = 'scratch operand']
  %s0 = inlined_call_operand.hbm [shape: f32[16,32], index: 0, kind: input, shape index: {}]
  %s1 = inlined_call_operand.hbm [shape: f32[32,96], index: 1, kind: input, shape index: {}]
  %s2 = inlined_call_operand.vmem [shape: f32[1,96], index: 2, kind: input, shape index: {}]
  %s3 = inlined_call_operand.vmem [shape: f32[16,96], index: 3, kind: output, shape index: {}]
  %s4 = sld [smem:[#allocation0]]
  $region38: #{causal_self_attention.3} parent=0
    _
  %s6 = ssub.s32 1, %s4
  %s7 = scalar_select 0, %s6, %s4
  $region1: #{causal_self_attention.3} parent=0
    #allocation3 [shape = 'u8[8192]{0}', space=vmem, size = 0x2000, scoped, tag = 'input window, operand 0, single buffered']
    #allocation4 [shape = 's32[1]{0}', space=sflag, size = 0x4, scoped, tag = 'scoped memory for causal_self_attention.3']
    #allocation5 [shape = 'u8[16384]{0}', space=vmem, size = 0x4000, scoped, tag = 'input window, operand 1, single buffered']
    #allocation6 [shape = 's32[1]{0}', space=sflag, size = 0x4, scoped, tag = 'scoped memory for causal_self_attention.3']
    %8 = vsyncpa [#allocation4], 0
    %9 = vsyncpa [#allocation6], 0
    // Predicated region
    $region2: #{causal_self_attention.3} parent=1 // pred_check
      _
    $region3: #{causal_self_attention.3} parent=1 // pred_check_branch
      %11 = sbr.rel (0) target = $region5
    $region4: #{causal_self_attention.3} parent=1 // pred_region
      %s13 = ssub.s32 256, 256
      %14 = vsyncadd [#allocation4], %s13
      %s15 = sshll.u32 [#allocation3], 4
      %s16 = int_to_ptr.vmem [resolvable:$true] %s15
      %21 = dma.hbm_to_vmem [thread:$0]  %s0, 256, %s16, [#allocation4], 128, 128, 8
    $region5: #{causal_self_attention.3} parent=1 // pred_fallthru
      _
    // Predicated region
    $region6: #{causal_self_attention.3} parent=1 // pred_check
      _
    $region7: #{causal_self_attention.3} parent=1 // pred_check_branch
      %23 = sbr.rel (0) target = $region9
    $region8: #{causal_self_attention.3} parent=1 // pred_region
      %s25 = ssub.s32 512, 512
      %26 = vsyncadd [#allocation6], %s25
      %s27 = sshll.u32 [#allocation5], 4
      %s28 = int_to_ptr.vmem [resolvable:$true] %s27
      %33 = dma.hbm_to_vmem [thread:$0]  %s1, 512, %s28, [#allocation6], 128, 128, 8
    $region9: #{causal_self_attention.3} parent=1 // pred_fallthru
      _
    // Predicated region
    $region10: #{causal_self_attention.3} parent=1 // pred_check
      _
    $region11: #{causal_self_attention.3} parent=1 // pred_check_branch
      %35 = sbr.rel (0) target = $region13
    $region12: #{causal_self_attention.3} parent=1 // pred_region
      _
    $region13: #{causal_self_attention.3} parent=1 // pred_fallthru
      _
    // Predicated region
    $region14: #{causal_self_attention.3} parent=1 // pred_check
      _
    $region15: #{causal_self_attention.3} parent=1 // pred_check_branch
      %37 = sbr.rel (0) target = $region17
    $region16: #{causal_self_attention.3} parent=1 // pred_region
      %38 = dma.done [#allocation4], 256
    $region17: #{causal_self_attention.3} parent=1 // pred_fallthru
      _
    // Predicated region
    $region18: #{causal_self_attention.3} parent=1 // pred_check
      _
    $region19: #{causal_self_attention.3} parent=1 // pred_check_branch
      %40 = sbr.rel (0) target = $region21
    $region20: #{causal_self_attention.3} parent=1 // pred_region
      %41 = dma.done [#allocation6], 512
    $region21: #{causal_self_attention.3} parent=1 // pred_fallthru
      _
    %p42 = scmp.eq.s32.totalorder 0, 0
    // Predicated region
    $region22: #{causal_self_attention.3} parent=1 // pred_check
      %p43 = pneg %p42
    $region23: #{causal_self_attention.3} parent=1 // pred_check_branch
      %45 = sbr.rel (%p43) target = $region25
    $region24: #{causal_self_attention.3} parent=1 // pred_region
      %vm46 = vcmask 785408
      %47 = vst.msk [vmem:[#allocation2] sm:$0xff] %vm46, 0.0
      %48 = vst.msk [vmem:[#allocation2 + $0x8] sm:$0xff] %vm46, 0.0
    $region25: #{causal_self_attention.3} parent=1 // pred_fallthru
      _
    %v49 = vld [vmem:[#allocation2] sm:$0xff]
    %v50 = vld [vmem:[#allocation2 + $0x8] sm:$0xff]
    %v51 = vld [vmem:[#allocation3] sm:$0xff]
    %v52 = vld [vmem:[#allocation3 + $0x8] sm:$0xff]
    %v53 = vld [vmem:[#allocation5] sm:$0xff]
    %v54 = vld [vmem:[#allocation5 + $0x8] sm:$0xff]
    %v55 = vld [vmem:[#allocation5 + $0x10] sm:$0xff]
    %v56 = vld [vmem:[#allocation5 + $0x18] sm:$0xff]
    %vm57 = vcmask 261120
    %v59 = vsel %vm57, %v51, 0
    %v62 = vsel %vm57, %v52, 0
    %64 = vmatprep.subr.mxu0 0.0
    %65 = vmatpush1.msra.mxu0 %v53
    %66 = vmatprep.subr.mxu0 0.0
    %67 = vmatpush1.msra.mxu0 %v54
    %68 = vmatprep.subr.mxu0 0.0
    %69 = vmatpush1.msra.mxu0 %v55
    %70 = vmatprep.subr.mxu0 0.0
    %71 = vmatpush1.msra.mxu0 %v56
    %72 = vmatprep.subr.mxu0 0.0
    %73 = vmatpush1.msra.mxu0 0.0
    %74 = vmatprep.subr.mxu0 0.0
    %75 = vmatpush1.msra.mxu0 0.0
    %76 = vmatprep.subr.mxu0 0.0
    %77 = vmatpush1.msra.mxu0 0.0
    %78 = vmatprep.subr.mxu0 0.0
    %79 = vmatpush1.msra.mxu0 0.0
    %80 = vmatprep.subr.mxu0 0.0
    %81 = vmatpush1.msra.mxu0 0.0
    %82 = vmatprep.subr.mxu0 0.0
    %83 = vmatpush1.msra.mxu0 0.0
    %84 = vmatprep.subr.mxu0 0.0
    %85 = vmatpush1.msra.mxu0 0.0
    %86 = vmatprep.subr.mxu0 0.0
    %87 = vmatpush1.msra.mxu0 0.0
    %88 = vmatprep.subr.mxu0 0.0
    %89 = vmatpush1.msra.mxu0 0.0
    %90 = vmatprep.subr.mxu0 0.0
    %91 = vmatpush1.msra.mxu0 0.0
    %92 = vmatprep.subr.mxu0 0.0
    %93 = vmatpush1.msra.mxu0 0.0
    %94 = vmatprep.subr.mxu0 0.0
    %95 = vmatpush1.msra.mxu0 0.0
    %96 = vmatprep.subr.mxu0 0.0
    %97 = vmatpush1.msra.mxu0 0.0
    %98 = vmatprep.subr.mxu0 0.0
    %99 = vmatpush1.msra.mxu0 0.0
    %100 = vmatprep.subr.mxu0 0.0
    %101 = vmatpush1.msra.mxu0 0.0
    %102 = vmatprep.subr.mxu0 0.0
    %103 = vmatpush1.msra.mxu0 0.0
    %104 = vmatprep.subr.mxu0 0.0
    %105 = vmatpush1.msra.mxu0 0.0
    %106 = vmatprep.subr.mxu0 0.0
    %107 = vmatpush1.msra.mxu0 0.0
    %108 = vmatprep.subr.mxu0 0.0
    %109 = vmatpush1.msra.mxu0 0.0
    %110 = vmatprep.subr.mxu0 0.0
    %111 = vmatpush1.msra.mxu0 0.0
    %112 = vmatprep.subr.mxu0 0.0
    %113 = vmatpush1.msra.mxu0 0.0
    %114 = vmatprep.subr.mxu0 0.0
    %115 = vmatpush1.msra.mxu0 0.0
    %116 = vmatprep.subr.mxu0 0.0
    %117 = vmatpush1.msra.mxu0 0.0
    %118 = vmatprep.subr.mxu0 0.0
    %119 = vmatpush1.msra.mxu0 0.0
    %120 = vmatprep.subr.mxu0 0.0
    %121 = vmatpush1.msra.mxu0 0.0
    %122 = vmatprep.subr.mxu0 0.0
    %123 = vmatpush1.msra.mxu0 0.0
    %124 = vmatprep.subr.mxu0 0.0
    %125 = vmatpush1.msra.mxu0 0.0
    %126 = vmatprep.subr.mxu0 0.0
    %127 = vmatpush1.msra.mxu0 0.0
    %128 = vmatprep.mubr.f32.mxu0 0.0
    %129 = vmatmul.mubr.f32.gmra.mrb[0].mxu0 %v59
    %v130 = vpop.f32.mrb[0].mxu0
    %v131 = vadd.f32 0.0, %v130
    %v132 = vpop.f32.mrb[0].mxu0
    %133 = vmatprep.mubr.f32.mxu0 0.0
    %134 = vmatmul.mubr.f32.gmra.mrb[0].mxu0 %v62
    %v135 = vpop.f32.mrb[0].mxu0
    %v136 = vadd.f32 0.0, %v135
    %v137 = vpop.f32.mrb[0].mxu0
    %138 = vdwg.mxu0
    %v139 = vadd.f32 %v49, %v131
    %v140 = vadd.f32 %v50, %v136
    %vm141 = vcmask 785408
    %142 = vst.msk [vmem:[#allocation2] sm:$0xff] %vm141, %v139
    %143 = vst.msk [vmem:[#allocation2 + $0x8] sm:$0xff] %vm141, %v140
    // Predicated region
    $region26: #{causal_self_attention.3} parent=1 // pred_check
      %p144 = pneg %p42
    $region27: #{causal_self_attention.3} parent=1 // pred_check_branch
      %146 = sbr.rel (%p144) target = $region29
    $region28: #{causal_self_attention.3} parent=1 // pred_region
      %v147 = vld [vmem:[#allocation2] sm:$0xff]
      %v148 = vld [vmem:[#allocation2 + $0x8] sm:$0xff]
      %v149 = vld [vmem:[%s2] sm:$0x1]
      %v151 = vlaneseq
      %v152 = vshrl.u32 %v151, 7
      %v153 = vsub.s32 0, %v152
      %v154 = vrot.slane %v149, %v153
      %v156 = vadd.f32 %v147, %v154
      %v157 = vadd.f32 %v148, %v154
      %158 = vst.msk [vmem:[%s3] sm:$0xff] %vm141, %v156
      %159 = vst.msk [vmem:[%s3 + $0x8] sm:$0xff] %vm141, %v157
    $region29: #{causal_self_attention.3} parent=1 // pred_fallthru
      _
    // Predicated region
    $region30: #{causal_self_attention.3} parent=1 // pred_check
      _
    $region31: #{causal_self_attention.3} parent=1 // pred_check_branch
      %161 = sbr.rel (0) target = $region33
    $region32: #{causal_self_attention.3} parent=1 // pred_region
      _
    $region33: #{causal_self_attention.3} parent=1 // pred_fallthru
      _
    // Predicated region
    $region34: #{causal_self_attention.3} parent=1 // pred_check
      _
    $region35: #{causal_self_attention.3} parent=1 // pred_check_branch
      %163 = sbr.rel (0) target = $region37
    $region36: #{causal_self_attention.3} parent=1 // pred_region
      _
    $region37: #{causal_self_attention.3} parent=1 // pred_fallthru
      _
    %164 = vsyncpa [#allocation4], 1
    %165 = vsyncpa [#allocation6], 1

// kernel: causal_self_attention.4
$region0: #{causal_self_attention.4}
  #allocation0 [shape = 'u32[]', space=smem, size = 0x4, offset = 0x4, fixed_abs, tag = 'smem constant byte address 0x4 - core index']
  #allocation1 [shape = 'u32[144,128]{1,0:T(1,128)}', space=vmem, size = 0x12000, scoped, tag = 'internal scratch']
  #allocation2 [shape = 'f32[4,8,1]{2,1,0:T(8,128)}', space=vmem, size = 0x4000, scoped, tag = 'scratch operand']
  #allocation3 [shape = 'f32[4,8,1]{2,1,0:T(8,128)}', space=vmem, size = 0x4000, scoped, tag = 'scratch operand']
  #allocation4 [shape = 'f32[4,8,8]{2,1,0:T(8,128)}', space=vmem, size = 0x4000, scoped, tag = 'scratch operand']
  #allocation5 [shape = 's32[1]{0}', space=sflag, size = 0x4, scoped, tag = 'scoped memory for causal_self_attention.4']
  #allocation6 [shape = 's32[1]{0:T(128)S(6)}', space=smem, size = 0x200, scoped, tag = 'prefetched SMEM operand 0']
  #allocation7 [shape = 's32[1]{0:T(128)S(6)}', space=smem, size = 0x200, scoped, tag = 'prefetched SMEM operand 1']
  %s0 = inlined_call_operand.<no memory space> [shape: s32[1], index: 0, kind: input, shape index: {}, may-alias: {0,1}]
  %s1 = inlined_call_operand.<no memory space> [shape: s32[1], index: 1, kind: input, shape index: {}, may-alias: {0,1}]
  %s2 = inlined_call_operand.vmem [shape: f32[2,4,8,8], index: 2, kind: input, shape index: {}]
  %s3 = inlined_call_operand.vmem [shape: f32[2,4,8,8], index: 3, kind: input, shape index: {}]
  %s4 = inlined_call_operand.vmem [shape: f32[2,4,8,8], index: 4, kind: input, shape index: {}]
  %s5 = inlined_call_operand.vmem [shape: f32[2,8,32], index: 5, kind: output, shape index: {}]
  %s6 = sld [smem:[#allocation0]]
  $region57: #{causal_self_attention.4} parent=0
    _
  %s8 = ssub.s32 1, %s6
  %s9 = scalar_select 0, %s8, %s6
  %10 = sst [smem:[#allocation6]] %s0
  %11 = sst [smem:[#allocation7]] %s1
  loop: start=0, step=1, limit=4
  $region2: #{causal_self_attention.4} parent=0 // loop_pre_header
    _
  $region3: #{causal_self_attention.4} parent=0 // loop_header
    %s13 = sphi 0, %s17
    %p14 = scmp.ge.s32.totalorder %s13, 4
    %s20 = sphi 0, %s32
    %s21 = sphi 0, %s28
    %s22 = sphi 0, %s20
    %s23 = sphi 0, %s21
    %s24 = sphi 0, %s22
    %s25 = sphi 0, %s23
    %s39 = sphi 0, %s41
    %s42 = sphi 0, %s39
    %s43 = sphi 0, %s42
    %s59 = sphi 0, %s43
    %s69 = sphi 0, %s71
    %s72 = sphi 0, %s69
    %s73 = sphi 0, %s72
    %s89 = sphi 0, %s73
    %s99 = sphi 0, %s101
    %s102 = sphi 0, %s99
    %s103 = sphi 0, %s102
    %s119 = sphi 0, %s103
    %s129 = sphi 0, %s131
    %s132 = sphi 0, %s129
    %s133 = sphi 0, %s132
    %s149 = sphi 0, %s133
  $region4: #{causal_self_attention.4} parent=0 // loop_header_branch
    %16 = sbr.rel (%p14) target = $region8
  $region5: #{causal_self_attention.4} parent=0 // loop_body
    %s18 = ssub.s32 %s13, 1
    %s19 = ssub.s32 %s13, 2
    %s26 = sadd.s32 1, %s21
    %p27 = scmp.ge.s32.totalorder %s26, 1
    %s28 = scalar_select %p27, 0, %s26
    %s29 = sadd.s32 1, %s20
    %s30 = scalar_select %p27, %s29, %s20
    %p31 = scmp.ge.s32.totalorder %s30, 2
    %s32 = scalar_select %p31, 0, %s30
    %s33 = sld [smem:[#allocation6 + %s21]]
    %s34 = sld [smem:[#allocation6 + %s28]]
    %s35 = ssub.s32 %s20, %s32
    %s36 = ssub.s32 %s33, %s34
    %s37 = sor.u32 %s35, %s36
    %p38 = scmp.eq.s32.totalorder %s37, 0
    %s40 = sadd.s32 %s39, 1
    %s41 = scalar_select %p38, %s39, %s40
    %p44 = pneg %p38
    %p45 = scmp.eq.s32.totalorder %s13, 1
    %p46 = por %p44, %p45
    %p47 = scmp.ne.s32.totalorder %s39, %s42
    %p48 = scmp.eq.s32.totalorder %s13, 0
    %p49 = por %p47, %p48
    %p50 = scmp.ne.s32.totalorder %s39, %s42
    %p51 = scmp.eq.s32.totalorder %s18, 1
    %p52 = por %p50, %p51
    %p53 = scmp.ne.s32.totalorder %s42, %s43
    %p54 = scmp.eq.s32.totalorder %s18, 0
    %p55 = por %p53, %p54
    %p56 = scmp.ne.s32.totalorder %s42, %s43
    %p57 = scmp.eq.s32.totalorder %s19, 1
    %p58 = por %p56, %p57
    %p60 = scmp.ne.s32.totalorder %s43, %s59
    %p61 = scmp.eq.s32.totalorder %s19, 0
    %p62 = por %p60, %p61
    %s63 = sld [smem:[#allocation7 + %s21]]
    %s64 = sld [smem:[#allocation7 + %s28]]
    %s65 = ssub.s32 %s20, %s32
    %s66 = ssub.s32 %s63, %s64
    %s67 = sor.u32 %s65, %s66
    %p68 = scmp.eq.s32.totalorder %s67, 0
    %s70 = sadd.s32 %s69, 1
    %s71 = scalar_select %p68, %s69, %s70
    %p74 = pneg %p68
    %p75 = scmp.eq.s32.totalorder %s13, 1
    %p76 = por %p74, %p75
    %p77 = scmp.ne.s32.totalorder %s69, %s72
    %p78 = scmp.eq.s32.totalorder %s13, 0
    %p79 = por %p77, %p78
    %p80 = scmp.ne.s32.totalorder %s69, %s72
    %p81 = scmp.eq.s32.totalorder %s18, 1
    %p82 = por %p80, %p81
    %p83 = scmp.ne.s32.totalorder %s72, %s73
    %p84 = scmp.eq.s32.totalorder %s18, 0
    %p85 = por %p83, %p84
    %p86 = scmp.ne.s32.totalorder %s72, %s73
    %p87 = scmp.eq.s32.totalorder %s19, 1
    %p88 = por %p86, %p87
    %p90 = scmp.ne.s32.totalorder %s73, %s89
    %p91 = scmp.eq.s32.totalorder %s19, 0
    %p92 = por %p90, %p91
    %s93 = sld [smem:[#allocation7 + %s21]]
    %s94 = sld [smem:[#allocation7 + %s28]]
    %s95 = ssub.s32 %s20, %s32
    %s96 = ssub.s32 %s93, %s94
    %s97 = sor.u32 %s95, %s96
    %p98 = scmp.eq.s32.totalorder %s97, 0
    %s100 = sadd.s32 %s99, 1
    %s101 = scalar_select %p98, %s99, %s100
    %p104 = pneg %p98
    %p105 = scmp.eq.s32.totalorder %s13, 1
    %p106 = por %p104, %p105
    %p107 = scmp.ne.s32.totalorder %s99, %s102
    %p108 = scmp.eq.s32.totalorder %s13, 0
    %p109 = por %p107, %p108
    %p110 = scmp.ne.s32.totalorder %s99, %s102
    %p111 = scmp.eq.s32.totalorder %s18, 1
    %p112 = por %p110, %p111
    %p113 = scmp.ne.s32.totalorder %s102, %s103
    %p114 = scmp.eq.s32.totalorder %s18, 0
    %p115 = por %p113, %p114
    %p116 = scmp.ne.s32.totalorder %s102, %s103
    %p117 = scmp.eq.s32.totalorder %s19, 1
    %p118 = por %p116, %p117
    %p120 = scmp.ne.s32.totalorder %s103, %s119
    %p121 = scmp.eq.s32.totalorder %s19, 0
    %p122 = por %p120, %p121
    %s123 = sld [smem:[#allocation6 + %s21]]
    %s124 = sld [smem:[#allocation6 + %s28]]
    %s125 = ssub.s32 %s20, %s32
    %s126 = ssub.s32 %s123, %s124
    %s127 = sor.u32 %s125, %s126
    %p128 = scmp.eq.s32.totalorder %s127, 0
    %s130 = sadd.s32 %s129, 1
    %s131 = scalar_select %p128, %s129, %s130
    %p134 = pneg %p128
    %p135 = scmp.eq.s32.totalorder %s13, 1
    %p136 = por %p134, %p135
    %p137 = scmp.ne.s32.totalorder %s129, %s132
    %p138 = scmp.eq.s32.totalorder %s13, 0
    %p139 = por %p137, %p138
    %p140 = scmp.ne.s32.totalorder %s129, %s132
    %p141 = scmp.eq.s32.totalorder %s18, 1
    %p142 = por %p140, %p141
    %p143 = scmp.ne.s32.totalorder %s132, %s133
    %p144 = scmp.eq.s32.totalorder %s18, 0
    %p145 = por %p143, %p144
    %p146 = scmp.ne.s32.totalorder %s132, %s133
    %p147 = scmp.eq.s32.totalorder %s19, 1
    %p148 = por %p146, %p147
    %p150 = scmp.ne.s32.totalorder %s133, %s149
    %p151 = scmp.eq.s32.totalorder %s19, 0
    %p152 = por %p150, %p151
    %p153 = scmp.le.s32.totalorder 1, %s13
    %p154 = scmp.lt.s32.totalorder %s13, 3
    %p155 = pnand %p153, %p154
    %p156 = pneg %p155
    // Predicated region
    $region9: #{causal_self_attention.4} parent=5 // pred_check
      _
    $region10: #{causal_self_attention.4} parent=5 // pred_check_branch
      %158 = sbr.rel (%p155) target = $region12
    $region11: #{causal_self_attention.4} parent=5 // pred_region
      %s159 = ssub.s32 %s13, 1
    $region12: #{causal_self_attention.4} parent=5 // pred_fallthru
      _
    %p160 = scmp.lt.s32.totalorder %s13, 2
    // Predicated region
    $region13: #{causal_self_attention.4} parent=5 // pred_check
      %p161 = pneg %p160
    $region14: #{causal_self_attention.4} parent=5 // pred_check_branch
      %163 = sbr.rel (%p161) target = $region16
    $region15: #{causal_self_attention.4} parent=5 // pred_region
      // Predicated region
      $region17: #{causal_self_attention.4} parent=15 // pred_check
        %p164 = pneg %p49
      $region18: #{causal_self_attention.4} parent=15 // pred_check_branch
        %166 = sbr.rel (%p164) target = $region20
      $region19: #{causal_self_attention.4} parent=15 // pred_region
        %s167 = sld [smem:[#allocation6 + %s21]]
        %p168 = scmp.lt.s32.totalorder %s20, 1
        %s169 = scalar_select %p168, %s20, 1
        %p170 = scmp.lt.s32.totalorder %s167, 0
        %s171 = scalar_select %p170, %s167, 0
        %s172 = smul.addr %s169, 4
        %s173 = sadd.s32 %s171, %s172
        %s174 = smul.addr %s173, 8
        %s175 = scalar_lea.vmem %s2, %s174
        %s176 = sld [smem:[#allocation6 + %s21]]
      $region20: #{causal_self_attention.4} parent=15 // pred_fallthru
        _
      // Predicated region
      $region21: #{causal_self_attention.4} parent=15 // pred_check
        %p177 = pneg %p79
      $region22: #{causal_self_attention.4} parent=15 // pred_check_branch
        %179 = sbr.rel (%p177) target = $region24
      $region23: #{causal_self_attention.4} parent=15 // pred_region
        %s180 = sld [smem:[#allocation7 + %s21]]
        %p181 = scmp.lt.s32.totalorder %s20, 1
        %s182 = scalar_select %p181, %s20, 1
        %p183 = scmp.lt.s32.totalorder %s180, 0
        %s184 = scalar_select %p183, %s180, 0
        %s185 = smul.addr %s182, 4
        %s186 = sadd.s32 %s184, %s185
        %s187 = smul.addr %s186, 8
        %s188 = scalar_lea.vmem %s3, %s187
        %s189 = sld [smem:[#allocation7 + %s21]]
      $region24: #{causal_self_attention.4} parent=15 // pred_fallthru
        _
      // Predicated region
      $region25: #{causal_self_attention.4} parent=15 // pred_check
        %p190 = pneg %p109
      $region26: #{causal_self_attention.4} parent=15 // pred_check_branch
        %192 = sbr.rel (%p190) target = $region28
      $region27: #{causal_self_attention.4} parent=15 // pred_region
        %s193 = sld [smem:[#allocation7 + %s21]]
        %p194 = scmp.lt.s32.totalorder %s20, 1
        %s195 = scalar_select %p194, %s20, 1
        %p196 = scmp.lt.s32.totalorder %s193, 0
        %s197 = scalar_select %p196, %s193, 0
        %s198 = smul.addr %s195, 4
        %s199 = sadd.s32 %s197, %s198
        %s200 = smul.addr %s199, 8
        %s201 = scalar_lea.vmem %s4, %s200
        %s202 = sld [smem:[#allocation7 + %s21]]
      $region28: #{causal_self_attention.4} parent=15 // pred_fallthru
        _
    $region16: #{causal_self_attention.4} parent=5 // pred_fallthru
      _
    %p203 = scmp.le.s32.totalorder 1, %s13
    %p204 = scmp.lt.s32.totalorder %s13, 3
    %p205 = pnand %p203, %p204
    %p206 = pneg %p205
    // Predicated region
    $region29: #{causal_self_attention.4} parent=5 // pred_check
      _
    $region30: #{causal_self_attention.4} parent=5 // pred_check_branch
      %208 = sbr.rel (%p205) target = $region32
    $region31: #{causal_self_attention.4} parent=5 // pred_region
      %s209 = ssub.s32 %s13, 1
      %s210 = sld [smem:[#allocation6 + %s23]]
      %p211 = scmp.lt.s32.totalorder %s22, 1
      %s212 = scalar_select %p211, %s22, 1
      %p213 = scmp.lt.s32.totalorder %s210, 0
      %s214 = scalar_select %p213, %s210, 0
      %s215 = smul.addr %s212, 4
      %s216 = sadd.s32 %s214, %s215
      %s217 = smul.addr %s216, 8
      %s218 = scalar_lea.vmem %s2, %s217
      %p219 = pneg %p55
      %p220 = pneg %p52
      %s221 = sld [smem:[#allocation7 + %s23]]
      %p222 = scmp.lt.s32.totalorder %s22, 1
      %s223 = scalar_select %p222, %s22, 1
      %p224 = scmp.lt.s32.totalorder %s221, 0
      %s225 = scalar_select %p224, %s221, 0
      %s226 = smul.addr %s223, 4
      %s227 = sadd.s32 %s225, %s226
      %s228 = smul.addr %s227, 8
      %s229 = scalar_lea.vmem %s3, %s228
      %p230 = pneg %p85
      %p231 = pneg %p82
      %s232 = sld [smem:[#allocation7 + %s23]]
      %p233 = scmp.lt.s32.totalorder %s22, 1
      %s234 = scalar_select %p233, %s22, 1
      %p235 = scmp.lt.s32.totalorder %s232, 0
      %s236 = scalar_select %p235, %s232, 0
      %s237 = smul.addr %s234, 4
      %s238 = sadd.s32 %s236, %s237
      %s239 = smul.addr %s238, 8
      %s240 = scalar_lea.vmem %s4, %s239
      %p241 = pneg %p115
      %p242 = pneg %p112
      %p243 = pneg %p145
      %p244 = pneg %p142
      %s245 = sld [smem:[#allocation6 + %s23]]
      %p246 = scmp.lt.s32.totalorder %s22, 1
      %s247 = scalar_select %p246, %s22, 1
      %p248 = scmp.lt.s32.totalorder %s245, 0
      %s249 = scalar_select %p248, %s245, 0
      %s250 = sadd.s32 %s249, %s247
      %s251 = smul.addr %s250, 8
      %s252 = scalar_lea.vmem %s5, %s251
      %s253 = sld [smem:[#allocation6 + %s23]]
      %p254 = scmp.lt.s32.totalorder %s22, 1
      %s255 = scalar_select %p254, %s22, 1
      %p256 = scmp.lt.s32.totalorder %s253, 0
      %s257 = scalar_select %p256, %s253, 0
      %s258 = smul.addr %s255, 4
      %s259 = sadd.s32 %s257, %s258
      %s260 = smul.addr %s259, 8
      %s261 = scalar_lea.vmem %s2, %s260
      %s262 = sld [smem:[#allocation6 + %s23]]
      %s263 = sld [smem:[#allocation7 + %s23]]
      %p264 = scmp.lt.s32.totalorder %s22, 1
      %s265 = scalar_select %p264, %s22, 1
      %p266 = scmp.lt.s32.totalorder %s263, 0
      %s267 = scalar_select %p266, %s263, 0
      %s268 = smul.addr %s265, 4
      %s269 = sadd.s32 %s267, %s268
      %s270 = smul.addr %s269, 8
      %s271 = scalar_lea.vmem %s3, %s270
      %s272 = sld [smem:[#allocation7 + %s23]]
      %s273 = sld [smem:[#allocation7 + %s23]]
      %p274 = scmp.lt.s32.totalorder %s22, 1
      %s275 = scalar_select %p274, %s22, 1
      %p276 = scmp.lt.s32.totalorder %s273, 0
      %s277 = scalar_select %p276, %s273, 0
      %s278 = smul.addr %s275, 4
      %s279 = sadd.s32 %s277, %s278
      %s280 = smul.addr %s279, 8
      %s281 = scalar_lea.vmem %s4, %s280
      %s282 = sld [smem:[#allocation7 + %s23]]
      %s283 = sld [smem:[#allocation6 + %s23]]
      %p284 = scmp.lt.s32.totalorder %s22, 1
      %s285 = scalar_select %p284, %s22, 1
      %p286 = scmp.lt.s32.totalorder %s283, 0
      %s287 = scalar_select %p286, %s283, 0
      %s288 = sadd.s32 %s287, %s285
      %s289 = smul.addr %s288, 8
      %s290 = scalar_lea.vmem %s5, %s289
      %s291 = sld [smem:[#allocation6 + %s23]]
      %s292 = sld [smem:[#allocation6 + %s23]]
      %s293 = sld [smem:[#allocation7 + %s23]]
      %p294 = scmp.eq.s32.totalorder %s293, 0
      // Predicated region
      $region33: #{causal_self_attention.4} parent=31 // pred_check
        %p295 = pneg %p294
      $region34: #{causal_self_attention.4} parent=31 // pred_check_branch
        %297 = sbr.rel (%p295) target = $region36
      $region35: #{causal_self_attention.4} parent=31 // pred_region
        %vm298 = vcmask 7168
        %299 = vst.msk [vmem:[#allocation2] sm:$0xff] %vm298, -1e+30
        %300 = vst.msk [vmem:[#allocation2 + $0x8] sm:$0xff] %vm298, -1e+30
        %301 = vst.msk [vmem:[#allocation2 + $0x10] sm:$0xff] %vm298, -1e+30
        %302 = vst.msk [vmem:[#allocation2 + $0x18] sm:$0xff] %vm298, -1e+30
        %303 = vst.msk [vmem:[#allocation3] sm:$0xff] %vm298, 0.0
        %304 = vst.msk [vmem:[#allocation3 + $0x8] sm:$0xff] %vm298, 0.0
        %305 = vst.msk [vmem:[#allocation3 + $0x10] sm:$0xff] %vm298, 0.0
        %306 = vst.msk [vmem:[#allocation3 + $0x18] sm:$0xff] %vm298, 0.0
        %vm307 = vcmask 64512
        %308 = vst.msk [vmem:[#allocation4] sm:$0xff] %vm307, 0.0
        %309 = vst.msk [vmem:[#allocation4 + $0x8] sm:$0xff] %vm307, 0.0
        %310 = vst.msk [vmem:[#allocation4 + $0x10] sm:$0xff] %vm307, 0.0
        %311 = vst.msk [vmem:[#allocation4 + $0x18] sm:$0xff] %vm307, 0.0
      $region36: #{causal_self_attention.4} parent=31 // pred_fallthru
        _
      %p312 = scmp.lt.s32.totalorder %s293, %s292
      // Predicated region
      $region37: #{causal_self_attention.4} parent=31 // pred_check
        %p313 = pneg %p312
      $region38: #{causal_self_attention.4} parent=31 // pred_check_branch
        %315 = sbr.rel (%p313) target = $region40
      $region39: #{causal_self_attention.4} parent=31 // pred_region
        %v316 = vld [vmem:[%s261] sm:$0xff]
        %v317 = vld [vmem:[%s271] sm:$0xff]
        %v318 = vld [vmem:[%s281] sm:$0xff]
        %vm319 = vcmask 64512
        %v321 = vsel %vm319, %v316, 0
        %v324 = vsel %vm319, %v317, 0
        %326 = vmatprep.subr.mxu0 0.0
        %327 = vmatpush1.xpose.msra.mxu0 %v324
        %328 = vmatprep.subr.mxu0 0.0
        %329 = vmatpush1.xpose.msra.mxu0 0.0
        %330 = vmatprep.subr.mxu0 0.0
        %331 = vmatpush1.xpose.msra.mxu0 0.0
        %332 = vmatprep.subr.mxu0 0.0
        %333 = vmatpush1.xpose.msra.mxu0 0.0
        %334 = vmatprep.subr.mxu0 0.0
        %335 = vmatpush1.xpose.msra.mxu0 0.0
        %336 = vmatprep.subr.mxu0 0.0
        %337 = vmatpush1.xpose.msra.mxu0 0.0
        %338 = vmatprep.subr.mxu0 0.0
        %339 = vmatpush1.xpose.msra.mxu0 0.0
        %340 = vmatprep.subr.mxu0 0.0
        %341 = vmatpush1.xpose.msra.mxu0 0.0
        %342 = vmatprep.subr.mxu0 0.0
        %343 = vmatpush1.xpose.msra.mxu0 0.0
        %344 = vmatprep.subr.mxu0 0.0
        %345 = vmatpush1.xpose.msra.mxu0 0.0
        %346 = vmatprep.subr.mxu0 0.0
        %347 = vmatpush1.xpose.msra.mxu0 0.0
        %348 = vmatprep.subr.mxu0 0.0
        %349 = vmatpush1.xpose.msra.mxu0 0.0
        %350 = vmatprep.subr.mxu0 0.0
        %351 = vmatpush1.xpose.msra.mxu0 0.0
        %352 = vmatprep.subr.mxu0 0.0
        %353 = vmatpush1.xpose.msra.mxu0 0.0
        %354 = vmatprep.subr.mxu0 0.0
        %355 = vmatpush1.xpose.msra.mxu0 0.0
        %356 = vmatprep.subr.mxu0 0.0
        %357 = vmatpush1.xpose.msra.mxu0 0.0
        %358 = vmatprep.subr.mxu0 0.0
        %359 = vmatpush1.xpose.msra.mxu0 0.0
        %360 = vmatprep.subr.mxu0 0.0
        %361 = vmatpush1.xpose.msra.mxu0 0.0
        %362 = vmatprep.subr.mxu0 0.0
        %363 = vmatpush1.xpose.msra.mxu0 0.0
        %364 = vmatprep.subr.mxu0 0.0
        %365 = vmatpush1.xpose.msra.mxu0 0.0
        %366 = vmatprep.subr.mxu0 0.0
        %367 = vmatpush1.xpose.msra.mxu0 0.0
        %368 = vmatprep.subr.mxu0 0.0
        %369 = vmatpush1.xpose.msra.mxu0 0.0
        %370 = vmatprep.subr.mxu0 0.0
        %371 = vmatpush1.xpose.msra.mxu0 0.0
        %372 = vmatprep.subr.mxu0 0.0
        %373 = vmatpush1.xpose.msra.mxu0 0.0
        %374 = vmatprep.subr.mxu0 0.0
        %375 = vmatpush1.xpose.msra.mxu0 0.0
        %376 = vmatprep.subr.mxu0 0.0
        %377 = vmatpush1.xpose.msra.mxu0 0.0
        %378 = vmatprep.subr.mxu0 0.0
        %379 = vmatpush1.xpose.msra.mxu0 0.0
        %380 = vmatprep.subr.mxu0 0.0
        %381 = vmatpush1.xpose.msra.mxu0 0.0
        %382 = vmatprep.subr.mxu0 0.0
        %383 = vmatpush1.xpose.msra.mxu0 0.0
        %384 = vmatprep.subr.mxu0 0.0
        %385 = vmatpush1.xpose.msra.mxu0 0.0
        %386 = vmatprep.subr.mxu0 0.0
        %387 = vmatpush1.xpose.msra.mxu0 0.0
        %388 = vmatprep.subr.mxu0 0.0
        %389 = vmatpush1.xpose.msra.mxu0 0.0
        %390 = vmatprep.mubr.f32.mxu0 0.0
        %391 = vmatmul.mubr.f32.gmra.mrb[0].mxu0 %v321
        %v392 = vpop.f32.mrb[0].mxu0
        %v393 = vadd.f32 0.0, %v392
        %v394 = vpop.f32.mrb[0].mxu0
        %395 = vdwg.mxu0
        %v396 = vld [vmem:[#allocation2] sm:$0xff]
        %v397 = vsel %vm319, %v393, -inf
        %398 = vmax.xlane.f32.xlu0 %v397
        %v399 = vpop.xlane.xlu0 %398
        %v400 = vmax.f32 %v396, %v399
        %v401 = vsub.f32 %v396, %v400
        %v402 = vmul.f32 %v401, 1.442695
        %v403 = vpow.pop %v402
        %405 = vset.pattern.permute.xlu0 0
        %406 = vperm.xlu0 %405, %v400
        %v407 = vpop.permute.xlu0 %406
        %v409 = vsub.f32 %v393, %v407
        %v410 = vmul.f32 %v409, 1.442695
        %v411 = vpow.pop %v410
        %v412 = vld [vmem:[#allocation3] sm:$0xff]
        %v413 = vmul.f32 %v403, %v412
        %v414 = vsel %vm319, %v411, 0.0
        %415 = vadd.xlane.f32.xlu0 %v414
        %v416 = vpop.xlane.xlu0 %415
        %v417 = vadd.f32 %v413, %v416
        %vm418 = vcmask 7168
        %419 = vst.msk [vmem:[#allocation3] sm:$0xff] %vm418, %v417
        %v420 = vld [vmem:[#allocation4] sm:$0xff]
        %422 = vset.pattern.permute.xlu0 0
        %423 = vperm.xlu0 %422, %v403
        %v424 = vpop.permute.xlu0 %423
        %v426 = vmul.f32 %v424, %v420
        %v428 = vsel %vm319, %v411, 0
        %430 = vmatprep.subr.mxu0 0.0
        %431 = vmatpush1.msra.mxu0 %v318
        %432 = vmatprep.subr.mxu0 0.0
        %433 = vmatpush1.msra.mxu0 0.0
        %434 = vmatprep.subr.mxu0 0.0
        %435 = vmatpush1.msra.mxu0 0.0
        %436 = vmatprep.subr.mxu0 0.0
        %437 = vmatpush1.msra.mxu0 0.0
        %438 = vmatprep.subr.mxu0 0.0
        %439 = vmatpush1.msra.mxu0 0.0
        %440 = vmatprep.subr.mxu0 0.0
        %441 = vmatpush1.msra.mxu0 0.0
        %442 = vmatprep.subr.mxu0 0.0
        %443 = vmatpush1.msra.mxu0 0.0
        %444 = vmatprep.subr.mxu0 0.0
        %445 = vmatpush1.msra.mxu0 0.0
        %446 = vmatprep.subr.mxu0 0.0
        %447 = vmatpush1.msra.mxu0 0.0
        %448 = vmatprep.subr.mxu0 0.0
        %449 = vmatpush1.msra.mxu0 0.0
        %450 = vmatprep.subr.mxu0 0.0
        %451 = vmatpush1.msra.mxu0 0.0
        %452 = vmatprep.subr.mxu0 0.0
        %453 = vmatpush1.msra.mxu0 0.0
        %454 = vmatprep.subr.mxu0 0.0
        %455 = vmatpush1.msra.mxu0 0.0
        %456 = vmatprep.subr.mxu0 0.0
        %457 = vmatpush1.msra.mxu0 0.0
        %458 = vmatprep.subr.mxu0 0.0
        %459 = vmatpush1.msra.mxu0 0.0
        %460 = vmatprep.subr.mxu0 0.0
        %461 = vmatpush1.msra.mxu0 0.0
        %462 = vmatprep.subr.mxu0 0.0
        %463 = vmatpush1.msra.mxu0 0.0
        %464 = vmatprep.subr.mxu0 0.0
        %465 = vmatpush1.msra.mxu0 0.0
        %466 = vmatprep.subr.mxu0 0.0
        %467 = vmatpush1.msra.mxu0 0.0
        %468 = vmatprep.subr.mxu0 0.0
        %469 = vmatpush1.msra.mxu0 0.0
        %470 = vmatprep.subr.mxu0 0.0
        %471 = vmatpush1.msra.mxu0 0.0
        %472 = vmatprep.subr.mxu0 0.0
        %473 = vmatpush1.msra.mxu0 0.0
        %474 = vmatprep.subr.mxu0 0.0
        %475 = vmatpush1.msra.mxu0 0.0
        %476 = vmatprep.subr.mxu0 0.0
        %477 = vmatpush1.msra.mxu0 0.0
        %478 = vmatprep.subr.mxu0 0.0
        %479 = vmatpush1.msra.mxu0 0.0
        %480 = vmatprep.subr.mxu0 0.0
        %481 = vmatpush1.msra.mxu0 0.0
        %482 = vmatprep.subr.mxu0 0.0
        %483 = vmatpush1.msra.mxu0 0.0
        %484 = vmatprep.subr.mxu0 0.0
        %485 = vmatpush1.msra.mxu0 0.0
        %486 = vmatprep.subr.mxu0 0.0
        %487 = vmatpush1.msra.mxu0 0.0
        %488 = vmatprep.subr.mxu0 0.0
        %489 = vmatpush1.msra.mxu0 0.0
        %490 = vmatprep.subr.mxu0 0.0
        %491 = vmatpush1.msra.mxu0 0.0
        %492 = vmatprep.subr.mxu0 0.0
        %493 = vmatpush1.msra.mxu0 0.0
        %494 = vmatprep.mubr.f32.mxu0 0.0
        %495 = vmatmul.mubr.f32.gmra.mrb[0].mxu0 %v428
        %v496 = vpop.f32.mrb[0].mxu0
        %v497 = vadd.f32 0.0, %v496
        %v498 = vpop.f32.mrb[0].mxu0
        %499 = vdwg.mxu0
        %v500 = vadd.f32 %v426, %v497
        %501 = vst.msk [vmem:[#allocation4] sm:$0xff] %vm319, %v500
        %502 = vst.msk [vmem:[#allocation2] sm:$0xff] %vm418, %v400
        %s503 = scalar_lea.vmem %s261, 8
        %v504 = vld [vmem:[%s503] sm:$0xff]
        %s505 = scalar_lea.vmem %s271, 8
        %v506 = vld [vmem:[%s505] sm:$0xff]
        %s507 = scalar_lea.vmem %s281, 8
        %v508 = vld [vmem:[%s507] sm:$0xff]
        %v510 = vsel %vm319, %v504, 0
        %v513 = vsel %vm319, %v506, 0
        %515 = vmatprep.subr.mxu0 0.0
        %516 = vmatpush1.xpose.msra.mxu0 %v513
        %517 = vmatprep.subr.mxu0 0.0
        %518 = vmatpush1.xpose.msra.mxu0 0.0
        %519 = vmatprep.subr.mxu0 0.0
        %520 = vmatpush1.xpose.msra.mxu0 0.0
        %521 = vmatprep.subr.mxu0 0.0
        %522 = vmatpush1.xpose.msra.mxu0 0.0
        %523 = vmatprep.subr.mxu0 0.0
        %524 = vmatpush1.xpose.msra.mxu0 0.0
        %525 = vmatprep.subr.mxu0 0.0
        %526 = vmatpush1.xpose.msra.mxu0 0.0
        %527 = vmatprep.subr.mxu0 0.0
        %528 = vmatpush1.xpose.msra.mxu0 0.0
        %529 = vmatprep.subr.mxu0 0.0
        %530 = vmatpush1.xpose.msra.mxu0 0.0
        %531 = vmatprep.subr.mxu0 0.0
        %532 = vmatpush1.xpose.msra.mxu0 0.0
        %533 = vmatprep.subr.mxu0 0.0
        %534 = vmatpush1.xpose.msra.mxu0 0.0
        %535 = vmatprep.subr.mxu0 0.0
        %536 = vmatpush1.xpose.msra.mxu0 0.0
        %537 = vmatprep.subr.mxu0 0.0
        %538 = vmatpush1.xpose.msra.mxu0 0.0
        %539 = vmatprep.subr.mxu0 0.0
        %540 = vmatpush1.xpose.msra.mxu0 0.0
        %541 = vmatprep.subr.mxu0 0.0
        %542 = vmatpush1.xpose.msra.mxu0 0.0
        %543 = vmatprep.subr.mxu0 0.0
        %544 = vmatpush1.xpose.msra.mxu0 0.0
        %545 = vmatprep.subr.mxu0 0.0
        %546 = vmatpush1.xpose.msra.mxu0 0.0
        %547 = vmatprep.subr.mxu0 0.0
        %548 = vmatpush1.xpose.msra.mxu0 0.0
        %549 = vmatprep.subr.mxu0 0.0
        %550 = vmatpush1.xpose.msra.mxu0 0.0
        %551 = vmatprep.subr.mxu0 0.0
        %552 = vmatpush1.xpose.msra.mxu0 0.0
        %553 = vmatprep.subr.mxu0 0.0
        %554 = vmatpush1.xpose.msra.mxu0 0.0
        %555 = vmatprep.subr.mxu0 0.0
        %556 = vmatpush1.xpose.msra.mxu0 0.0
        %557 = vmatprep.subr.mxu0 0.0
        %558 = vmatpush1.xpose.msra.mxu0 0.0
        %559 = vmatprep.subr.mxu0 0.0
        %560 = vmatpush1.xpose.msra.mxu0 0.0
        %561 = vmatprep.subr.mxu0 0.0
        %562 = vmatpush1.xpose.msra.mxu0 0.0
        %563 = vmatprep.subr.mxu0 0.0
        %564 = vmatpush1.xpose.msra.mxu0 0.0
        %565 = vmatprep.subr.mxu0 0.0
        %566 = vmatpush1.xpose.msra.mxu0 0.0
        %567 = vmatprep.subr.mxu0 0.0
        %568 = vmatpush1.xpose.msra.mxu0 0.0
        %569 = vmatprep.subr.mxu0 0.0
        %570 = vmatpush1.xpose.msra.mxu0 0.0
        %571 = vmatprep.subr.mxu0 0.0
        %572 = vmatpush1.xpose.msra.mxu0 0.0
        %573 = vmatprep.subr.mxu0 0.0
        %574 = vmatpush1.xpose.msra.mxu0 0.0
        %575 = vmatprep.subr.mxu0 0.0
        %576 = vmatpush1.xpose.msra.mxu0 0.0
        %577 = vmatprep.subr.mxu0 0.0
        %578 = vmatpush1.xpose.msra.mxu0 0.0
        %579 = vmatprep.mubr.f32.mxu0 0.0
        %580 = vmatmul.mubr.f32.gmra.mrb[0].mxu0 %v510
        %v581 = vpop.f32.mrb[0].mxu0
        %v582 = vadd.f32 0.0, %v581
        %v583 = vpop.f32.mrb[0].mxu0
        %584 = vdwg.mxu0
        %s585 = scalar_lea.vmem [#allocation2], 8
        %v586 = vld [vmem:[%s585] sm:$0xff]
        %v587 = vsel %vm319, %v582, -inf
        %588 = vmax.xlane.f32.xlu0 %v587
        %v589 = vpop.xlane.xlu0 %588
        %v590 = vmax.f32 %v586, %v589
        %v591 = vsub.f32 %v586, %v590
        %v592 = vmul.f32 %v591, 1.442695
        %v593 = vpow.pop %v592
        %595 = vset.pattern.permute.xlu0 0
        %596 = vperm.xlu0 %595, %v590
        %v597 = vpop.permute.xlu0 %596
        %v599 = vsub.f32 %v582, %v597
        %v600 = vmul.f32 %v599, 1.442695
        %v601 = vpow.pop %v600
        %s602 = scalar_lea.vmem [#allocation3], 8
        %v603 = vld [vmem:[%s602] sm:$0xff]
        %v604 = vmul.f32 %v593, %v603
        %v605 = vsel %vm319, %v601, 0.0
        %606 = vadd.xlane.f32.xlu0 %v605
        %v607 = vpop.xlane.xlu0 %606
        %v608 = vadd.f32 %v604, %v607
        %609 = vst.msk [vmem:[%s602] sm:$0xff] %vm418, %v608
        %s610 = scalar_lea.vmem [#allocation4], 8
        %v611 = vld [vmem:[%s610] sm:$0xff]
        %613 = vset.pattern.permute.xlu0 0
        %614 = vperm.xlu0 %613, %v593
        %v615 = vpop.permute.xlu0 %614
        %v617 = vmul.f32 %v615, %v611
        %v619 = vsel %vm319, %v601, 0
        %621 = vmatprep.subr.mxu0 0.0
        %622 = vmatpush1.msra.mxu0 %v508
        %623 = vmatprep.subr.mxu0 0.0
        %624 = vmatpush1.msra.mxu0 0.0
        %625 = vmatprep.subr.mxu0 0.0
        %626 = vmatpush1.msra.mxu0 0.0
        %627 = vmatprep.subr.mxu0 0.0
        %628 = vmatpush1.msra.mxu0 0.0
        %629 = vmatprep.subr.mxu0 0.0
        %630 = vmatpush1.msra.mxu0 0.0
        %631 = vmatprep.subr.mxu0 0.0
        %632 = vmatpush1.msra.mxu0 0.0
        %633 = vmatprep.subr.mxu0 0.0
        %634 = vmatpush1.msra.mxu0 0.0
        %635 = vmatprep.subr.mxu0 0.0
        %636 = vmatpush1.msra.mxu0 0.0
        %637 = vmatprep.subr.mxu0 0.0
        %638 = vmatpush1.msra.mxu0 0.0
        %639 = vmatprep.subr.mxu0 0.0
        %640 = vmatpush1.msra.mxu0 0.0
        %641 = vmatprep.subr.mxu0 0.0
        %642 = vmatpush1.msra.mxu0 0.0
        %643 = vmatprep.subr.mxu0 0.0
        %644 = vmatpush1.msra.mxu0 0.0
        %645 = vmatprep.subr.mxu0 0.0
        %646 = vmatpush1.msra.mxu0 0.0
        %647 = vmatprep.subr.mxu0 0.0
        %648 = vmatpush1.msra.mxu0 0.0
        %649 = vmatprep.subr.mxu0 0.0
        %650 = vmatpush1.msra.mxu0 0.0
        %651 = vmatprep.subr.mxu0 0.0
        %652 = vmatpush1.msra.mxu0 0.0
        %653 = vmatprep.subr.mxu0 0.0
        %654 = vmatpush1.msra.mxu0 0.0
        %655 = vmatprep.subr.mxu0 0.0
        %656 = vmatpush1.msra.mxu0 0.0
        %657 = vmatprep.subr.mxu0 0.0
        %658 = vmatpush1.msra.mxu0 0.0
        %659 = vmatprep.subr.mxu0 0.0
        %660 = vmatpush1.msra.mxu0 0.0
        %661 = vmatprep.subr.mxu0 0.0
        %662 = vmatpush1.msra.mxu0 0.0
        %663 = vmatprep.subr.mxu0 0.0
        %664 = vmatpush1.msra.mxu0 0.0
        %665 = vmatprep.subr.mxu0 0.0
        %666 = vmatpush1.msra.mxu0 0.0
        %667 = vmatprep.subr.mxu0 0.0
        %668 = vmatpush1.msra.mxu0 0.0
        %669 = vmatprep.subr.mxu0 0.0
        %670 = vmatpush1.msra.mxu0 0.0
        %671 = vmatprep.subr.mxu0 0.0
        %672 = vmatpush1.msra.mxu0 0.0
        %673 = vmatprep.subr.mxu0 0.0
        %674 = vmatpush1.msra.mxu0 0.0
        %675 = vmatprep.subr.mxu0 0.0
        %676 = vmatpush1.msra.mxu0 0.0
        %677 = vmatprep.subr.mxu0 0.0
        %678 = vmatpush1.msra.mxu0 0.0
        %679 = vmatprep.subr.mxu0 0.0
        %680 = vmatpush1.msra.mxu0 0.0
        %681 = vmatprep.subr.mxu0 0.0
        %682 = vmatpush1.msra.mxu0 0.0
        %683 = vmatprep.subr.mxu0 0.0
        %684 = vmatpush1.msra.mxu0 0.0
        %685 = vmatprep.mubr.f32.mxu0 0.0
        %686 = vmatmul.mubr.f32.gmra.mrb[0].mxu0 %v619
        %v687 = vpop.f32.mrb[0].mxu0
        %v688 = vadd.f32 0.0, %v687
        %v689 = vpop.f32.mrb[0].mxu0
        %690 = vdwg.mxu0
        %v691 = vadd.f32 %v617, %v688
        %692 = vst.msk [vmem:[%s610] sm:$0xff] %vm319, %v691
        %693 = vst.msk [vmem:[%s585] sm:$0xff] %vm418, %v590
        %s694 = scalar_lea.vmem %s261, 16
        %v695 = vld [vmem:[%s694] sm:$0xff]
        %s696 = scalar_lea.vmem %s271, 16
        %v697 = vld [vmem:[%s696] sm:$0xff]
        %s698 = scalar_lea.vmem %s281, 16
        %v699 = vld [vmem:[%s698] sm:$0xff]
        %v701 = vsel %vm319, %v695, 0
        %v704 = vsel %vm319, %v697, 0
        %706 = vmatprep.subr.mxu0 0.0
        %707 = vmatpush1.xpose.msra.mxu0 %v704
        %708 = vmatprep.subr.mxu0 0.0
        %709 = vmatpush1.xpose.msra.mxu0 0.0
        %710 = vmatprep.subr.mxu0 0.0
        %711 = vmatpush1.xpose.msra.mxu0 0.0
        %712 = vmatprep.subr.mxu0 0.0
        %713 = vmatpush1.xpose.msra.mxu0 0.0
        %714 = vmatprep.subr.mxu0 0.0
        %715 = vmatpush1.xpose.msra.mxu0 0.0
        %716 = vmatprep.subr.mxu0 0.0
        %717 = vmatpush1.xpose.msra.mxu0 0.0
        %718 = vmatprep.subr.mxu0 0.0
        %719 = vmatpush1.xpose.msra.mxu0 0.0
        %720 = vmatprep.subr.mxu0 0.0
        %721 = vmatpush1.xpose.msra.mxu0 0.0
        %722 = vmatprep.subr.mxu0 0.0
        %723 = vmatpush1.xpose.msra.mxu0 0.0
        %724 = vmatprep.subr.mxu0 0.0
        %725 = vmatpush1.xpose.msra.mxu0 0.0
        %726 = vmatprep.subr.mxu0 0.0
        %727 = vmatpush1.xpose.msra.mxu0 0.0
        %728 = vmatprep.subr.mxu0 0.0
        %729 = vmatpush1.xpose.msra.mxu0 0.0
        %730 = vmatprep.subr.mxu0 0.0
        %731 = vmatpush1.xpose.msra.mxu0 0.0
        %732 = vmatprep.subr.mxu0 0.0
        %733 = vmatpush1.xpose.msra.mxu0 0.0
        %734 = vmatprep.subr.mxu0 0.0
        %735 = vmatpush1.xpose.msra.mxu0 0.0
        %736 = vmatprep.subr.mxu0 0.0
        %737 = vmatpush1.xpose.msra.mxu0 0.0
        %738 = vmatprep.subr.mxu0 0.0
        %739 = vmatpush1.xpose.msra.mxu0 0.0
        %740 = vmatprep.subr.mxu0 0.0
        %741 = vmatpush1.xpose.msra.mxu0 0.0
        %742 = vmatprep.subr.mxu0 0.0
        %743 = vmatpush1.xpose.msra.mxu0 0.0
        %744 = vmatprep.subr.mxu0 0.0
        %745 = vmatpush1.xpose.msra.mxu0 0.0
        %746 = vmatprep.subr.mxu0 0.0
        %747 = vmatpush1.xpose.msra.mxu0 0.0
        %748 = vmatprep.subr.mxu0 0.0
        %749 = vmatpush1.xpose.msra.mxu0 0.0
        %750 = vmatprep.subr.mxu0 0.0
        %751 = vmatpush1.xpose.msra.mxu0 0.0
        %752 = vmatprep.subr.mxu0 0.0
        %753 = vmatpush1.xpose.msra.mxu0 0.0
        %754 = vmatprep.subr.mxu0 0.0
        %755 = vmatpush1.xpose.msra.mxu0 0.0
        %756 = vmatprep.subr.mxu0 0.0
        %757 = vmatpush1.xpose.msra.mxu0 0.0
        %758 = vmatprep.subr.mxu0 0.0
        %759 = vmatpush1.xpose.msra.mxu0 0.0
        %760 = vmatprep.subr.mxu0 0.0
        %761 = vmatpush1.xpose.msra.mxu0 0.0
        %762 = vmatprep.subr.mxu0 0.0
        %763 = vmatpush1.xpose.msra.mxu0 0.0
        %764 = vmatprep.subr.mxu0 0.0
        %765 = vmatpush1.xpose.msra.mxu0 0.0
        %766 = vmatprep.subr.mxu0 0.0
        %767 = vmatpush1.xpose.msra.mxu0 0.0
        %768 = vmatprep.subr.mxu0 0.0
        %769 = vmatpush1.xpose.msra.mxu0 0.0
        %770 = vmatprep.mubr.f32.mxu0 0.0
        %771 = vmatmul.mubr.f32.gmra.mrb[0].mxu0 %v701
        %v772 = vpop.f32.mrb[0].mxu0
        %v773 = vadd.f32 0.0, %v772
        %v774 = vpop.f32.mrb[0].mxu0
        %775 = vdwg.mxu0
        %s776 = scalar_lea.vmem [#allocation2], 16
        %v777 = vld [vmem:[%s776] sm:$0xff]
        %v778 = vsel %vm319, %v773, -inf
        %779 = vmax.xlane.f32.xlu0 %v778
        %v780 = vpop.xlane.xlu0 %779
        %v781 = vmax.f32 %v777, %v780
        %v782 = vsub.f32 %v777, %v781
        %v783 = vmul.f32 %v782, 1.442695
        %v784 = vpow.pop %v783
        %786 = vset.pattern.permute.xlu0 0
        %787 = vperm.xlu0 %786, %v781
        %v788 = vpop.permute.xlu0 %787
        %v790 = vsub.f32 %v773, %v788
        %v791 = vmul.f32 %v790, 1.442695
        %v792 = vpow.pop %v791
        %s793 = scalar_lea.vmem [#allocation3], 16
        %v794 = vld [vmem:[%s793] sm:$0xff]
        %v795 = vmul.f32 %v784, %v794
        %v796 = vsel %vm319, %v792, 0.0
        %797 = vadd.xlane.f32.xlu0 %v796
        %v798 = vpop.xlane.xlu0 %797
        %v799 = vadd.f32 %v795, %v798
        %800 = vst.msk [vmem:[%s793] sm:$0xff] %vm418, %v799
        %s801 = scalar_lea.vmem [#allocation4], 16
        %v802 = vld [vmem:[%s801] sm:$0xff]
        %804 = vset.pattern.permute.xlu0 0
        %805 = vperm.xlu0 %804, %v784
        %v806 = vpop.permute.xlu0 %805
        %v808 = vmul.f32 %v806, %v802
        %v810 = vsel %vm319, %v792, 0
        %812 = vmatprep.subr.mxu0 0.0
        %813 = vmatpush1.msra.mxu0 %v699
        %814 = vmatprep.subr.mxu0 0.0
        %815 = vmatpush1.msra.mxu0 0.0
        %816 = vmatprep.subr.mxu0 0.0
        %817 = vmatpush1.msra.mxu0 0.0
        %818 = vmatprep.subr.mxu0 0.0
        %819 = vmatpush1.msra.mxu0 0.0
        %820 = vmatprep.subr.mxu0 0.0
        %821 = vmatpush1.msra.mxu0 0.0
        %822 = vmatprep.subr.mxu0 0.0
        %823 = vmatpush1.msra.mxu0 0.0
        %824 = vmatprep.subr.mxu0 0.0
        %825 = vmatpush1.msra.mxu0 0.0
        %826 = vmatprep.subr.mxu0 0.0
        %827 = vmatpush1.msra.mxu0 0.0
        %828 = vmatprep.subr.mxu0 0.0
        %829 = vmatpush1.msra.mxu0 0.0
        %830 = vmatprep.subr.mxu0 0.0
        %831 = vmatpush1.msra.mxu0 0.0
        %832 = vmatprep.subr.mxu0 0.0
        %833 = vmatpush1.msra.mxu0 0.0
        %834 = vmatprep.subr.mxu0 0.0
        %835 = vmatpush1.msra.mxu0 0.0
        %836 = vmatprep.subr.mxu0 0.0
        %837 = vmatpush1.msra.mxu0 0.0
        %838 = vmatprep.subr.mxu0 0.0
        %839 = vmatpush1.msra.mxu0 0.0
        %840 = vmatprep.subr.mxu0 0.0
        %841 = vmatpush1.msra.mxu0 0.0
        %842 = vmatprep.subr.mxu0 0.0
        %843 = vmatpush1.msra.mxu0 0.0
        %844 = vmatprep.subr.mxu0 0.0
        %845 = vmatpush1.msra.mxu0 0.0
        %846 = vmatprep.subr.mxu0 0.0
        %847 = vmatpush1.msra.mxu0 0.0
        %848 = vmatprep.subr.mxu0 0.0
        %849 = vmatpush1.msra.mxu0 0.0
        %850 = vmatprep.subr.mxu0 0.0
        %851 = vmatpush1.msra.mxu0 0.0
        %852 = vmatprep.subr.mxu0 0.0
        %853 = vmatpush1.msra.mxu0 0.0
        %854 = vmatprep.subr.mxu0 0.0
        %855 = vmatpush1.msra.mxu0 0.0
        %856 = vmatprep.subr.mxu0 0.0
        %857 = vmatpush1.msra.mxu0 0.0
        %858 = vmatprep.subr.mxu0 0.0
        %859 = vmatpush1.msra.mxu0 0.0
        %860 = vmatprep.subr.mxu0 0.0
        %861 = vmatpush1.msra.mxu0 0.0
        %862 = vmatprep.subr.mxu0 0.0
        %863 = vmatpush1.msra.mxu0 0.0
        %864 = vmatprep.subr.mxu0 0.0
        %865 = vmatpush1.msra.mxu0 0.0
        %866 = vmatprep.subr.mxu0 0.0
        %867 = vmatpush1.msra.mxu0 0.0
        %868 = vmatprep.subr.mxu0 0.0
        %869 = vmatpush1.msra.mxu0 0.0
        %870 = vmatprep.subr.mxu0 0.0
        %871 = vmatpush1.msra.mxu0 0.0
        %872 = vmatprep.subr.mxu0 0.0
        %873 = vmatpush1.msra.mxu0 0.0
        %874 = vmatprep.subr.mxu0 0.0
        %875 = vmatpush1.msra.mxu0 0.0
        %876 = vmatprep.mubr.f32.mxu0 0.0
        %877 = vmatmul.mubr.f32.gmra.mrb[0].mxu0 %v810
        %v878 = vpop.f32.mrb[0].mxu0
        %v879 = vadd.f32 0.0, %v878
        %v880 = vpop.f32.mrb[0].mxu0
        %881 = vdwg.mxu0
        %v882 = vadd.f32 %v808, %v879
        %883 = vst.msk [vmem:[%s801] sm:$0xff] %vm319, %v882
        %884 = vst.msk [vmem:[%s776] sm:$0xff] %vm418, %v781
        %s885 = scalar_lea.vmem %s261, 24
        %v886 = vld [vmem:[%s885] sm:$0xff]
        %s887 = scalar_lea.vmem %s271, 24
        %v888 = vld [vmem:[%s887] sm:$0xff]
        %s889 = scalar_lea.vmem %s281, 24
        %v890 = vld [vmem:[%s889] sm:$0xff]
        %v892 = vsel %vm319, %v886, 0
        %v895 = vsel %vm319, %v888, 0
        %897 = vmatprep.subr.mxu0 0.0
        %898 = vmatpush1.xpose.msra.mxu0 %v895
        %899 = vmatprep.subr.mxu0 0.0
        %900 = vmatpush1.xpose.msra.mxu0 0.0
        %901 = vmatprep.subr.mxu0 0.0
        %902 = vmatpush1.xpose.msra.mxu0 0.0
        %903 = vmatprep.subr.mxu0 0.0
        %904 = vmatpush1.xpose.msra.mxu0 0.0
        %905 = vmatprep.subr.mxu0 0.0
        %906 = vmatpush1.xpose.msra.mxu0 0.0
        %907 = vmatprep.subr.mxu0 0.0
        %908 = vmatpush1.xpose.msra.mxu0 0.0
        %909 = vmatprep.subr.mxu0 0.0
        %910 = vmatpush1.xpose.msra.mxu0 0.0
        %911 = vmatprep.subr.mxu0 0.0
        %912 = vmatpush1.xpose.msra.mxu0 0.0
        %913 = vmatprep.subr.mxu0 0.0
        %914 = vmatpush1.xpose.msra.mxu0 0.0
        %915 = vmatprep.subr.mxu0 0.0
        %916 = vmatpush1.xpose.msra.mxu0 0.0
        %917 = vmatprep.subr.mxu0 0.0
        %918 = vmatpush1.xpose.msra.mxu0 0.0
        %919 = vmatprep.subr.mxu0 0.0
        %920 = vmatpush1.xpose.msra.mxu0 0.0
        %921 = vmatprep.subr.mxu0 0.0
        %922 = vmatpush1.xpose.msra.mxu0 0.0
        %923 = vmatprep.subr.mxu0 0.0
        %924 = vmatpush1.xpose.msra.mxu0 0.0
        %925 = vmatprep.subr.mxu0 0.0
        %926 = vmatpush1.xpose.msra.mxu0 0.0
        %927 = vmatprep.subr.mxu0 0.0
        %928 = vmatpush1.xpose.msra.mxu0 0.0
        %929 = vmatprep.subr.mxu0 0.0
        %930 = vmatpush1.xpose.msra.mxu0 0.0
        %931 = vmatprep.subr.mxu0 0.0
        %932 = vmatpush1.xpose.msra.mxu0 0.0
        %933 = vmatprep.subr.mxu0 0.0
        %934 = vmatpush1.xpose.msra.mxu0 0.0
        %935 = vmatprep.subr.mxu0 0.0
        %936 = vmatpush1.xpose.msra.mxu0 0.0
        %937 = vmatprep.subr.mxu0 0.0
        %938 = vmatpush1.xpose.msra.mxu0 0.0
        %939 = vmatprep.subr.mxu0 0.0
        %940 = vmatpush1.xpose.msra.mxu0 0.0
        %941 = vmatprep.subr.mxu0 0.0
        %942 = vmatpush1.xpose.msra.mxu0 0.0
        %943 = vmatprep.subr.mxu0 0.0
        %944 = vmatpush1.xpose.msra.mxu0 0.0
        %945 = vmatprep.subr.mxu0 0.0
        %946 = vmatpush1.xpose.msra.mxu0 0.0
        %947 = vmatprep.subr.mxu0 0.0
        %948 = vmatpush1.xpose.msra.mxu0 0.0
        %949 = vmatprep.subr.mxu0 0.0
        %950 = vmatpush1.xpose.msra.mxu0 0.0
        %951 = vmatprep.subr.mxu0 0.0
        %952 = vmatpush1.xpose.msra.mxu0 0.0
        %953 = vmatprep.subr.mxu0 0.0
        %954 = vmatpush1.xpose.msra.mxu0 0.0
        %955 = vmatprep.subr.mxu0 0.0
        %956 = vmatpush1.xpose.msra.mxu0 0.0
        %957 = vmatprep.subr.mxu0 0.0
        %958 = vmatpush1.xpose.msra.mxu0 0.0
        %959 = vmatprep.subr.mxu0 0.0
        %960 = vmatpush1.xpose.msra.mxu0 0.0
        %961 = vmatprep.mubr.f32.mxu0 0.0
        %962 = vmatmul.mubr.f32.gmra.mrb[0].mxu0 %v892
        %v963 = vpop.f32.mrb[0].mxu0
        %v964 = vadd.f32 0.0, %v963
        %v965 = vpop.f32.mrb[0].mxu0
        %966 = vdwg.mxu0
        %s967 = scalar_lea.vmem [#allocation2], 24
        %v968 = vld [vmem:[%s967] sm:$0xff]
        %v969 = vsel %vm319, %v964, -inf
        %970 = vmax.xlane.f32.xlu0 %v969
        %v971 = vpop.xlane.xlu0 %970
        %v972 = vmax.f32 %v968, %v971
        %v973 = vsub.f32 %v968, %v972
        %v974 = vmul.f32 %v973, 1.442695
        %v975 = vpow.pop %v974
        %977 = vset.pattern.permute.xlu0 0
        %978 = vperm.xlu0 %977, %v972
        %v979 = vpop.permute.xlu0 %978
        %v981 = vsub.f32 %v964, %v979
        %v982 = vmul.f32 %v981, 1.442695
        %v983 = vpow.pop %v982
        %s984 = scalar_lea.vmem [#allocation3], 24
        %v985 = vld [vmem:[%s984] sm:$0xff]
        %v986 = vmul.f32 %v975, %v985
        %v987 = vsel %vm319, %v983, 0.0
        %988 = vadd.xlane.f32.xlu0 %v987
        %v989 = vpop.xlane.xlu0 %988
        %v990 = vadd.f32 %v986, %v989
        %991 = vst.msk [vmem:[%s984] sm:$0xff] %vm418, %v990
        %s992 = scalar_lea.vmem [#allocation4], 24
        %v993 = vld [vmem:[%s992] sm:$0xff]
        %995 = vset.pattern.permute.xlu0 0
        %996 = vperm.xlu0 %995, %v975
        %v997 = vpop.permute.xlu0 %996
        %v999 = vmul.f32 %v997, %v993
        %v1001 = vsel %vm319, %v983, 0
        %1003 = vmatprep.subr.mxu0 0.0
        %1004 = vmatpush1.msra.mxu0 %v890
        %1005 = vmatprep.subr.mxu0 0.0
        %1006 = vmatpush1.msra.mxu0 0.0
        %1007 = vmatprep.subr.mxu0 0.0
        %1008 = vmatpush1.msra.mxu0 0.0
        %1009 = vmatprep.subr.mxu0 0.0
        %1010 = vmatpush1.msra.mxu0 0.0
        %1011 = vmatprep.subr.mxu0 0.0
        %1012 = vmatpush1.msra.mxu0 0.0
        %1013 = vmatprep.subr.mxu0 0.0
        %1014 = vmatpush1.msra.mxu0 0.0
        %1015 = vmatprep.subr.mxu0 0.0
        %1016 = vmatpush1.msra.mxu0 0.0
        %1017 = vmatprep.subr.mxu0 0.0
        %1018 = vmatpush1.msra.mxu0 0.0
        %1019 = vmatprep.subr.mxu0 0.0
        %1020 = vmatpush1.msra.mxu0 0.0
        %1021 = vmatprep.subr.mxu0 0.0
        %1022 = vmatpush1.msra.mxu0 0.0
        %1023 = vmatprep.subr.mxu0 0.0
        %1024 = vmatpush1.msra.mxu0 0.0
        %1025 = vmatprep.subr.mxu0 0.0
        %1026 = vmatpush1.msra.mxu0 0.0
        %1027 = vmatprep.subr.mxu0 0.0
        %1028 = vmatpush1.msra.mxu0 0.0
        %1029 = vmatprep.subr.mxu0 0.0
        %1030 = vmatpush1.msra.mxu0 0.0
        %1031 = vmatprep.subr.mxu0 0.0
        %1032 = vmatpush1.msra.mxu0 0.0
        %1033 = vmatprep.subr.mxu0 0.0
        %1034 = vmatpush1.msra.mxu0 0.0
        %1035 = vmatprep.subr.mxu0 0.0
        %1036 = vmatpush1.msra.mxu0 0.0
        %1037 = vmatprep.subr.mxu0 0.0
        %1038 = vmatpush1.msra.mxu0 0.0
        %1039 = vmatprep.subr.mxu0 0.0
        %1040 = vmatpush1.msra.mxu0 0.0
        %1041 = vmatprep.subr.mxu0 0.0
        %1042 = vmatpush1.msra.mxu0 0.0
        %1043 = vmatprep.subr.mxu0 0.0
        %1044 = vmatpush1.msra.mxu0 0.0
        %1045 = vmatprep.subr.mxu0 0.0
        %1046 = vmatpush1.msra.mxu0 0.0
        %1047 = vmatprep.subr.mxu0 0.0
        %1048 = vmatpush1.msra.mxu0 0.0
        %1049 = vmatprep.subr.mxu0 0.0
        %1050 = vmatpush1.msra.mxu0 0.0
        %1051 = vmatprep.subr.mxu0 0.0
        %1052 = vmatpush1.msra.mxu0 0.0
        %1053 = vmatprep.subr.mxu0 0.0
        %1054 = vmatpush1.msra.mxu0 0.0
        %1055 = vmatprep.subr.mxu0 0.0
        %1056 = vmatpush1.msra.mxu0 0.0
        %1057 = vmatprep.subr.mxu0 0.0
        %1058 = vmatpush1.msra.mxu0 0.0
        %1059 = vmatprep.subr.mxu0 0.0
        %1060 = vmatpush1.msra.mxu0 0.0
        %1061 = vmatprep.subr.mxu0 0.0
        %1062 = vmatpush1.msra.mxu0 0.0
        %1063 = vmatprep.subr.mxu0 0.0
        %1064 = vmatpush1.msra.mxu0 0.0
        %1065 = vmatprep.subr.mxu0 0.0
        %1066 = vmatpush1.msra.mxu0 0.0
        %1067 = vmatprep.mubr.f32.mxu0 0.0
        %1068 = vmatmul.mubr.f32.gmra.mrb[0].mxu0 %v1001
        %v1069 = vpop.f32.mrb[0].mxu0
        %v1070 = vadd.f32 0.0, %v1069
        %v1071 = vpop.f32.mrb[0].mxu0
        %1072 = vdwg.mxu0
        %v1073 = vadd.f32 %v999, %v1070
        %1074 = vst.msk [vmem:[%s992] sm:$0xff] %vm319, %v1073
        %1075 = vst.msk [vmem:[%s967] sm:$0xff] %vm418, %v972
      $region40: #{causal_self_attention.4} parent=31 // pred_fallthru
        _
      %p1076 = scmp.eq.s32.totalorder %s293, %s292
      // Predicated region
      $region41: #{causal_self_attention.4} parent=31 // pred_check
        %p1077 = pneg %p1076
      $region42: #{causal_self_attention.4} parent=31 // pred_check_branch
        %1079 = sbr.rel (%p1077) target = $region44
      $region43: #{causal_self_attention.4} parent=31 // pred_region
        %v1080 = vlaneseq
        %v1081 = vshrl.u32 %v1080, 7
        %v1082 = vlaneseq
        %v1083 = vand.u32 %v1082, 127
        %vm1084 = vcmp.ge.s32.totalorder %v1081, %v1083
        %v1085 = vld [vmem:[%s261] sm:$0xff]
        %v1086 = vld [vmem:[%s271] sm:$0xff]
        %v1087 = vld [vmem:[%s281] sm:$0xff]
        %vm1088 = vcmask 64512
        %v1090 = vsel %vm1088, %v1085, 0
        %v1093 = vsel %vm1088, %v1086, 0
        %1095 = vmatprep.subr.mxu0 0.0
        %1096 = vmatpush1.xpose.msra.mxu0 %v1093
        %1097 = vmatprep.subr.mxu0 0.0
        %1098 = vmatpush1.xpose.msra.mxu0 0.0
        %1099 = vmatprep.subr.mxu0 0.0
        %1100 = vmatpush1.xpose.msra.mxu0 0.0
        %1101 = vmatprep.subr.mxu0 0.0
        %1102 = vmatpush1.xpose.msra.mxu0 0.0
        %1103 = vmatprep.subr.mxu0 0.0
        %1104 = vmatpush1.xpose.msra.mxu0 0.0
        %1105 = vmatprep.subr.mxu0 0.0
        %1106 = vmatpush1.xpose.msra.mxu0 0.0
        %1107 = vmatprep.subr.mxu0 0.0
        %1108 = vmatpush1.xpose.msra.mxu0 0.0
        %1109 = vmatprep.subr.mxu0 0.0
        %1110 = vmatpush1.xpose.msra.mxu0 0.0
        %1111 = vmatprep.subr.mxu0 0.0
        %1112 = vmatpush1.xpose.msra.mxu0 0.0
        %1113 = vmatprep.subr.mxu0 0.0
        %1114 = vmatpush1.xpose.msra.mxu0 0.0
        %1115 = vmatprep.subr.mxu0 0.0
        %1116 = vmatpush1.xpose.msra.mxu0 0.0
        %1117 = vmatprep.subr.mxu0 0.0
        %1118 = vmatpush1.xpose.msra.mxu0 0.0
        %1119 = vmatprep.subr.mxu0 0.0
        %1120 = vmatpush1.xpose.msra.mxu0 0.0
        %1121 = vmatprep.subr.mxu0 0.0
        %1122 = vmatpush1.xpose.msra.mxu0 0.0
        %1123 = vmatprep.subr.mxu0 0.0
        %1124 = vmatpush1.xpose.msra.mxu0 0.0
        %1125 = vmatprep.subr.mxu0 0.0
        %1126 = vmatpush1.xpose.msra.mxu0 0.0
        %1127 = vmatprep.subr.mxu0 0.0
        %1128 = vmatpush1.xpose.msra.mxu0 0.0
        %1129 = vmatprep.subr.mxu0 0.0
        %1130 = vmatpush1.xpose.msra.mxu0 0.0
        %1131 = vmatprep.subr.mxu0 0.0
        %1132 = vmatpush1.xpose.msra.mxu0 0.0
        %1133 = vmatprep.subr.mxu0 0.0
        %1134 = vmatpush1.xpose.msra.mxu0 0.0
        %1135 = vmatprep.subr.mxu0 0.0
        %1136 = vmatpush1.xpose.msra.mxu0 0.0
        %1137 = vmatprep.subr.mxu0 0.0
        %1138 = vmatpush1.xpose.msra.mxu0 0.0
        %1139 = vmatprep.subr.mxu0 0.0
        %1140 = vmatpush1.xpose.msra.mxu0 0.0
        %1141 = vmatprep.subr.mxu0 0.0
        %1142 = vmatpush1.xpose.msra.mxu0 0.0
        %1143 = vmatprep.subr.mxu0 0.0
        %1144 = vmatpush1.xpose.msra.mxu0 0.0
        %1145 = vmatprep.subr.mxu0 0.0
        %1146 = vmatpush1.xpose.msra.mxu0 0.0
        %1147 = vmatprep.subr.mxu0 0.0
        %1148 = vmatpush1.xpose.msra.mxu0 0.0
        %1149 = vmatprep.subr.mxu0 0.0
        %1150 = vmatpush1.xpose.msra.mxu0 0.0
        %1151 = vmatprep.subr.mxu0 0.0
        %1152 = vmatpush1.xpose.msra.mxu0 0.0
        %1153 = vmatprep.subr.mxu0 0.0
        %1154 = vmatpush1.xpose.msra.mxu0 0.0
        %1155 = vmatprep.subr.mxu0 0.0
        %1156 = vmatpush1.xpose.msra.mxu0 0.0
        %1157 = vmatprep.subr.mxu0 0.0
        %1158 = vmatpush1.xpose.msra.mxu0 0.0
        %1159 = vmatprep.mubr.f32.mxu0 0.0
        %1160 = vmatmul.mubr.f32.gmra.mrb[0].mxu0 %v1090
        %v1161 = vpop.f32.mrb[0].mxu0
        %v1162 = vadd.f32 0.0, %v1161
        %v1163 = vpop.f32.mrb[0].mxu0
        %1164 = vdwg.mxu0
        %v1165 = vsel %vm1084, %v1162, -1e+30
        %v1166 = vld [vmem:[#allocation2] sm:$0xff]
        %v1167 = vsel %vm1088, %v1165, -inf
        %1168 = vmax.xlane.f32.xlu0 %v1167
        %v1169 = vpop.xlane.xlu0 %1168
        %v1170 = vmax.f32 %v1166, %v1169
        %v1171 = vsub.f32 %v1166, %v1170
        %v1172 = vmul.f32 %v1171, 1.442695
        %v1173 = vpow.pop %v1172
        %1175 = vset.pattern.permute.xlu0 0
        %1176 = vperm.xlu0 %1175, %v1170
        %v1177 = vpop.permute.xlu0 %1176
        %v1179 = vsub.f32 %v1165, %v1177
        %v1180 = vmul.f32 %v1179, 1.442695
        %v1181 = vpow.pop %v1180
        %v1182 = vld [vmem:[#allocation3] sm:$0xff]
        %v1183 = vmul.f32 %v1173, %v1182
        %v1184 = vsel %vm1088, %v1181, 0.0
        %1185 = vadd.xlane.f32.xlu0 %v1184
        %v1186 = vpop.xlane.xlu0 %1185
        %v1187 = vadd.f32 %v1183, %v1186
        %vm1188 = vcmask 7168
        %1189 = vst.msk [vmem:[#allocation3] sm:$0xff] %vm1188, %v1187
        %v1190 = vld [vmem:[#allocation4] sm:$0xff]
        %1192 = vset.pattern.permute.xlu0 0
        %1193 = vperm.xlu0 %1192, %v1173
        %v1194 = vpop.permute.xlu0 %1193
        %v1196 = vmul.f32 %v1194, %v1190
        %v1198 = vsel %vm1088, %v1181, 0
        %1200 = vmatprep.subr.mxu0 0.0
        %1201 = vmatpush1.msra.mxu0 %v1087
        %1202 = vmatprep.subr.mxu0 0.0
        %1203 = vmatpush1.msra.mxu0 0.0
        %1204 = vmatprep.subr.mxu0 0.0
        %1205 = vmatpush1.msra.mxu0 0.0
        %1206 = vmatprep.subr.mxu0 0.0
        %1207 = vmatpush1.msra.mxu0 0.0
        %1208 = vmatprep.subr.mxu0 0.0
        %1209 = vmatpush1.msra.mxu0 0.0
        %1210 = vmatprep.subr.mxu0 0.0
        %1211 = vmatpush1.msra.mxu0 0.0
        %1212 = vmatprep.subr.mxu0 0.0
        %1213 = vmatpush1.msra.mxu0 0.0
        %1214 = vmatprep.subr.mxu0 0.0
        %1215 = vmatpush1.msra.mxu0 0.0
        %1216 = vmatprep.subr.mxu0 0.0
        %1217 = vmatpush1.msra.mxu0 0.0
        %1218 = vmatprep.subr.mxu0 0.0
        %1219 = vmatpush1.msra.mxu0 0.0
        %1220 = vmatprep.subr.mxu0 0.0
        %1221 = vmatpush1.msra.mxu0 0.0
        %1222 = vmatprep.subr.mxu0 0.0
        %1223 = vmatpush1.msra.mxu0 0.0
        %1224 = vmatprep.subr.mxu0 0.0
        %1225 = vmatpush1.msra.mxu0 0.0
        %1226 = vmatprep.subr.mxu0 0.0
        %1227 = vmatpush1.msra.mxu0 0.0
        %1228 = vmatprep.subr.mxu0 0.0
        %1229 = vmatpush1.msra.mxu0 0.0
        %1230 = vmatprep.subr.mxu0 0.0
        %1231 = vmatpush1.msra.mxu0 0.0
        %1232 = vmatprep.subr.mxu0 0.0
        %1233 = vmatpush1.msra.mxu0 0.0
        %1234 = vmatprep.subr.mxu0 0.0
        %1235 = vmatpush1.msra.mxu0 0.0
        %1236 = vmatprep.subr.mxu0 0.0
        %1237 = vmatpush1.msra.mxu0 0.0
        %1238 = vmatprep.subr.mxu0 0.0
        %1239 = vmatpush1.msra.mxu0 0.0
        %1240 = vmatprep.subr.mxu0 0.0
        %1241 = vmatpush1.msra.mxu0 0.0
        %1242 = vmatprep.subr.mxu0 0.0
        %1243 = vmatpush1.msra.mxu0 0.0
        %1244 = vmatprep.subr.mxu0 0.0
        %1245 = vmatpush1.msra.mxu0 0.0
        %1246 = vmatprep.subr.mxu0 0.0
        %1247 = vmatpush1.msra.mxu0 0.0
        %1248 = vmatprep.subr.mxu0 0.0
        %1249 = vmatpush1.msra.mxu0 0.0
        %1250 = vmatprep.subr.mxu0 0.0
        %1251 = vmatpush1.msra.mxu0 0.0
        %1252 = vmatprep.subr.mxu0 0.0
        %1253 = vmatpush1.msra.mxu0 0.0
        %1254 = vmatprep.subr.mxu0 0.0
        %1255 = vmatpush1.msra.mxu0 0.0
        %1256 = vmatprep.subr.mxu0 0.0
        %1257 = vmatpush1.msra.mxu0 0.0
        %1258 = vmatprep.subr.mxu0 0.0
        %1259 = vmatpush1.msra.mxu0 0.0
        %1260 = vmatprep.subr.mxu0 0.0
        %1261 = vmatpush1.msra.mxu0 0.0
        %1262 = vmatprep.subr.mxu0 0.0
        %1263 = vmatpush1.msra.mxu0 0.0
        %1264 = vmatprep.mubr.f32.mxu0 0.0
        %1265 = vmatmul.mubr.f32.gmra.mrb[0].mxu0 %v1198
        %v1266 = vpop.f32.mrb[0].mxu0
        %v1267 = vadd.f32 0.0, %v1266
        %v1268 = vpop.f32.mrb[0].mxu0
        %1269 = vdwg.mxu0
        %v1270 = vadd.f32 %v1196, %v1267
        %1271 = vst.msk [vmem:[#allocation4] sm:$0xff] %vm1088, %v1270
        %1272 = vst.msk [vmem:[#allocation2] sm:$0xff] %vm1188, %v1170
        %s1273 = scalar_lea.vmem %s261, 8
        %v1274 = vld [vmem:[%s1273] sm:$0xff]
        %s1275 = scalar_lea.vmem %s271, 8
        %v1276 = vld [vmem:[%s1275] sm:$0xff]
        %s1277 = scalar_lea.vmem %s281, 8
        %v1278 = vld [vmem:[%s1277] sm:$0xff]
        %v1280 = vsel %vm1088, %v1274, 0
        %v1283 = vsel %vm1088, %v1276, 0
        %1285 = vmatprep.subr.mxu0 0.0
        %1286 = vmatpush1.xpose.msra.mxu0 %v1283
        %1287 = vmatprep.subr.mxu0 0.0
        %1288 = vmatpush1.xpose.msra.mxu0 0.0
        %1289 = vmatprep.subr.mxu0 0.0
        %1290 = vmatpush1.xpose.msra.mxu0 0.0
        %1291 = vmatprep.subr.mxu0 0.0
        %1292 = vmatpush1.xpose.msra.mxu0 0.0
        %1293 = vmatprep.subr.mxu0 0.0
        %1294 = vmatpush1.xpose.msra.mxu0 0.0
        %1295 = vmatprep.subr.mxu0 0.0
        %1296 = vmatpush1.xpose.msra.mxu0 0.0
        %1297 = vmatprep.subr.mxu0 0.0
        %1298 = vmatpush1.xpose.msra.mxu0 0.0
        %1299 = vmatprep.subr.mxu0 0.0
        %1300 = vmatpush1.xpose.msra.mxu0 0.0
        %1301 = vmatprep.subr.mxu0 0.0
        %1302 = vmatpush1.xpose.msra.mxu0 0.0
        %1303 = vmatprep.subr.mxu0 0.0
        %1304 = vmatpush1.xpose.msra.mxu0 0.0
        %1305 = vmatprep.subr.mxu0 0.0
        %1306 = vmatpush1.xpose.msra.mxu0 0.0
        %1307 = vmatprep.subr.mxu0 0.0
        %1308 = vmatpush1.xpose.msra.mxu0 0.0
        %1309 = vmatprep.subr.mxu0 0.0
        %1310 = vmatpush1.xpose.msra.mxu0 0.0
        %1311 = vmatprep.subr.mxu0 0.0
        %1312 = vmatpush1.xpose.msra.mxu0 0.0
        %1313 = vmatprep.subr.mxu0 0.0
        %1314 = vmatpush1.xpose.msra.mxu0 0.0
        %1315 = vmatprep.subr.mxu0 0.0
        %1316 = vmatpush1.xpose.msra.mxu0 0.0
        %1317 = vmatprep.subr.mxu0 0.0
        %1318 = vmatpush1.xpose.msra.mxu0 0.0
        %1319 = vmatprep.subr.mxu0 0.0
        %1320 = vmatpush1.xpose.msra.mxu0 0.0
        %1321 = vmatprep.subr.mxu0 0.0
        %1322 = vmatpush1.xpose.msra.mxu0 0.0
        %1323 = vmatprep.subr.mxu0 0.0
        %1324 = vmatpush1.xpose.msra.mxu0 0.0
        %1325 = vmatprep.subr.mxu0 0.0
        %1326 = vmatpush1.xpose.msra.mxu0 0.0
        %1327 = vmatprep.subr.mxu0 0.0
        %1328 = vmatpush1.xpose.msra.mxu0 0.0
        %1329 = vmatprep.subr.mxu0 0.0
        %1330 = vmatpush1.xpose.msra.mxu0 0.0
        %1331 = vmatprep.subr.mxu0 0.0
        %1332 = vmatpush1.xpose.msra.mxu0 0.0
        %1333 = vmatprep.subr.mxu0 0.0
        %1334 = vmatpush1.xpose.msra.mxu0 0.0
        %1335 = vmatprep.subr.mxu0 0.0
        %1336 = vmatpush1.xpose.msra.mxu0 0.0
        %1337 = vmatprep.subr.mxu0 0.0
        %1338 = vmatpush1.xpose.msra.mxu0 0.0
        %1339 = vmatprep.subr.mxu0 0.0
        %1340 = vmatpush1.xpose.msra.mxu0 0.0
        %1341 = vmatprep.subr.mxu0 0.0
        %1342 = vmatpush1.xpose.msra.mxu0 0.0
        %1343 = vmatprep.subr.mxu0 0.0
        %1344 = vmatpush1.xpose.msra.mxu0 0.0
        %1345 = vmatprep.subr.mxu0 0.0
        %1346 = vmatpush1.xpose.msra.mxu0 0.0
        %1347 = vmatprep.subr.mxu0 0.0
        %1348 = vmatpush1.xpose.msra.mxu0 0.0
        %1349 = vmatprep.mubr.f32.mxu0 0.0
        %1350 = vmatmul.mubr.f32.gmra.mrb[0].mxu0 %v1280
        %v1351 = vpop.f32.mrb[0].mxu0
        %v1352 = vadd.f32 0.0, %v1351
        %v1353 = vpop.f32.mrb[0].mxu0
        %1354 = vdwg.mxu0
        %v1355 = vsel %vm1084, %v1352, -1e+30
        %s1356 = scalar_lea.vmem [#allocation2], 8
        %v1357 = vld [vmem:[%s1356] sm:$0xff]
        %v1358 = vsel %vm1088, %v1355, -inf
        %1359 = vmax.xlane.f32.xlu0 %v1358
        %v1360 = vpop.xlane.xlu0 %1359
        %v1361 = vmax.f32 %v1357, %v1360
        %v1362 = vsub.f32 %v1357, %v1361
        %v1363 = vmul.f32 %v1362, 1.442695
        %v1364 = vpow.pop %v1363
        %1366 = vset.pattern.permute.xlu0 0
        %1367 = vperm.xlu0 %1366, %v1361
        %v1368 = vpop.permute.xlu0 %1367
        %v1370 = vsub.f32 %v1355, %v1368
        %v1371 = vmul.f32 %v1370, 1.442695
        %v1372 = vpow.pop %v1371
        %s1373 = scalar_lea.vmem [#allocation3], 8
        %v1374 = vld [vmem:[%s1373] sm:$0xff]
        %v1375 = vmul.f32 %v1364, %v1374
        %v1376 = vsel %vm1088, %v1372, 0.0
        %1377 = vadd.xlane.f32.xlu0 %v1376
        %v1378 = vpop.xlane.xlu0 %1377
        %v1379 = vadd.f32 %v1375, %v1378
        %1380 = vst.msk [vmem:[%s1373] sm:$0xff] %vm1188, %v1379
        %s1381 = scalar_lea.vmem [#allocation4], 8
        %v1382 = vld [vmem:[%s1381] sm:$0xff]
        %1384 = vset.pattern.permute.xlu0 0
        %1385 = vperm.xlu0 %1384, %v1364
        %v1386 = vpop.permute.xlu0 %1385
        %v1388 = vmul.f32 %v1386, %v1382
        %v1390 = vsel %vm1088, %v1372, 0
        %1392 = vmatprep.subr.mxu0 0.0
        %1393 = vmatpush1.msra.mxu0 %v1278
        %1394 = vmatprep.subr.mxu0 0.0
        %1395 = vmatpush1.msra.mxu0 0.0
        %1396 = vmatprep.subr.mxu0 0.0
        %1397 = vmatpush1.msra.mxu0 0.0
        %1398 = vmatprep.subr.mxu0 0.0
        %1399 = vmatpush1.msra.mxu0 0.0
        %1400 = vmatprep.subr.mxu0 0.0
        %1401 = vmatpush1.msra.mxu0 0.0
        %1402 = vmatprep.subr.mxu0 0.0
        %1403 = vmatpush1.msra.mxu0 0.0
        %1404 = vmatprep.subr.mxu0 0.0
        %1405 = vmatpush1.msra.mxu0 0.0
        %1406 = vmatprep.subr.mxu0 0.0
        %1407 = vmatpush1.msra.mxu0 0.0
        %1408 = vmatprep.subr.mxu0 0.0
        %1409 = vmatpush1.msra.mxu0 0.0
        %1410 = vmatprep.subr.mxu0 0.0
        %1411 = vmatpush1.msra.mxu0 0.0
        %1412 = vmatprep.subr.mxu0 0.0
        %1413 = vmatpush1.msra.mxu0 0.0
        %1414 = vmatprep.subr.mxu0 0.0
        %1415 = vmatpush1.msra.mxu0 0.0
        %1416 = vmatprep.subr.mxu0 0.0
        %1417 = vmatpush1.msra.mxu0 0.0
        %1418 = vmatprep.subr.mxu0 0.0
        %1419 = vmatpush1.msra.mxu0 0.0
        %1420 = vmatprep.subr.mxu0 0.0
        %1421 = vmatpush1.msra.mxu0 0.0
        %1422 = vmatprep.subr.mxu0 0.0
        %1423 = vmatpush1.msra.mxu0 0.0
        %1424 = vmatprep.subr.mxu0 0.0
        %1425 = vmatpush1.msra.mxu0 0.0
        %1426 = vmatprep.subr.mxu0 0.0
        %1427 = vmatpush1.msra.mxu0 0.0
        %1428 = vmatprep.subr.mxu0 0.0
        %1429 = vmatpush1.msra.mxu0 0.0
        %1430 = vmatprep.subr.mxu0 0.0
        %1431 = vmatpush1.msra.mxu0 0.0
        %1432 = vmatprep.subr.mxu0 0.0
        %1433 = vmatpush1.msra.mxu0 0.0
        %1434 = vmatprep.subr.mxu0 0.0
        %1435 = vmatpush1.msra.mxu0 0.0
        %1436 = vmatprep.subr.mxu0 0.0
        %1437 = vmatpush1.msra.mxu0 0.0
        %1438 = vmatprep.subr.mxu0 0.0
        %1439 = vmatpush1.msra.mxu0 0.0
        %1440 = vmatprep.subr.mxu0 0.0
        %1441 = vmatpush1.msra.mxu0 0.0
        %1442 = vmatprep.subr.mxu0 0.0
        %1443 = vmatpush1.msra.mxu0 0.0
        %1444 = vmatprep.subr.mxu0 0.0
        %1445 = vmatpush1.msra.mxu0 0.0
        %1446 = vmatprep.subr.mxu0 0.0
        %1447 = vmatpush1.msra.mxu0 0.0
        %1448 = vmatprep.subr.mxu0 0.0
        %1449 = vmatpush1.msra.mxu0 0.0
        %1450 = vmatprep.subr.mxu0 0.0
        %1451 = vmatpush1.msra.mxu0 0.0
        %1452 = vmatprep.subr.mxu0 0.0
        %1453 = vmatpush1.msra.mxu0 0.0
        %1454 = vmatprep.subr.mxu0 0.0
        %1455 = vmatpush1.msra.mxu0 0.0
        %1456 = vmatprep.mubr.f32.mxu0 0.0
        %1457 = vmatmul.mubr.f32.gmra.mrb[0].mxu0 %v1390
        %v1458 = vpop.f32.mrb[0].mxu0
        %v1459 = vadd.f32 0.0, %v1458
        %v1460 = vpop.f32.mrb[0].mxu0
        %1461 = vdwg.mxu0
        %v1462 = vadd.f32 %v1388, %v1459
        %1463 = vst.msk [vmem:[%s1381] sm:$0xff] %vm1088, %v1462
        %1464 = vst.msk [vmem:[%s1356] sm:$0xff] %vm1188, %v1361
        %s1465 = scalar_lea.vmem %s261, 16
        %v1466 = vld [vmem:[%s1465] sm:$0xff]
        %s1467 = scalar_lea.vmem %s271, 16
        %v1468 = vld [vmem:[%s1467] sm:$0xff]
        %s1469 = scalar_lea.vmem %s281, 16
        %v1470 = vld [vmem:[%s1469] sm:$0xff]
        %v1472 = vsel %vm1088, %v1466, 0
        %v1475 = vsel %vm1088, %v1468, 0
        %1477 = vmatprep.subr.mxu0 0.0
        %1478 = vmatpush1.xpose.msra.mxu0 %v1475
        %1479 = vmatprep.subr.mxu0 0.0
        %1480 = vmatpush1.xpose.msra.mxu0 0.0
        %1481 = vmatprep.subr.mxu0 0.0
        %1482 = vmatpush1.xpose.msra.mxu0 0.0
        %1483 = vmatprep.subr.mxu0 0.0
        %1484 = vmatpush1.xpose.msra.mxu0 0.0
        %1485 = vmatprep.subr.mxu0 0.0
        %1486 = vmatpush1.xpose.msra.mxu0 0.0
        %1487 = vmatprep.subr.mxu0 0.0
        %1488 = vmatpush1.xpose.msra.mxu0 0.0
        %1489 = vmatprep.subr.mxu0 0.0
        %1490 = vmatpush1.xpose.msra.mxu0 0.0
        %1491 = vmatprep.subr.mxu0 0.0
        %1492 = vmatpush1.xpose.msra.mxu0 0.0
        %1493 = vmatprep.subr.mxu0 0.0
        %1494 = vmatpush1.xpose.msra.mxu0 0.0
        %1495 = vmatprep.subr.mxu0 0.0
        %1496 = vmatpush1.xpose.msra.mxu0 0.0
        %1497 = vmatprep.subr.mxu0 0.0
        %1498 = vmatpush1.xpose.msra.mxu0 0.0
        %1499 = vmatprep.subr.mxu0 0.0
        %1500 = vmatpush1.xpose.msra.mxu0 0.0
        %1501 = vmatprep.subr.mxu0 0.0
        %1502 = vmatpush1.xpose.msra.mxu0 0.0
        %1503 = vmatprep.subr.mxu0 0.0
        %1504 = vmatpush1.xpose.msra.mxu0 0.0
        %1505 = vmatprep.subr.mxu0 0.0
        %1506 = vmatpush1.xpose.msra.mxu0 0.0
        %1507 = vmatprep.subr.mxu0 0.0
        %1508 = vmatpush1.xpose.msra.mxu0 0.0
        %1509 = vmatprep.subr.mxu0 0.0
        %1510 = vmatpush1.xpose.msra.mxu0 0.0
        %1511 = vmatprep.subr.mxu0 0.0
        %1512 = vmatpush1.xpose.msra.mxu0 0.0
        %1513 = vmatprep.subr.mxu0 0.0
        %1514 = vmatpush1.xpose.msra.mxu0 0.0
        %1515 = vmatprep.subr.mxu0 0.0
        %1516 = vmatpush1.xpose.msra.mxu0 0.0
        %1517 = vmatprep.subr.mxu0 0.0
        %1518 = vmatpush1.xpose.msra.mxu0 0.0
        %1519 = vmatprep.subr.mxu0 0.0
        %1520 = vmatpush1.xpose.msra.mxu0 0.0
        %1521 = vmatprep.subr.mxu0 0.0
        %1522 = vmatpush1.xpose.msra.mxu0 0.0
        %1523 = vmatprep.subr.mxu0 0.0
        %1524 = vmatpush1.xpose.msra.mxu0 0.0
        %1525 = vmatprep.subr.mxu0 0.0
        %1526 = vmatpush1.xpose.msra.mxu0 0.0
        %1527 = vmatprep.subr.mxu0 0.0
        %1528 = vmatpush1.xpose.msra.mxu0 0.0
        %1529 = vmatprep.subr.mxu0 0.0
        %1530 = vmatpush1.xpose.msra.mxu0 0.0
        %1531 = vmatprep.subr.mxu0 0.0
        %1532 = vmatpush1.xpose.msra.mxu0 0.0
        %1533 = vmatprep.subr.mxu0 0.0
        %1534 = vmatpush1.xpose.msra.mxu0 0.0
        %1535 = vmatprep.subr.mxu0 0.0
        %1536 = vmatpush1.xpose.msra.mxu0 0.0
        %1537 = vmatprep.subr.mxu0 0.0
        %1538 = vmatpush1.xpose.msra.mxu0 0.0
        %1539 = vmatprep.subr.mxu0 0.0
        %1540 = vmatpush1.xpose.msra.mxu0 0.0
        %1541 = vmatprep.mubr.f32.mxu0 0.0
        %1542 = vmatmul.mubr.f32.gmra.mrb[0].mxu0 %v1472
        %v1543 = vpop.f32.mrb[0].mxu0
        %v1544 = vadd.f32 0.0, %v1543
        %v1545 = vpop.f32.mrb[0].mxu0
        %1546 = vdwg.mxu0
        %v1547 = vsel %vm1084, %v1544, -1e+30
        %s1548 = scalar_lea.vmem [#allocation2], 16
        %v1549 = vld [vmem:[%s1548] sm:$0xff]
        %v1550 = vsel %vm1088, %v1547, -inf
        %1551 = vmax.xlane.f32.xlu0 %v1550
        %v1552 = vpop.xlane.xlu0 %1551
        %v1553 = vmax.f32 %v1549, %v1552
        %v1554 = vsub.f32 %v1549, %v1553
        %v1555 = vmul.f32 %v1554, 1.442695
        %v1556 = vpow.pop %v1555
        %1558 = vset.pattern.permute.xlu0 0
        %1559 = vperm.xlu0 %1558, %v1553
        %v1560 = vpop.permute.xlu0 %1559
        %v1562 = vsub.f32 %v1547, %v1560
        %v1563 = vmul.f32 %v1562, 1.442695
        %v1564 = vpow.pop %v1563
        %s1565 = scalar_lea.vmem [#allocation3], 16
        %v1566 = vld [vmem:[%s1565] sm:$0xff]
        %v1567 = vmul.f32 %v1556, %v1566
        %v1568 = vsel %vm1088, %v1564, 0.0
        %1569 = vadd.xlane.f32.xlu0 %v1568
        %v1570 = vpop.xlane.xlu0 %1569
        %v1571 = vadd.f32 %v1567, %v1570
        %1572 = vst.msk [vmem:[%s1565] sm:$0xff] %vm1188, %v1571
        %s1573 = scalar_lea.vmem [#allocation4], 16
        %v1574 = vld [vmem:[%s1573] sm:$0xff]
        %1576 = vset.pattern.permute.xlu0 0
        %1577 = vperm.xlu0 %1576, %v1556
        %v1578 = vpop.permute.xlu0 %1577
        %v1580 = vmul.f32 %v1578, %v1574
        %v1582 = vsel %vm1088, %v1564, 0
        %1584 = vmatprep.subr.mxu0 0.0
        %1585 = vmatpush1.msra.mxu0 %v1470
        %1586 = vmatprep.subr.mxu0 0.0
        %1587 = vmatpush1.msra.mxu0 0.0
        %1588 = vmatprep.subr.mxu0 0.0
        %1589 = vmatpush1.msra.mxu0 0.0
        %1590 = vmatprep.subr.mxu0 0.0
        %1591 = vmatpush1.msra.mxu0 0.0
        %1592 = vmatprep.subr.mxu0 0.0
        %1593 = vmatpush1.msra.mxu0 0.0
        %1594 = vmatprep.subr.mxu0 0.0
        %1595 = vmatpush1.msra.mxu0 0.0
        %1596 = vmatprep.subr.mxu0 0.0
        %1597 = vmatpush1.msra.mxu0 0.0
        %1598 = vmatprep.subr.mxu0 0.0
        %1599 = vmatpush1.msra.mxu0 0.0
        %1600 = vmatprep.subr.mxu0 0.0
        %1601 = vmatpush1.msra.mxu0 0.0
        %1602 = vmatprep.subr.mxu0 0.0
        %1603 = vmatpush1.msra.mxu0 0.0
        %1604 = vmatprep.subr.mxu0 0.0
        %1605 = vmatpush1.msra.mxu0 0.0
        %1606 = vmatprep.subr.mxu0 0.0
        %1607 = vmatpush1.msra.mxu0 0.0
        %1608 = vmatprep.subr.mxu0 0.0
        %1609 = vmatpush1.msra.mxu0 0.0
        %1610 = vmatprep.subr.mxu0 0.0
        %1611 = vmatpush1.msra.mxu0 0.0
        %1612 = vmatprep.subr.mxu0 0.0
        %1613 = vmatpush1.msra.mxu0 0.0
        %1614 = vmatprep.subr.mxu0 0.0
        %1615 = vmatpush1.msra.mxu0 0.0
        %1616 = vmatprep.subr.mxu0 0.0
        %1617 = vmatpush1.msra.mxu0 0.0
        %1618 = vmatprep.subr.mxu0 0.0
        %1619 = vmatpush1.msra.mxu0 0.0
        %1620 = vmatprep.subr.mxu0 0.0
        %1621 = vmatpush1.msra.mxu0 0.0
        %1622 = vmatprep.subr.mxu0 0.0
        %1623 = vmatpush1.msra.mxu0 0.0
        %1624 = vmatprep.subr.mxu0 0.0
        %1625 = vmatpush1.msra.mxu0 0.0
        %1626 = vmatprep.subr.mxu0 0.0
        %1627 = vmatpush1.msra.mxu0 0.0
        %1628 = vmatprep.subr.mxu0 0.0
        %1629 = vmatpush1.msra.mxu0 0.0
        %1630 = vmatprep.subr.mxu0 0.0
        %1631 = vmatpush1.msra.mxu0 0.0
        %1632 = vmatprep.subr.mxu0 0.0
        %1633 = vmatpush1.msra.mxu0 0.0
        %1634 = vmatprep.subr.mxu0 0.0
        %1635 = vmatpush1.msra.mxu0 0.0
        %1636 = vmatprep.subr.mxu0 0.0
        %1637 = vmatpush1.msra.mxu0 0.0
        %1638 = vmatprep.subr.mxu0 0.0
        %1639 = vmatpush1.msra.mxu0 0.0
        %1640 = vmatprep.subr.mxu0 0.0
        %1641 = vmatpush1.msra.mxu0 0.0
        %1642 = vmatprep.subr.mxu0 0.0
        %1643 = vmatpush1.msra.mxu0 0.0
        %1644 = vmatprep.subr.mxu0 0.0
        %1645 = vmatpush1.msra.mxu0 0.0
        %1646 = vmatprep.subr.mxu0 0.0
        %1647 = vmatpush1.msra.mxu0 0.0
        %1648 = vmatprep.mubr.f32.mxu0 0.0
        %1649 = vmatmul.mubr.f32.gmra.mrb[0].mxu0 %v1582
        %v1650 = vpop.f32.mrb[0].mxu0
        %v1651 = vadd.f32 0.0, %v1650
        %v1652 = vpop.f32.mrb[0].mxu0
        %1653 = vdwg.mxu0
        %v1654 = vadd.f32 %v1580, %v1651
        %1655 = vst.msk [vmem:[%s1573] sm:$0xff] %vm1088, %v1654
        %1656 = vst.msk [vmem:[%s1548] sm:$0xff] %vm1188, %v1553
        %s1657 = scalar_lea.vmem %s261, 24
        %v1658 = vld [vmem:[%s1657] sm:$0xff]
        %s1659 = scalar_lea.vmem %s271, 24
        %v1660 = vld [vmem:[%s1659] sm:$0xff]
        %s1661 = scalar_lea.vmem %s281, 24
        %v1662 = vld [vmem:[%s1661] sm:$0xff]
        %v1664 = vsel %vm1088, %v1658, 0
        %v1667 = vsel %vm1088, %v1660, 0
        %1669 = vmatprep.subr.mxu0 0.0
        %1670 = vmatpush1.xpose.msra.mxu0 %v1667
        %1671 = vmatprep.subr.mxu0 0.0
        %1672 = vmatpush1.xpose.msra.mxu0 0.0
        %1673 = vmatprep.subr.mxu0 0.0
        %1674 = vmatpush1.xpose.msra.mxu0 0.0
        %1675 = vmatprep.subr.mxu0 0.0
        %1676 = vmatpush1.xpose.msra.mxu0 0.0
        %1677 = vmatprep.subr.mxu0 0.0
        %1678 = vmatpush1.xpose.msra.mxu0 0.0
        %1679 = vmatprep.subr.mxu0 0.0
        %1680 = vmatpush1.xpose.msra.mxu0 0.0
        %1681 = vmatprep.subr.mxu0 0.0
        %1682 = vmatpush1.xpose.msra.mxu0 0.0
        %1683 = vmatprep.subr.mxu0 0.0
        %1684 = vmatpush1.xpose.msra.mxu0 0.0
        %1685 = vmatprep.subr.mxu0 0.0
        %1686 = vmatpush1.xpose.msra.mxu0 0.0
        %1687 = vmatprep.subr.mxu0 0.0
        %1688 = vmatpush1.xpose.msra.mxu0 0.0
        %1689 = vmatprep.subr.mxu0 0.0
        %1690 = vmatpush1.xpose.msra.mxu0 0.0
        %1691 = vmatprep.subr.mxu0 0.0
        %1692 = vmatpush1.xpose.msra.mxu0 0.0
        %1693 = vmatprep.subr.mxu0 0.0
        %1694 = vmatpush1.xpose.msra.mxu0 0.0
        %1695 = vmatprep.subr.mxu0 0.0
        %1696 = vmatpush1.xpose.msra.mxu0 0.0
        %1697 = vmatprep.subr.mxu0 0.0
        %1698 = vmatpush1.xpose.msra.mxu0 0.0
        %1699 = vmatprep.subr.mxu0 0.0
        %1700 = vmatpush1.xpose.msra.mxu0 0.0
        %1701 = vmatprep.subr.mxu0 0.0
        %1702 = vmatpush1.xpose.msra.mxu0 0.0
        %1703 = vmatprep.subr.mxu0 0.0
        %1704 = vmatpush1.xpose.msra.mxu0 0.0
        %1705 = vmatprep.subr.mxu0 0.0
        %1706 = vmatpush1.xpose.msra.mxu0 0.0
        %1707 = vmatprep.subr.mxu0 0.0
        %1708 = vmatpush1.xpose.msra.mxu0 0.0
        %1709 = vmatprep.subr.mxu0 0.0
        %1710 = vmatpush1.xpose.msra.mxu0 0.0
        %1711 = vmatprep.subr.mxu0 0.0
        %1712 = vmatpush1.xpose.msra.mxu0 0.0
        %1713 = vmatprep.subr.mxu0 0.0
        %1714 = vmatpush1.xpose.msra.mxu0 0.0
        %1715 = vmatprep.subr.mxu0 0.0
        %1716 = vmatpush1.xpose.msra.mxu0 0.0
        %1717 = vmatprep.subr.mxu0 0.0
        %1718 = vmatpush1.xpose.msra.mxu0 0.0
        %1719 = vmatprep.subr.mxu0 0.0
        %1720 = vmatpush1.xpose.msra.mxu0 0.0
        %1721 = vmatprep.subr.mxu0 0.0
        %1722 = vmatpush1.xpose.msra.mxu0 0.0
        %1723 = vmatprep.subr.mxu0 0.0
        %1724 = vmatpush1.xpose.msra.mxu0 0.0
        %1725 = vmatprep.subr.mxu0 0.0
        %1726 = vmatpush1.xpose.msra.mxu0 0.0
        %1727 = vmatprep.subr.mxu0 0.0
        %1728 = vmatpush1.xpose.msra.mxu0 0.0
        %1729 = vmatprep.subr.mxu0 0.0
        %1730 = vmatpush1.xpose.msra.mxu0 0.0
        %1731 = vmatprep.subr.mxu0 0.0
        %1732 = vmatpush1.xpose.msra.mxu0 0.0
        %1733 = vmatprep.mubr.f32.mxu0 0.0
        %1734 = vmatmul.mubr.f32.gmra.mrb[0].mxu0 %v1664
        %v1735 = vpop.f32.mrb[0].mxu0
        %v1736 = vadd.f32 0.0, %v1735
        %v1737 = vpop.f32.mrb[0].mxu0
        %1738 = vdwg.mxu0
        %v1739 = vsel %vm1084, %v1736, -1e+30
        %s1740 = scalar_lea.vmem [#allocation2], 24
        %v1741 = vld [vmem:[%s1740] sm:$0xff]
        %v1742 = vsel %vm1088, %v1739, -inf
        %1743 = vmax.xlane.f32.xlu0 %v1742
        %v1744 = vpop.xlane.xlu0 %1743
        %v1745 = vmax.f32 %v1741, %v1744
        %v1746 = vsub.f32 %v1741, %v1745
        %v1747 = vmul.f32 %v1746, 1.442695
        %v1748 = vpow.pop %v1747
        %1750 = vset.pattern.permute.xlu0 0
        %1751 = vperm.xlu0 %1750, %v1745
        %v1752 = vpop.permute.xlu0 %1751
        %v1754 = vsub.f32 %v1739, %v1752
        %v1755 = vmul.f32 %v1754, 1.442695
        %v1756 = vpow.pop %v1755
        %s1757 = scalar_lea.vmem [#allocation3], 24
        %v1758 = vld [vmem:[%s1757] sm:$0xff]
        %v1759 = vmul.f32 %v1748, %v1758
        %v1760 = vsel %vm1088, %v1756, 0.0
        %1761 = vadd.xlane.f32.xlu0 %v1760
        %v1762 = vpop.xlane.xlu0 %1761
        %v1763 = vadd.f32 %v1759, %v1762
        %1764 = vst.msk [vmem:[%s1757] sm:$0xff] %vm1188, %v1763
        %s1765 = scalar_lea.vmem [#allocation4], 24
        %v1766 = vld [vmem:[%s1765] sm:$0xff]
        %1768 = vset.pattern.permute.xlu0 0
        %1769 = vperm.xlu0 %1768, %v1748
        %v1770 = vpop.permute.xlu0 %1769
        %v1772 = vmul.f32 %v1770, %v1766
        %v1774 = vsel %vm1088, %v1756, 0
        %1776 = vmatprep.subr.mxu0 0.0
        %1777 = vmatpush1.msra.mxu0 %v1662
        %1778 = vmatprep.subr.mxu0 0.0
        %1779 = vmatpush1.msra.mxu0 0.0
        %1780 = vmatprep.subr.mxu0 0.0
        %1781 = vmatpush1.msra.mxu0 0.0
        %1782 = vmatprep.subr.mxu0 0.0
        %1783 = vmatpush1.msra.mxu0 0.0
        %1784 = vmatprep.subr.mxu0 0.0
        %1785 = vmatpush1.msra.mxu0 0.0
        %1786 = vmatprep.subr.mxu0 0.0
        %1787 = vmatpush1.msra.mxu0 0.0
        %1788 = vmatprep.subr.mxu0 0.0
        %1789 = vmatpush1.msra.mxu0 0.0
        %1790 = vmatprep.subr.mxu0 0.0
        %1791 = vmatpush1.msra.mxu0 0.0
        %1792 = vmatprep.subr.mxu0 0.0
        %1793 = vmatpush1.msra.mxu0 0.0
        %1794 = vmatprep.subr.mxu0 0.0
        %1795 = vmatpush1.msra.mxu0 0.0
        %1796 = vmatprep.subr.mxu0 0.0
        %1797 = vmatpush1.msra.mxu0 0.0
        %1798 = vmatprep.subr.mxu0 0.0
        %1799 = vmatpush1.msra.mxu0 0.0
        %1800 = vmatprep.subr.mxu0 0.0
        %1801 = vmatpush1.msra.mxu0 0.0
        %1802 = vmatprep.subr.mxu0 0.0
        %1803 = vmatpush1.msra.mxu0 0.0
        %1804 = vmatprep.subr.mxu0 0.0
        %1805 = vmatpush1.msra.mxu0 0.0
        %1806 = vmatprep.subr.mxu0 0.0
        %1807 = vmatpush1.msra.mxu0 0.0
        %1808 = vmatprep.subr.mxu0 0.0
        %1809 = vmatpush1.msra.mxu0 0.0
        %1810 = vmatprep.subr.mxu0 0.0
        %1811 = vmatpush1.msra.mxu0 0.0
        %1812 = vmatprep.subr.mxu0 0.0
        %1813 = vmatpush1.msra.mxu0 0.0
        %1814 = vmatprep.subr.mxu0 0.0
        %1815 = vmatpush1.msra.mxu0 0.0
        %1816 = vmatprep.subr.mxu0 0.0
        %1817 = vmatpush1.msra.mxu0 0.0
        %1818 = vmatprep.subr.mxu0 0.0
        %1819 = vmatpush1.msra.mxu0 0.0
        %1820 = vmatprep.subr.mxu0 0.0
        %1821 = vmatpush1.msra.mxu0 0.0
        %1822 = vmatprep.subr.mxu0 0.0
        %1823 = vmatpush1.msra.mxu0 0.0
        %1824 = vmatprep.subr.mxu0 0.0
        %1825 = vmatpush1.msra.mxu0 0.0
        %1826 = vmatprep.subr.mxu0 0.0
        %1827 = vmatpush1.msra.mxu0 0.0
        %1828 = vmatprep.subr.mxu0 0.0
        %1829 = vmatpush1.msra.mxu0 0.0
        %1830 = vmatprep.subr.mxu0 0.0
        %1831 = vmatpush1.msra.mxu0 0.0
        %1832 = vmatprep.subr.mxu0 0.0
        %1833 = vmatpush1.msra.mxu0 0.0
        %1834 = vmatprep.subr.mxu0 0.0
        %1835 = vmatpush1.msra.mxu0 0.0
        %1836 = vmatprep.subr.mxu0 0.0
        %1837 = vmatpush1.msra.mxu0 0.0
        %1838 = vmatprep.subr.mxu0 0.0
        %1839 = vmatpush1.msra.mxu0 0.0
        %1840 = vmatprep.mubr.f32.mxu0 0.0
        %1841 = vmatmul.mubr.f32.gmra.mrb[0].mxu0 %v1774
        %v1842 = vpop.f32.mrb[0].mxu0
        %v1843 = vadd.f32 0.0, %v1842
        %v1844 = vpop.f32.mrb[0].mxu0
        %1845 = vdwg.mxu0
        %v1846 = vadd.f32 %v1772, %v1843
        %1847 = vst.msk [vmem:[%s1765] sm:$0xff] %vm1088, %v1846
        %1848 = vst.msk [vmem:[%s1740] sm:$0xff] %vm1188, %v1745
        %v1849 = vld [vmem:[#allocation3] sm:$0xff]
        %v1850 = vrcp.pop %v1849
        %v1851 = vmul.f32 1.0, %v1850
        %v1852 = vld [vmem:[#allocation4] sm:$0xff]
        %1854 = vset.pattern.permute.xlu0 0
        %1855 = vperm.xlu0 %1854, %v1851
        %v1856 = vpop.permute.xlu0 %1855
        %v1858 = vmul.f32 %v1852, %v1856
        %v1859 = vld [vmem:[%s1373] sm:$0xff]
        %v1860 = vrcp.pop %v1859
        %v1861 = vmul.f32 1.0, %v1860
        %v1862 = vld [vmem:[%s1381] sm:$0xff]
        %1864 = vset.pattern.permute.xlu0 0
        %1865 = vperm.xlu0 %1864, %v1861
        %v1866 = vpop.permute.xlu0 %1865
        %v1868 = vmul.f32 %v1862, %v1866
        %v1869 = vld [vmem:[%s1565] sm:$0xff]
        %v1870 = vrcp.pop %v1869
        %v1871 = vmul.f32 1.0, %v1870
        %v1872 = vld [vmem:[%s1573] sm:$0xff]
        %1874 = vset.pattern.permute.xlu0 0
        %1875 = vperm.xlu0 %1874, %v1871
        %v1876 = vpop.permute.xlu0 %1875
        %v1878 = vmul.f32 %v1872, %v1876
        %v1879 = vld [vmem:[%s1757] sm:$0xff]
        %v1880 = vrcp.pop %v1879
        %v1881 = vmul.f32 1.0, %v1880
        %v1882 = vld [vmem:[%s1765] sm:$0xff]
        %1884 = vset.pattern.permute.xlu0 0
        %1885 = vperm.xlu0 %1884, %v1881
        %v1886 = vpop.permute.xlu0 %1885
        %v1888 = vmul.f32 %v1882, %v1886
        %1890 = vrot.lane.b32.xlu0 %v1868, 8
        %v1891 = vpop.permute.xlu0 %1890
        %1894 = vrot.lane.b32.xlu0 %v1878, 16
        %v1895 = vpop.permute.xlu0 %1894
        %1898 = vrot.lane.b32.xlu0 %v1888, 24
        %v1899 = vpop.permute.xlu0 %1898
        %v1901 = vsel %vm1088, %v1858, %v1891
        %vm1902 = vcmask 130048
        %v1903 = vsel %vm1902, %v1901, %v1895
        %vm1904 = vcmask 195584
        %v1905 = vsel %vm1904, %v1903, %v1899
        %vm1906 = vcmask 261120
        %1907 = vst.msk [vmem:[%s290] sm:$0xff] %vm1906, %v1905
      $region44: #{causal_self_attention.4} parent=31 // pred_fallthru
        _
      %s1908 = sld [smem:[#allocation6 + %s23]]
      %p1909 = scmp.lt.s32.totalorder %s22, 1
      %s1910 = scalar_select %p1909, %s22, 1
      %p1911 = scmp.lt.s32.totalorder %s1908, 0
      %s1912 = scalar_select %p1911, %s1908, 0
      %s1913 = sadd.s32 %s1912, %s1910
      %s1914 = smul.addr %s1913, 8
      %s1915 = scalar_lea.vmem %s5, %s1914
      // Predicated region
      $region45: #{causal_self_attention.4} parent=31 // pred_check
        %p1916 = pneg %p142
      $region46: #{causal_self_attention.4} parent=31 // pred_check_branch
        %1918 = sbr.rel (%p1916) target = $region48
      $region47: #{causal_self_attention.4} parent=31 // pred_region
        %s1919 = sld [smem:[#allocation6 + %s23]]
      $region48: #{causal_self_attention.4} parent=31 // pred_fallthru
        _
    $region32: #{causal_self_attention.4} parent=5 // pred_fallthru
      _
    %p1920 = scmp.le.s32.totalorder 2, %s13
    // Predicated region
    $region49: #{causal_self_attention.4} parent=5 // pred_check
      %p1921 = pneg %p1920
    $region50: #{causal_self_attention.4} parent=5 // pred_check_branch
      %1923 = sbr.rel (%p1921) target = $region52
    $region51: #{causal_self_attention.4} parent=5 // pred_region
      %s1924 = ssub.s32 %s13, 2
      // Predicated region
      $region53: #{causal_self_attention.4} parent=51 // pred_check
        %p1925 = pneg %p148
      $region54: #{causal_self_attention.4} parent=51 // pred_check_branch
        %1927 = sbr.rel (%p1925) target = $region56
      $region55: #{causal_self_attention.4} parent=51 // pred_region
        %s1928 = sld [smem:[#allocation6 + %s25]]
        %p1929 = scmp.lt.s32.totalorder %s24, 1
        %s1930 = scalar_select %p1929, %s24, 1
        %p1931 = scmp.lt.s32.totalorder %s1928, 0
        %s1932 = scalar_select %p1931, %s1928, 0
        %s1933 = sadd.s32 %s1932, %s1930
        %s1934 = smul.addr %s1933, 8
        %s1935 = scalar_lea.vmem %s5, %s1934
      $region56: #{causal_self_attention.4} parent=51 // pred_fallthru
        _
    $region52: #{causal_self_attention.4} parent=5 // pred_fallthru
      _
  $region6: #{causal_self_attention.4} parent=0 // loop_footer
    %s17 = sadd.s32 1, %s13
  $region7: #{causal_self_attention.4} parent=0 // loop_footer_branch
    %12 = sbr.rel target = $region3
  $region8: #{causal_self_attention.4} parent=0 // loop_exit
    _

</llo_original>
